<compile_context>
chip_gen: v7x
topology: tpu7x:2x2x1
jax: 0.10.0
libtpu: 0.0.40
codegen_flags: <defaults>
</compile_context>

<pallas_src>
import functools

import jax
import jax.numpy as jnp
from jax.experimental import pallas as pl
from jax.experimental.pallas import tpu as pltpu


# ----------------------------- Pallas kernels ------------------------------ #

def _matmul_bias_act_kernel(x_ref, w_ref, b_ref, o_ref, *, relu):
    # (tm, K) @ (K, N) on the MXU (bf16 in, f32 accumulate), then +bias (+ReLU).
    y = jnp.dot(x_ref[...], w_ref[...], preferred_element_type=jnp.float32)
    y = y + b_ref[...]
    if relu:
        y = jnp.maximum(y, 0.0)
    o_ref[...] = y.astype(o_ref.dtype)


def _dual_matmul_add_relu_kernel(x_ref, w_ref, b_ref, xr_ref, wr_ref, br_ref,
                                 o_ref):
    # conv3 + bn3 fused with the downsample 1x1 conv + bn: two MXU dots per
    # tile, add, ReLU.  The residual never round-trips through HBM.
    y = jnp.dot(x_ref[...], w_ref[...], preferred_element_type=jnp.float32)
    y = y + b_ref[...]
    r = jnp.dot(xr_ref[...], wr_ref[...], preferred_element_type=jnp.float32)
    r = r + br_ref[...]
    o_ref[...] = jnp.maximum(y + r, 0.0).astype(o_ref.dtype)


def _matmul_bias_residual_relu_kernel(x_ref, w_ref, b_ref, res_ref, o_ref):
    # conv3 + bn3 + identity residual + ReLU.
    y = jnp.dot(x_ref[...], w_ref[...], preferred_element_type=jnp.float32)
    y = y + b_ref[...]
    y = y + res_ref[...].astype(jnp.float32)
    o_ref[...] = jnp.maximum(y, 0.0).astype(o_ref.dtype)


def _conv3x3_kernel(*refs, nphase, taps, ho, wo):
    # 3x3 conv (pad=1, stride folded into the phase decomposition) as 9
    # accumulated (Ho*Wo, C) @ (C, P) matmuls on shifted VMEM windows.
    phase_refs = refs[:nphase]
    w_ref = refs[nphase]          # (9, Cin, Cout), BN scale already folded in
    b_ref = refs[nphase + 1]      # (1, Cout)
    o_ref = refs[nphase + 2]      # (1, Ho*Wo, Cout)
    cin = w_ref.shape[1]
    cout = w_ref.shape[2]

    acc = jnp.zeros((ho * wo, cout), jnp.float32)
    for t, (pi, oh, ow) in enumerate(taps):
        patch = phase_refs[pi][0, oh:oh + ho, ow:ow + wo, :]   # (ho, wo, cin)
        acc = acc + jnp.dot(patch.reshape(ho * wo, cin), w_ref[t],
                            preferred_element_type=jnp.float32)
    y = acc + b_ref[...]
    o_ref[0] = jnp.maximum(y, 0.0).astype(o_ref.dtype)


# ----------------------------- kernel wrappers ------------------------------ #

def _pick_tm(m, target=512):
    """Largest row tile dividing M, multiple of 8 (or == M), <= target, and
    preferring a grid of >= 2 so the parallel axis can split across cores."""
    best_single = None
    for tm in range(min(m, target), 0, -1):
        if m % tm:
            continue
        if tm != m and tm % 8 != 0:
            continue
        if m // tm >= 2:
            return tm
        if best_single is None:
            best_single = tm
    return best_single if best_single is not None else m


def matmul_bias_act(x2d, w, bias, *, relu, out_dtype, tm_target=512):
    """act(x2d @ w + bias); BN scale is pre-folded into w."""
    M, K = x2d.shape
    N = w.shape[1]
    tm = _pick_tm(M, tm_target)
    grid = (M // tm,)
    return pl.pallas_call(
        functools.partial(_matmul_bias_act_kernel, relu=relu),
        out_shape=jax.ShapeDtypeStruct((M, N), out_dtype),
        grid=grid,
        in_specs=[
            pl.BlockSpec((tm, K), lambda i: (i, 0)),   # activations: row-tiled
            pl.BlockSpec((K, N), lambda i: (0, 0)),    # folded weight: resident
            pl.BlockSpec((1, N), lambda i: (0, 0)),    # folded BN bias
        ],
        out_specs=pl.BlockSpec((tm, N), lambda i: (i, 0)),
        compiler_params=pltpu.CompilerParams(dimension_semantics=("parallel",)),
    )(x2d, w, bias.reshape(1, N))


def matmul_dual_residual_relu(x2d, w, bias, xr2d, wr, biasr, *, out_dtype,
                              tm_target=512):
    """relu((x2d @ w + bias) + (xr2d @ wr + biasr)) — conv3 + downsample fused."""
    M, K = x2d.shape
    N = w.shape[1]
    Kr = xr2d.shape[1]
    tm = _pick_tm(M, tm_target)
    grid = (M // tm,)
    return pl.pallas_call(
        _dual_matmul_add_relu_kernel,
        out_shape=jax.ShapeDtypeStruct((M, N), out_dtype),
        grid=grid,
        in_specs=[
            pl.BlockSpec((tm, K), lambda i: (i, 0)),
            pl.BlockSpec((K, N), lambda i: (0, 0)),
            pl.BlockSpec((1, N), lambda i: (0, 0)),
            pl.BlockSpec((tm, Kr), lambda i: (i, 0)),
            pl.BlockSpec((Kr, N), lambda i: (0, 0)),
            pl.BlockSpec((1, N), lambda i: (0, 0)),
        ],
        out_specs=pl.BlockSpec((tm, N), lambda i: (i, 0)),
        compiler_params=pltpu.CompilerParams(dimension_semantics=("parallel",)),
    )(x2d, w, bias.reshape(1, N), xr2d, wr, biasr.reshape(1, N))


def matmul_bias_residual_relu(x2d, w, bias, res2d, *, out_dtype, tm_target=512):
    """relu(x2d @ w + bias + res2d) — conv3 + identity residual fused."""
    M, K = x2d.shape
    N = w.shape[1]
    tm = _pick_tm(M, tm_target)
    grid = (M // tm,)
    return pl.pallas_call(
        _matmul_bias_residual_relu_kernel,
        out_shape=jax.ShapeDtypeStruct((M, N), out_dtype),
        grid=grid,
        in_specs=[
            pl.BlockSpec((tm, K), lambda i: (i, 0)),
            pl.BlockSpec((K, N), lambda i: (0, 0)),
            pl.BlockSpec((1, N), lambda i: (0, 0)),
            pl.BlockSpec((tm, N), lambda i: (i, 0)),
        ],
        out_specs=pl.BlockSpec((tm, N), lambda i: (i, 0)),
        compiler_params=pltpu.CompilerParams(dimension_semantics=("parallel",)),
    )(x2d, w, bias.reshape(1, N), res2d)


def conv3x3_bn_relu(x_nhwc, w9, bias, stride, *, out_dtype):
    """3x3 conv (pad=1, stride 1 or 2) + folded-BN bias + ReLU.

    No im2col in HBM: the padded input is decomposed into stride-phase grids
    (total bytes == input bytes) and one Pallas kernel per image accumulates
    the 9 taps in VMEM.
    """
    N, H, W, C = x_nhwc.shape
    P = w9.shape[2]
    Ho = (H + 2 - 3) // stride + 1
    Wo = (W + 2 - 3) // stride + 1
    xp = jnp.pad(x_nhwc, ((0, 0), (1, 1), (1, 1), (0, 0)))

    if stride == 1:
        phases = [xp]
        def tap_loc(dh, dw):
            return (0, dh, dw)
    elif stride == 2:
        phases = [xp[:, p::2, q::2, :] for p in range(2) for q in range(2)]
        def tap_loc(dh, dw):
            return ((dh % 2) * 2 + (dw % 2), dh // 2, dw // 2)
    else:
        # TODO(synk): generic stride >2 not implemented (ResNet uses 1 or 2).
        raise NotImplementedError("conv2 stride must be 1 or 2")

    taps = tuple(tap_loc(dh, dw) for dh in range(3) for dw in range(3))
    nphase = len(phases)

    in_specs = []
    for ph in phases:
        _, hp, wp, _ = ph.shape
        in_specs.append(pl.BlockSpec((1, hp, wp, C), lambda b: (b, 0, 0, 0)))
    in_specs.append(pl.BlockSpec((9, C, P), lambda b: (0, 0, 0)))
    in_specs.append(pl.BlockSpec((1, P), lambda b: (0, 0)))

    out = pl.pallas_call(
        functools.partial(_conv3x3_kernel, nphase=nphase, taps=taps,
                          ho=Ho, wo=Wo),
        out_shape=jax.ShapeDtypeStruct((N, Ho * Wo, P), out_dtype),
        grid=(N,),
        in_specs=in_specs,
        out_specs=pl.BlockSpec((1, Ho * Wo, P), lambda b: (b, 0, 0)),
        compiler_params=pltpu.CompilerParams(dimension_semantics=("parallel",)),
    )(*phases, w9, bias.reshape(1, P))
    return out.reshape(N, Ho, Wo, P)


# ------------------------------ glue helpers ------------------------------- #

def bn_fold(gamma, beta, mean, var, eps=1e-5):
    scale = gamma / jnp.sqrt(var + eps)
    bias = beta - mean * scale
    return scale, bias


def fold_bn_into_conv(w_oihw, bn_params, eps=1e-5):
    # Fold the BN scale into the conv weight so the kernel epilogue is +bias only.
    scale, bias = bn_fold(*bn_params, eps=eps)
    return w_oihw * scale[:, None, None, None], bias


# --------------------------- parameter construction ------------------------ #

EXPANSION = 4


def init_params(key, in_planes, planes, stride):
    keys = jax.random.split(key, 8)

    def conv_w(k, cout, cin, kh, kw):
        return 0.1 * jax.random.normal(k, (cout, cin, kh, kw), jnp.float32)

    def bn_p(k, c):
        k1, k2, k3, k4 = jax.random.split(k, 4)
        gamma = 1.0 + 0.1 * jax.random.normal(k1, (c,), jnp.float32)
        beta = 0.1 * jax.random.normal(k2, (c,), jnp.float32)
        mean = 0.1 * jax.random.normal(k3, (c,), jnp.float32)
        var = 0.5 + 0.5 * jnp.abs(jax.random.normal(k4, (c,), jnp.float32))
        return gamma, beta, mean, var

    params = dict(
        conv1=conv_w(keys[0], planes, in_planes, 1, 1),
        bn1=bn_p(keys[1], planes),
        conv2=conv_w(keys[2], planes, planes, 3, 3),
        bn2=bn_p(keys[3], planes),
        conv3=conv_w(keys[4], EXPANSION * planes, planes, 1, 1),
        bn3=bn_p(keys[5], EXPANSION * planes),
    )
    if stride != 1 or in_planes != EXPANSION * planes:
        params["ds_conv"] = conv_w(keys[6], EXPANSION * planes, in_planes, 1, 1)
        params["ds_bn"] = bn_p(keys[7], EXPANSION * planes)
    return params


# ------------------------------- forward pass ------------------------------ #

def bottleneck_forward(x_nchw, params, stride):
    Nb, Cin, H, W = x_nchw.shape
    x = jnp.transpose(x_nchw, (0, 2, 3, 1))              # NCHW -> NHWC (f32)
    planes = params["conv1"].shape[0]
    cexp = params["conv3"].shape[0]

    cdt = jnp.bfloat16   # MXU / HBM boundary dtype; all matmuls accumulate f32

    # Fold BN scales into conv weights once (outside the kernels).
    w1, b1 = fold_bn_into_conv(params["conv1"], params["bn1"])
    w2, b2 = fold_bn_into_conv(params["conv2"], params["bn2"])
    w3, b3 = fold_bn_into_conv(params["conv3"], params["bn3"])

    w1m = w1.reshape(planes, Cin).T.astype(cdt)                         # (Cin, P)
    w2m = jnp.transpose(w2, (2, 3, 1, 0)).reshape(9, planes, planes).astype(cdt)
    w3m = w3.reshape(cexp, planes).T.astype(cdt)                        # (P, 4P)

    xb = x.astype(cdt)

    # conv1 (1x1) + bn1 + relu  -> bf16 activations
    out1 = matmul_bias_act(xb.reshape(Nb * H * W, Cin), w1m, b1,
                           relu=True, out_dtype=cdt)
    out1 = out1.reshape(Nb, H, W, planes)

    # conv2 (3x3, stride, pad=1) + bn2 + relu  (9-tap MXU accumulation in VMEM)
    out2 = conv3x3_bn_relu(out1, w2m, b2, stride, out_dtype=cdt)
    _, Ho, Wo, _ = out2.shape
    out2 = out2.reshape(Nb * Ho * Wo, planes)

    # conv3 (1x1) + bn3 + residual + relu, fused with the downsample branch
    if "ds_conv" in params:
        wd, bd = fold_bn_into_conv(params["ds_conv"], params["ds_bn"])
        wdm = wd.reshape(cexp, Cin).T.astype(cdt)
        xs = xb[:, ::stride, ::stride, :].reshape(Nb * Ho * Wo, Cin)
        out = matmul_dual_residual_relu(out2, w3m, b3, xs, wdm, bd,
                                        out_dtype=jnp.float32)
    else:
        res = x.reshape(Nb * Ho * Wo, Cin)       # exact f32 identity residual
        out = matmul_bias_residual_relu(out2, w3m, b3, res,
                                        out_dtype=jnp.float32)

    out = out.reshape(Nb, Ho, Wo, cexp)
    return jnp.transpose(out, (0, 3, 1, 2))               # back to NCHW


# ------------------------------- reference --------------------------------- #

def reference_forward(x, params, stride):
    def conv(x, w, s, p):
        return jax.lax.conv_general_dilated(
            x, w, (s, s), ((p, p), (p, p)),
            dimension_numbers=("NCHW", "OIHW", "NCHW"))

    def bn(x, bnp):
        s, b = bn_fold(*bnp)
        return x * s[None, :, None, None] + b[None, :, None, None]

    out = jax.nn.relu(bn(conv(x, params["conv1"], 1, 0), params["bn1"]))
    out = jax.nn.relu(bn(conv(out, params["conv2"], stride, 1), params["bn2"]))
    out = bn(conv(out, params["conv3"], 1, 0), params["bn3"])
    if "ds_conv" in params:
        res = bn(conv(x, params["ds_conv"], stride, 0), params["ds_bn"])
    else:
        res = x
    return jax.nn.relu(out + res)


# ---------------------------------- main ------------------------------------ #

if __name__ == "__main__":
    key = jax.random.PRNGKey(0)
    kx, kp = jax.random.split(key)

    in_planes, planes, stride = 4, 4, 2       # downsample branch is exercised
    x = jax.random.normal(kx, (2, in_planes, 16, 16), jnp.float32)
    params = init_params(kp, in_planes, planes, stride)

    fwd = jax.jit(bottleneck_forward, static_argnums=2)
    out = fwd(x, params, stride)
    out = jax.block_until_ready(out)

    ref = reference_forward(x, params, stride)
    assert out.shape == ref.shape == (2, EXPANSION * planes, 8, 8)
    max_err = float(jnp.max(jnp.abs(out - ref)))
    # bf16 activations/weights (f32 accumulation) -> tolerance looser than 1e-3.
    if max_err < 5e-2:
        print("KERNEL_OK")
    else:
        print(f"MISMATCH max_abs_err={max_err}")
</pallas_src>

<mosaic_0001>
module attributes {stable_mosaic.version = 11 : i64} {
  func.func @_matmul_bias_act_kernel(%arg0: i32, %arg1: memref<256x4xbf16, #tpu.memory_space<vmem>>, %arg2: memref<4x4xbf16, #tpu.memory_space<vmem>>, %arg3: memref<1x4xf32, #tpu.memory_space<vmem>>, %arg4: memref<256x4xbf16, #tpu.memory_space<vmem>>) attributes {dimension_semantics = [#tpu.dimension_semantics<parallel>], iteration_bounds = array<i64: 2>, scalar_prefetch = 0 : i64, scratch_operands = 0 : i64, tpu.core_type = #tpu.core_type<tc>, window_params = [{transform_indices = @transform_0, window_bounds = array<i64: 256, 4>}, {pipeline_mode = #tpu.pipeline_mode<synchronous>, transform_indices = @transform_1, window_bounds = array<i64: 4, 4>}, {pipeline_mode = #tpu.pipeline_mode<synchronous>, transform_indices = @transform_2, window_bounds = array<i64: 1, 4>}, {transform_indices = @transform_3, window_bounds = array<i64: 256, 4>}]} {
    %c0 = arith.constant 0 : index
    %c0_0 = arith.constant 0 : index
    %0 = vector.load %arg1[%c0, %c0_0] : memref<256x4xbf16, #tpu.memory_space<vmem>>, vector<256x4xbf16>
    %c0_1 = arith.constant 0 : index
    %c0_2 = arith.constant 0 : index
    %1 = vector.load %arg2[%c0_1, %c0_2] : memref<4x4xbf16, #tpu.memory_space<vmem>>, vector<4x4xbf16>
    %cst = arith.constant dense<0.000000e+00> : vector<256x4xf32>
    %2 = tpu.matmul %0, %1, %cst {dimension_numbers = #tpu.dot_dimension_numbers<[1], [0], [0], [1], [0, 0, 1, 1], [], []>} : vector<256x4xbf16>, vector<4x4xbf16>, vector<256x4xf32> -> vector<256x4xf32>
    %c0_3 = arith.constant 0 : index
    %c0_4 = arith.constant 0 : index
    %3 = vector.load %arg3[%c0_3, %c0_4] : memref<1x4xf32, #tpu.memory_space<vmem>>, vector<1x4xf32>
    %4 = vector.broadcast %3 : vector<1x4xf32> to vector<256x4xf32>
    %5 = arith.addf %2, %4 : vector<256x4xf32>
    %cst_5 = arith.constant 0.000000e+00 : f32
    %6 = vector.broadcast %cst_5 : f32 to vector<256x4xf32>
    %7 = arith.maximumf %5, %6 : vector<256x4xf32>
    %8 = arith.truncf %7 : vector<256x4xf32> to vector<256x4xbf16>
    %c0_6 = arith.constant 0 : index
    %c0_7 = arith.constant 0 : index
    %9 = vector.load %arg4[%c0_6, %c0_7] : memref<256x4xbf16, #tpu.memory_space<vmem>>, vector<256x4xbf16>
    tpu.vector_store %arg4[%c0_6, %c0_7], %8 {strides = array<i32>} : memref<256x4xbf16, #tpu.memory_space<vmem>>, vector<256x4xbf16>,
    return
  }
  func.func @transform_0(%arg0: i32) -> (i32, i32) {
    %c0_i32 = arith.constant 0 : i32
    %c0_i32_0 = arith.constant 0 : i32
    return %arg0, %c0_i32 : i32, i32
  }
  func.func @transform_1(%arg0: i32) -> (i32, i32) {
    %c0_i32 = arith.constant 0 : i32
    %c0_i32_0 = arith.constant 0 : i32
    %c0_i32_1 = arith.constant 0 : i32
    return %c0_i32, %c0_i32_0 : i32, i32
  }
  func.func @transform_2(%arg0: i32) -> (i32, i32) {
    %c0_i32 = arith.constant 0 : i32
    %c0_i32_0 = arith.constant 0 : i32
    %c0_i32_1 = arith.constant 0 : i32
    return %c0_i32, %c0_i32_0 : i32, i32
  }
  func.func @transform_3(%arg0: i32) -> (i32, i32) {
    %c0_i32 = arith.constant 0 : i32
    %c0_i32_0 = arith.constant 0 : i32
    return %arg0, %c0_i32 : i32, i32
  }
}

module attributes {stable_mosaic.version = 11 : i64} {
  func.func @_conv3x3_kernel(%arg0: i32, %arg1: memref<1x9x9x4xbf16, #tpu.memory_space<vmem>>, %arg2: memref<1x9x9x4xbf16, #tpu.memory_space<vmem>>, %arg3: memref<1x9x9x4xbf16, #tpu.memory_space<vmem>>, %arg4: memref<1x9x9x4xbf16, #tpu.memory_space<vmem>>, %arg5: memref<9x4x4xbf16, #tpu.memory_space<vmem>>, %arg6: memref<1x4xf32, #tpu.memory_space<vmem>>, %arg7: memref<1x64x4xbf16, #tpu.memory_space<vmem>>) attributes {dimension_semantics = [#tpu.dimension_semantics<parallel>], iteration_bounds = array<i64: 2>, scalar_prefetch = 0 : i64, scratch_operands = 0 : i64, tpu.core_type = #tpu.core_type<tc>, window_params = [{transform_indices = @transform_0, window_bounds = array<i64: 1, 9, 9, 4>}, {transform_indices = @transform_1, window_bounds = array<i64: 1, 9, 9, 4>}, {transform_indices = @transform_2, window_bounds = array<i64: 1, 9, 9, 4>}, {transform_indices = @transform_3, window_bounds = array<i64: 1, 9, 9, 4>}, {pipeline_mode = #tpu.pipeline_mode<synchronous>, transform_indices = @transform_4, window_bounds = array<i64: 9, 4, 4>}, {pipeline_mode = #tpu.pipeline_mode<synchronous>, transform_indices = @transform_5, window_bounds = array<i64: 1, 4>}, {transform_indices = @transform_6, window_bounds = array<i64: 1, 64, 4>}]} {
    %cst = arith.constant 0.000000e+00 : f32
    %0 = vector.broadcast %cst : f32 to vector<64x4xf32>
    %c0 = arith.constant 0 : index
    %c0_0 = arith.constant 0 : index
    %c0_1 = arith.constant 0 : index
    %c0_2 = arith.constant 0 : index
    %1 = vector.load %arg1[%c0, %c0_0, %c0_1, %c0_2] : memref<1x9x9x4xbf16, #tpu.memory_space<vmem>>, vector<1x8x8x4xbf16>
    %2 = vector.shape_cast %1 : vector<1x8x8x4xbf16> to vector<8x8x4xbf16>
    %3 = vector.shape_cast %2 : vector<8x8x4xbf16> to vector<64x4xbf16>
    %c0_3 = arith.constant 0 : index
    %c0_4 = arith.constant 0 : index
    %c0_5 = arith.constant 0 : index
    %4 = vector.load %arg5[%c0_3, %c0_4, %c0_5] : memref<9x4x4xbf16, #tpu.memory_space<vmem>>, vector<1x4x4xbf16>
    %5 = vector.shape_cast %4 : vector<1x4x4xbf16> to vector<4x4xbf16>
    %cst_6 = arith.constant dense<0.000000e+00> : vector<64x4xf32>
    %6 = tpu.matmul %3, %5, %cst_6 {dimension_numbers = #tpu.dot_dimension_numbers<[1], [0], [0], [1], [0, 0, 1, 1], [], []>} : vector<64x4xbf16>, vector<4x4xbf16>, vector<64x4xf32> -> vector<64x4xf32>
    %7 = arith.addf %0, %6 : vector<64x4xf32>
    %c0_7 = arith.constant 0 : index
    %c0_8 = arith.constant 0 : index
    %c0_9 = arith.constant 0 : index
    %c0_10 = arith.constant 0 : index
    %8 = vector.load %arg2[%c0_7, %c0_8, %c0_9, %c0_10] : memref<1x9x9x4xbf16, #tpu.memory_space<vmem>>, vector<1x8x8x4xbf16>
    %9 = vector.shape_cast %8 : vector<1x8x8x4xbf16> to vector<8x8x4xbf16>
    %10 = vector.shape_cast %9 : vector<8x8x4xbf16> to vector<64x4xbf16>
    %c1 = arith.constant 1 : index
    %c0_11 = arith.constant 0 : index
    %c0_12 = arith.constant 0 : index
    %11 = vector.load %arg5[%c1, %c0_11, %c0_12] : memref<9x4x4xbf16, #tpu.memory_space<vmem>>, vector<1x4x4xbf16>
    %12 = vector.shape_cast %11 : vector<1x4x4xbf16> to vector<4x4xbf16>
    %cst_13 = arith.constant dense<0.000000e+00> : vector<64x4xf32>
    %13 = tpu.matmul %10, %12, %cst_13 {dimension_numbers = #tpu.dot_dimension_numbers<[1], [0], [0], [1], [0, 0, 1, 1], [], []>} : vector<64x4xbf16>, vector<4x4xbf16>, vector<64x4xf32> -> vector<64x4xf32>
    %14 = arith.addf %7, %13 : vector<64x4xf32>
    %c0_14 = arith.constant 0 : index
    %c0_15 = arith.constant 0 : index
    %c1_16 = arith.constant 1 : index
    %c0_17 = arith.constant 0 : index
    %15 = vector.load %arg1[%c0_14, %c0_15, %c1_16, %c0_17] : memref<1x9x9x4xbf16, #tpu.memory_space<vmem>>, vector<1x8x8x4xbf16>
    %16 = vector.shape_cast %15 : vector<1x8x8x4xbf16> to vector<8x8x4xbf16>
    %17 = vector.shape_cast %16 : vector<8x8x4xbf16> to vector<64x4xbf16>
    %c2 = arith.constant 2 : index
    %c0_18 = arith.constant 0 : index
    %c0_19 = arith.constant 0 : index
    %18 = vector.load %arg5[%c2, %c0_18, %c0_19] : memref<9x4x4xbf16, #tpu.memory_space<vmem>>, vector<1x4x4xbf16>
    %19 = vector.shape_cast %18 : vector<1x4x4xbf16> to vector<4x4xbf16>
    %cst_20 = arith.constant dense<0.000000e+00> : vector<64x4xf32>
    %20 = tpu.matmul %17, %19, %cst_20 {dimension_numbers = #tpu.dot_dimension_numbers<[1], [0], [0], [1], [0, 0, 1, 1], [], []>} : vector<64x4xbf16>, vector<4x4xbf16>, vector<64x4xf32> -> vector<64x4xf32>
    %21 = arith.addf %14, %20 : vector<64x4xf32>
    %c0_21 = arith.constant 0 : index
    %c0_22 = arith.constant 0 : index
    %c0_23 = arith.constant 0 : index
    %c0_24 = arith.constant 0 : index
    %22 = vector.load %arg3[%c0_21, %c0_22, %c0_23, %c0_24] : memref<1x9x9x4xbf16, #tpu.memory_space<vmem>>, vector<1x8x8x4xbf16>
    %23 = vector.shape_cast %22 : vector<1x8x8x4xbf16> to vector<8x8x4xbf16>
    %24 = vector.shape_cast %23 : vector<8x8x4xbf16> to vector<64x4xbf16>
    %c3 = arith.constant 3 : index
    %c0_25 = arith.constant 0 : index
    %c0_26 = arith.constant 0 : index
    %25 = vector.load %arg5[%c3, %c0_25, %c0_26] : memref<9x4x4xbf16, #tpu.memory_space<vmem>>, vector<1x4x4xbf16>
    %26 = vector.shape_cast %25 : vector<1x4x4xbf16> to vector<4x4xbf16>
    %cst_27 = arith.constant dense<0.000000e+00> : vector<64x4xf32>
    %27 = tpu.matmul %24, %26, %cst_27 {dimension_numbers = #tpu.dot_dimension_numbers<[1], [0], [0], [1], [0, 0, 1, 1], [], []>} : vector<64x4xbf16>, vector<4x4xbf16>, vector<64x4xf32> -> vector<64x4xf32>
    %28 = arith.addf %21, %27 : vector<64x4xf32>
    %c0_28 = arith.constant 0 : index
    %c0_29 = arith.constant 0 : index
    %c0_30 = arith.constant 0 : index
    %c0_31 = arith.constant 0 : index
    %29 = vector.load %arg4[%c0_28, %c0_29, %c0_30, %c0_31] : memref<1x9x9x4xbf16, #tpu.memory_space<vmem>>, vector<1x8x8x4xbf16>
    %30 = vector.shape_cast %29 : vector<1x8x8x4xbf16> to vector<8x8x4xbf16>
    %31 = vector.shape_cast %30 : vector<8x8x4xbf16> to vector<64x4xbf16>
    %c4 = arith.constant 4 : index
    %c0_32 = arith.constant 0 : index
    %c0_33 = arith.constant 0 : index
    %32 = vector.load %arg5[%c4, %c0_32, %c0_33] : memref<9x4x4xbf16, #tpu.memory_space<vmem>>, vector<1x4x4xbf16>
    %33 = vector.shape_cast %32 : vector<1x4x4xbf16> to vector<4x4xbf16>
    %cst_34 = arith.constant dense<0.000000e+00> : vector<64x4xf32>
    %34 = tpu.matmul %31, %33, %cst_34 {dimension_numbers = #tpu.dot_dimension_numbers<[1], [0], [0], [1], [0, 0, 1, 1], [], []>} : vector<64x4xbf16>, vector<4x4xbf16>, vector<64x4xf32> -> vector<64x4xf32>
    %35 = arith.addf %28, %34 : vector<64x4xf32>
    %c0_35 = arith.constant 0 : index
    %c0_36 = arith.constant 0 : index
    %c1_37 = arith.constant 1 : index
    %c0_38 = arith.constant 0 : index
    %36 = vector.load %arg3[%c0_35, %c0_36, %c1_37, %c0_38] : memref<1x9x9x4xbf16, #tpu.memory_space<vmem>>, vector<1x8x8x4xbf16>
    %37 = vector.shape_cast %36 : vector<1x8x8x4xbf16> to vector<8x8x4xbf16>
    %38 = vector.shape_cast %37 : vector<8x8x4xbf16> to vector<64x4xbf16>
    %c5 = arith.constant 5 : index
    %c0_39 = arith.constant 0 : index
    %c0_40 = arith.constant 0 : index
    %39 = vector.load %arg5[%c5, %c0_39, %c0_40] : memref<9x4x4xbf16, #tpu.memory_space<vmem>>, vector<1x4x4xbf16>
    %40 = vector.shape_cast %39 : vector<1x4x4xbf16> to vector<4x4xbf16>
    %cst_41 = arith.constant dense<0.000000e+00> : vector<64x4xf32>
    %41 = tpu.matmul %38, %40, %cst_41 {dimension_numbers = #tpu.dot_dimension_numbers<[1], [0], [0], [1], [0, 0, 1, 1], [], []>} : vector<64x4xbf16>, vector<4x4xbf16>, vector<64x4xf32> -> vector<64x4xf32>
    %42 = arith.addf %35, %41 : vector<64x4xf32>
    %c0_42 = arith.constant 0 : index
    %c1_43 = arith.constant 1 : index
    %c0_44 = arith.constant 0 : index
    %c0_45 = arith.constant 0 : index
    %43 = vector.load %arg1[%c0_42, %c1_43, %c0_44, %c0_45] : memref<1x9x9x4xbf16, #tpu.memory_space<vmem>>, vector<1x8x8x4xbf16>
    %44 = vector.shape_cast %43 : vector<1x8x8x4xbf16> to vector<8x8x4xbf16>
    %45 = vector.shape_cast %44 : vector<8x8x4xbf16> to vector<64x4xbf16>
    %c6 = arith.constant 6 : index
    %c0_46 = arith.constant 0 : index
    %c0_47 = arith.constant 0 : index
    %46 = vector.load %arg5[%c6, %c0_46, %c0_47] : memref<9x4x4xbf16, #tpu.memory_space<vmem>>, vector<1x4x4xbf16>
    %47 = vector.shape_cast %46 : vector<1x4x4xbf16> to vector<4x4xbf16>
    %cst_48 = arith.constant dense<0.000000e+00> : vector<64x4xf32>
    %48 = tpu.matmul %45, %47, %cst_48 {dimension_numbers = #tpu.dot_dimension_numbers<[1], [0], [0], [1], [0, 0, 1, 1], [], []>} : vector<64x4xbf16>, vector<4x4xbf16>, vector<64x4xf32> -> vector<64x4xf32>
    %49 = arith.addf %42, %48 : vector<64x4xf32>
    %c0_49 = arith.constant 0 : index
    %c1_50 = arith.constant 1 : index
    %c0_51 = arith.constant 0 : index
    %c0_52 = arith.constant 0 : index
    %50 = vector.load %arg2[%c0_49, %c1_50, %c0_51, %c0_52] : memref<1x9x9x4xbf16, #tpu.memory_space<vmem>>, vector<1x8x8x4xbf16>
    %51 = vector.shape_cast %50 : vector<1x8x8x4xbf16> to vector<8x8x4xbf16>
    %52 = vector.shape_cast %51 : vector<8x8x4xbf16> to vector<64x4xbf16>
    %c7 = arith.constant 7 : index
    %c0_53 = arith.constant 0 : index
    %c0_54 = arith.constant 0 : index
    %53 = vector.load %arg5[%c7, %c0_53, %c0_54] : memref<9x4x4xbf16, #tpu.memory_space<vmem>>, vector<1x4x4xbf16>
    %54 = vector.shape_cast %53 : vector<1x4x4xbf16> to vector<4x4xbf16>
    %cst_55 = arith.constant dense<0.000000e+00> : vector<64x4xf32>
    %55 = tpu.matmul %52, %54, %cst_55 {dimension_numbers = #tpu.dot_dimension_numbers<[1], [0], [0], [1], [0, 0, 1, 1], [], []>} : vector<64x4xbf16>, vector<4x4xbf16>, vector<64x4xf32> -> vector<64x4xf32>
    %56 = arith.addf %49, %55 : vector<64x4xf32>
    %c0_56 = arith.constant 0 : index
    %c1_57 = arith.constant 1 : index
    %c1_58 = arith.constant 1 : index
    %c0_59 = arith.constant 0 : index
    %57 = vector.load %arg1[%c0_56, %c1_57, %c1_58, %c0_59] : memref<1x9x9x4xbf16, #tpu.memory_space<vmem>>, vector<1x8x8x4xbf16>
    %58 = vector.shape_cast %57 : vector<1x8x8x4xbf16> to vector<8x8x4xbf16>
    %59 = vector.shape_cast %58 : vector<8x8x4xbf16> to vector<64x4xbf16>
    %c8 = arith.constant 8 : index
    %c0_60 = arith.constant 0 : index
    %c0_61 = arith.constant 0 : index
    %60 = vector.load %arg5[%c8, %c0_60, %c0_61] : memref<9x4x4xbf16, #tpu.memory_space<vmem>>, vector<1x4x4xbf16>
    %61 = vector.shape_cast %60 : vector<1x4x4xbf16> to vector<4x4xbf16>
    %cst_62 = arith.constant dense<0.000000e+00> : vector<64x4xf32>
    %62 = tpu.matmul %59, %61, %cst_62 {dimension_numbers = #tpu.dot_dimension_numbers<[1], [0], [0], [1], [0, 0, 1, 1], [], []>} : vector<64x4xbf16>, vector<4x4xbf16>, vector<64x4xf32> -> vector<64x4xf32>
    %63 = arith.addf %56, %62 : vector<64x4xf32>
    %c0_63 = arith.constant 0 : index
    %c0_64 = arith.constant 0 : index
    %64 = vector.load %arg6[%c0_63, %c0_64] : memref<1x4xf32, #tpu.memory_space<vmem>>, vector<1x4xf32>
    %65 = vector.broadcast %64 : vector<1x4xf32> to vector<64x4xf32>
    %66 = arith.addf %63, %65 : vector<64x4xf32>
    %cst_65 = arith.constant 0.000000e+00 : f32
    %67 = vector.broadcast %cst_65 : f32 to vector<64x4xf32>
    %68 = arith.maximumf %66, %67 : vector<64x4xf32>
    %69 = arith.truncf %68 : vector<64x4xf32> to vector<64x4xbf16>
    %c0_66 = arith.constant 0 : index
    %c0_67 = arith.constant 0 : index
    %c0_68 = arith.constant 0 : index
    %70 = vector.load %arg7[%c0_66, %c0_67, %c0_68] : memref<1x64x4xbf16, #tpu.memory_space<vmem>>, vector<1x64x4xbf16>
    %71 = vector.shape_cast %70 : vector<1x64x4xbf16> to vector<64x4xbf16>
    %72 = vector.shape_cast %69 : vector<64x4xbf16> to vector<1x64x4xbf16>
    tpu.vector_store %arg7[%c0_66, %c0_67, %c0_68], %72 {strides = array<i32>} : memref<1x64x4xbf16, #tpu.memory_space<vmem>>, vector<1x64x4xbf16>,
    return
  }
  func.func @transform_0(%arg0: i32) -> (i32, i32, i32, i32) {
    %c0_i32 = arith.constant 0 : i32
    %c0_i32_0 = arith.constant 0 : i32
    %c0_i32_1 = arith.constant 0 : i32
    %c0_i32_2 = arith.constant 0 : i32
    return %arg0, %c0_i32, %c0_i32_0, %c0_i32_1 : i32, i32, i32, i32
  }
  func.func @transform_1(%arg0: i32) -> (i32, i32, i32, i32) {
    %c0_i32 = arith.constant 0 : i32
    %c0_i32_0 = arith.constant 0 : i32
    %c0_i32_1 = arith.constant 0 : i32
    %c0_i32_2 = arith.constant 0 : i32
    return %arg0, %c0_i32, %c0_i32_0, %c0_i32_1 : i32, i32, i32, i32
  }
  func.func @transform_2(%arg0: i32) -> (i32, i32, i32, i32) {
    %c0_i32 = arith.constant 0 : i32
    %c0_i32_0 = arith.constant 0 : i32
    %c0_i32_1 = arith.constant 0 : i32
    %c0_i32_2 = arith.constant 0 : i32
    return %arg0, %c0_i32, %c0_i32_0, %c0_i32_1 : i32, i32, i32, i32
  }
  func.func @transform_3(%arg0: i32) -> (i32, i32, i32, i32) {
    %c0_i32 = arith.constant 0 : i32
    %c0_i32_0 = arith.constant 0 : i32
    %c0_i32_1 = arith.constant 0 : i32
    %c0_i32_2 = arith.constant 0 : i32
    return %arg0, %c0_i32, %c0_i32_0, %c0_i32_1 : i32, i32, i32, i32
  }
  func.func @transform_4(%arg0: i32) -> (i32, i32, i32) {
    %c0_i32 = arith.constant 0 : i32
    %c0_i32_0 = arith.constant 0 : i32
    %c0_i32_1 = arith.constant 0 : i32
    %c0_i32_2 = arith.constant 0 : i32
    return %c0_i32, %c0_i32_0, %c0_i32_1 : i32, i32, i32
  }
  func.func @transform_5(%arg0: i32) -> (i32, i32) {
    %c0_i32 = arith.constant 0 : i32
    %c0_i32_0 = arith.constant 0 : i32
    %c0_i32_1 = arith.constant 0 : i32
    return %c0_i32, %c0_i32_0 : i32, i32
  }
  func.func @transform_6(%arg0: i32) -> (i32, i32, i32) {
    %c0_i32 = arith.constant 0 : i32
    %c0_i32_0 = arith.constant 0 : i32
    %c0_i32_1 = arith.constant 0 : i32
    return %arg0, %c0_i32, %c0_i32_0 : i32, i32, i32
  }
}

module attributes {stable_mosaic.version = 11 : i64} {
  func.func @_dual_matmul_add_relu_kernel(%arg0: i32, %arg1: memref<64x4xbf16, #tpu.memory_space<vmem>>, %arg2: memref<4x16xbf16, #tpu.memory_space<vmem>>, %arg3: memref<1x16xf32, #tpu.memory_space<vmem>>, %arg4: memref<64x4xbf16, #tpu.memory_space<vmem>>, %arg5: memref<4x16xbf16, #tpu.memory_space<vmem>>, %arg6: memref<1x16xf32, #tpu.memory_space<vmem>>, %arg7: memref<64x16xf32, #tpu.memory_space<vmem>>) attributes {dimension_semantics = [#tpu.dimension_semantics<parallel>], iteration_bounds = array<i64: 2>, scalar_prefetch = 0 : i64, scratch_operands = 0 : i64, tpu.core_type = #tpu.core_type<tc>, window_params = [{transform_indices = @transform_0, window_bounds = array<i64: 64, 4>}, {pipeline_mode = #tpu.pipeline_mode<synchronous>, transform_indices = @transform_1, window_bounds = array<i64: 4, 16>}, {pipeline_mode = #tpu.pipeline_mode<synchronous>, transform_indices = @transform_2, window_bounds = array<i64: 1, 16>}, {transform_indices = @transform_3, window_bounds = array<i64: 64, 4>}, {pipeline_mode = #tpu.pipeline_mode<synchronous>, transform_indices = @transform_4, window_bounds = array<i64: 4, 16>}, {pipeline_mode = #tpu.pipeline_mode<synchronous>, transform_indices = @transform_5, window_bounds = array<i64: 1, 16>}, {transform_indices = @transform_6, window_bounds = array<i64: 64, 16>}]} {
    %c0 = arith.constant 0 : index
    %c0_0 = arith.constant 0 : index
    %0 = vector.load %arg1[%c0, %c0_0] : memref<64x4xbf16, #tpu.memory_space<vmem>>, vector<64x4xbf16>
    %c0_1 = arith.constant 0 : index
    %c0_2 = arith.constant 0 : index
    %1 = vector.load %arg2[%c0_1, %c0_2] : memref<4x16xbf16, #tpu.memory_space<vmem>>, vector<4x16xbf16>
    %cst = arith.constant dense<0.000000e+00> : vector<64x16xf32>
    %2 = tpu.matmul %0, %1, %cst {dimension_numbers = #tpu.dot_dimension_numbers<[1], [0], [0], [1], [0, 0, 1, 1], [], []>} : vector<64x4xbf16>, vector<4x16xbf16>, vector<64x16xf32> -> vector<64x16xf32>
    %c0_3 = arith.constant 0 : index
    %c0_4 = arith.constant 0 : index
    %3 = vector.load %arg3[%c0_3, %c0_4] : memref<1x16xf32, #tpu.memory_space<vmem>>, vector<1x16xf32>
    %4 = vector.broadcast %3 : vector<1x16xf32> to vector<64x16xf32>
    %5 = arith.addf %2, %4 : vector<64x16xf32>
    %c0_5 = arith.constant 0 : index
    %c0_6 = arith.constant 0 : index
    %6 = vector.load %arg4[%c0_5, %c0_6] : memref<64x4xbf16, #tpu.memory_space<vmem>>, vector<64x4xbf16>
    %c0_7 = arith.constant 0 : index
    %c0_8 = arith.constant 0 : index
    %7 = vector.load %arg5[%c0_7, %c0_8] : memref<4x16xbf16, #tpu.memory_space<vmem>>, vector<4x16xbf16>
    %cst_9 = arith.constant dense<0.000000e+00> : vector<64x16xf32>
    %8 = tpu.matmul %6, %7, %cst_9 {dimension_numbers = #tpu.dot_dimension_numbers<[1], [0], [0], [1], [0, 0, 1, 1], [], []>} : vector<64x4xbf16>, vector<4x16xbf16>, vector<64x16xf32> -> vector<64x16xf32>
    %c0_10 = arith.constant 0 : index
    %c0_11 = arith.constant 0 : index
    %9 = vector.load %arg6[%c0_10, %c0_11] : memref<1x16xf32, #tpu.memory_space<vmem>>, vector<1x16xf32>
    %10 = vector.broadcast %9 : vector<1x16xf32> to vector<64x16xf32>
    %11 = arith.addf %8, %10 : vector<64x16xf32>
    %12 = arith.addf %5, %11 : vector<64x16xf32>
    %cst_12 = arith.constant 0.000000e+00 : f32
    %13 = vector.broadcast %cst_12 : f32 to vector<64x16xf32>
    %14 = arith.maximumf %12, %13 : vector<64x16xf32>
    %c0_13 = arith.constant 0 : index
    %c0_14 = arith.constant 0 : index
    %15 = vector.load %arg7[%c0_13, %c0_14] : memref<64x16xf32, #tpu.memory_space<vmem>>, vector<64x16xf32>
    tpu.vector_store %arg7[%c0_13, %c0_14], %14 {strides = array<i32>} : memref<64x16xf32, #tpu.memory_space<vmem>>, vector<64x16xf32>,
    return
  }
  func.func @transform_0(%arg0: i32) -> (i32, i32) {
    %c0_i32 = arith.constant 0 : i32
    %c0_i32_0 = arith.constant 0 : i32
    return %arg0, %c0_i32 : i32, i32
  }
  func.func @transform_1(%arg0: i32) -> (i32, i32) {
    %c0_i32 = arith.constant 0 : i32
    %c0_i32_0 = arith.constant 0 : i32
    %c0_i32_1 = arith.constant 0 : i32
    return %c0_i32, %c0_i32_0 : i32, i32
  }
  func.func @transform_2(%arg0: i32) -> (i32, i32) {
    %c0_i32 = arith.constant 0 : i32
    %c0_i32_0 = arith.constant 0 : i32
    %c0_i32_1 = arith.constant 0 : i32
    return %c0_i32, %c0_i32_0 : i32, i32
  }
  func.func @transform_3(%arg0: i32) -> (i32, i32) {
    %c0_i32 = arith.constant 0 : i32
    %c0_i32_0 = arith.constant 0 : i32
    return %arg0, %c0_i32 : i32, i32
  }
  func.func @transform_4(%arg0: i32) -> (i32, i32) {
    %c0_i32 = arith.constant 0 : i32
    %c0_i32_0 = arith.constant 0 : i32
    %c0_i32_1 = arith.constant 0 : i32
    return %c0_i32, %c0_i32_0 : i32, i32
  }
  func.func @transform_5(%arg0: i32) -> (i32, i32) {
    %c0_i32 = arith.constant 0 : i32
    %c0_i32_0 = arith.constant 0 : i32
    %c0_i32_1 = arith.constant 0 : i32
    return %c0_i32, %c0_i32_0 : i32, i32
  }
  func.func @transform_6(%arg0: i32) -> (i32, i32) {
    %c0_i32 = arith.constant 0 : i32
    %c0_i32_0 = arith.constant 0 : i32
    return %arg0, %c0_i32 : i32, i32
  }
}

</mosaic_0001>

<llo_original>
// kernel: bottleneck_forward.3
$region0: #{bottleneck_forward.3}
  #allocation0 [shape = 'u32[]', space=smem, size = 0x4, offset = 0x4, fixed_abs, tag = 'smem constant byte address 0x4 - core index']
  #allocation1 [shape = 'u32[144,128]{1,0:T(1,128)}', space=vmem, size = 0x12000, scoped, tag = 'internal scratch']
  %s0 = inlined_call_operand.vmem [shape: bf16[512,4], index: 0, kind: input, shape index: {}]
  %s1 = inlined_call_operand.vmem [shape: bf16[4,4], index: 1, kind: input, shape index: {}]
  %s2 = inlined_call_operand.vmem [shape: f32[1,4], index: 2, kind: input, shape index: {}]
  %s3 = inlined_call_operand.vmem [shape: bf16[512,4], index: 3, kind: output, shape index: {}]
  %s4 = sld [smem:[#allocation0]]
  $region45: #{bottleneck_forward.3} parent=0
    _
  %s6 = ssub.s32 1, %s4
  %s7 = scalar_select 0, %s6, %s4
  loop: start=0, step=1, limit=4
  $region2: #{bottleneck_forward.3} parent=0 // loop_pre_header
    _
  $region3: #{bottleneck_forward.3} parent=0 // loop_header
    %s9 = sphi 0, %s13
    %p10 = scmp.ge.s32.totalorder %s9, 4
    %s19 = sphi 0, %s21
    %s22 = sphi 0, %s19
    %s23 = sphi 0, %s22
    %s39 = sphi 0, %s23
    %s43 = sphi 0, %s43
    %s45 = sphi 0, %s43
    %s46 = sphi 0, %s45
    %s60 = sphi 0, %s46
    %s64 = sphi 0, %s64
    %s66 = sphi 0, %s64
    %s67 = sphi 0, %s66
    %s81 = sphi 0, %s67
    %s87 = sphi 0, %s89
    %s90 = sphi 0, %s87
    %s91 = sphi 0, %s90
    %s107 = sphi 0, %s91
  $region4: #{bottleneck_forward.3} parent=0 // loop_header_branch
    %12 = sbr.rel (%p10) target = $region8
  $region5: #{bottleneck_forward.3} parent=0 // loop_body
    %s14 = ssub.s32 %s9, 1
    %s15 = ssub.s32 %s9, 2
    %s16 = sadd.s32 %s9, 1
    %s17 = ssub.s32 %s9, %s16
    %p18 = scmp.eq.s32.totalorder %s17, 0
    %s20 = sadd.s32 %s19, 1
    %s21 = scalar_select %p18, %s19, %s20
    %p24 = pneg %p18
    %p25 = scmp.eq.s32.totalorder %s9, 1
    %p26 = por %p24, %p25
    %p27 = scmp.ne.s32.totalorder %s19, %s22
    %p28 = scmp.eq.s32.totalorder %s9, 0
    %p29 = por %p27, %p28
    %p30 = scmp.ne.s32.totalorder %s19, %s22
    %p31 = scmp.eq.s32.totalorder %s14, 1
    %p32 = por %p30, %p31
    %p33 = scmp.ne.s32.totalorder %s22, %s23
    %p34 = scmp.eq.s32.totalorder %s14, 0
    %p35 = por %p33, %p34
    %p36 = scmp.ne.s32.totalorder %s22, %s23
    %p37 = scmp.eq.s32.totalorder %s15, 1
    %p38 = por %p36, %p37
    %p40 = scmp.ne.s32.totalorder %s23, %s39
    %p41 = scmp.eq.s32.totalorder %s15, 0
    %p42 = por %p40, %p41
    %s44 = sadd.s32 %s43, 1
    %p47 = scmp.eq.s32.totalorder %s9, 1
    %p48 = scmp.ne.s32.totalorder %s43, %s45
    %p49 = scmp.eq.s32.totalorder %s9, 0
    %p50 = por %p48, %p49
    %p51 = scmp.ne.s32.totalorder %s43, %s45
    %p52 = scmp.eq.s32.totalorder %s14, 1
    %p53 = por %p51, %p52
    %p54 = scmp.ne.s32.totalorder %s45, %s46
    %p55 = scmp.eq.s32.totalorder %s14, 0
    %p56 = por %p54, %p55
    %p57 = scmp.ne.s32.totalorder %s45, %s46
    %p58 = scmp.eq.s32.totalorder %s15, 1
    %p59 = por %p57, %p58
    %p61 = scmp.ne.s32.totalorder %s46, %s60
    %p62 = scmp.eq.s32.totalorder %s15, 0
    %p63 = por %p61, %p62
    %s65 = sadd.s32 %s64, 1
    %p68 = scmp.eq.s32.totalorder %s9, 1
    %p69 = scmp.ne.s32.totalorder %s64, %s66
    %p70 = scmp.eq.s32.totalorder %s9, 0
    %p71 = por %p69, %p70
    %p72 = scmp.ne.s32.totalorder %s64, %s66
    %p73 = scmp.eq.s32.totalorder %s14, 1
    %p74 = por %p72, %p73
    %p75 = scmp.ne.s32.totalorder %s66, %s67
    %p76 = scmp.eq.s32.totalorder %s14, 0
    %p77 = por %p75, %p76
    %p78 = scmp.ne.s32.totalorder %s66, %s67
    %p79 = scmp.eq.s32.totalorder %s15, 1
    %p80 = por %p78, %p79
    %p82 = scmp.ne.s32.totalorder %s67, %s81
    %p83 = scmp.eq.s32.totalorder %s15, 0
    %p84 = por %p82, %p83
    %s85 = ssub.s32 %s9, %s16
    %p86 = scmp.eq.s32.totalorder %s85, 0
    %s88 = sadd.s32 %s87, 1
    %s89 = scalar_select %p86, %s87, %s88
    %p92 = pneg %p86
    %p93 = scmp.eq.s32.totalorder %s9, 1
    %p94 = por %p92, %p93
    %p95 = scmp.ne.s32.totalorder %s87, %s90
    %p96 = scmp.eq.s32.totalorder %s9, 0
    %p97 = por %p95, %p96
    %p98 = scmp.ne.s32.totalorder %s87, %s90
    %p99 = scmp.eq.s32.totalorder %s14, 1
    %p100 = por %p98, %p99
    %p101 = scmp.ne.s32.totalorder %s90, %s91
    %p102 = scmp.eq.s32.totalorder %s14, 0
    %p103 = por %p101, %p102
    %p104 = scmp.ne.s32.totalorder %s90, %s91
    %p105 = scmp.eq.s32.totalorder %s15, 1
    %p106 = por %p104, %p105
    %p108 = scmp.ne.s32.totalorder %s91, %s107
    %p109 = scmp.eq.s32.totalorder %s15, 0
    %p110 = por %p108, %p109
    %p111 = scmp.le.s32.totalorder 1, %s9
    %p112 = scmp.lt.s32.totalorder %s9, 3
    %p113 = pnand %p111, %p112
    %p114 = pneg %p113
    // Predicated region
    $region9: #{bottleneck_forward.3} parent=5 // pred_check
      _
    $region10: #{bottleneck_forward.3} parent=5 // pred_check_branch
      %116 = sbr.rel (%p113) target = $region12
    $region11: #{bottleneck_forward.3} parent=5 // pred_region
      %s117 = ssub.s32 %s9, 1
      // Predicated region
      $region13: #{bottleneck_forward.3} parent=11 // pred_check
        %p118 = pneg %p56
      $region14: #{bottleneck_forward.3} parent=11 // pred_check_branch
        %120 = sbr.rel (%p118) target = $region16
      $region15: #{bottleneck_forward.3} parent=11 // pred_region
        _
      $region16: #{bottleneck_forward.3} parent=11 // pred_fallthru
        _
      // Predicated region
      $region17: #{bottleneck_forward.3} parent=11 // pred_check
        %p121 = pneg %p77
      $region18: #{bottleneck_forward.3} parent=11 // pred_check_branch
        %123 = sbr.rel (%p121) target = $region20
      $region19: #{bottleneck_forward.3} parent=11 // pred_region
        _
      $region20: #{bottleneck_forward.3} parent=11 // pred_fallthru
        _
    $region12: #{bottleneck_forward.3} parent=5 // pred_fallthru
      _
    %p124 = scmp.lt.s32.totalorder %s9, 2
    // Predicated region
    $region21: #{bottleneck_forward.3} parent=5 // pred_check
      %p125 = pneg %p124
    $region22: #{bottleneck_forward.3} parent=5 // pred_check_branch
      %127 = sbr.rel (%p125) target = $region24
    $region23: #{bottleneck_forward.3} parent=5 // pred_region
      // Predicated region
      $region25: #{bottleneck_forward.3} parent=23 // pred_check
        %p128 = pneg %p29
      $region26: #{bottleneck_forward.3} parent=23 // pred_check_branch
        %130 = sbr.rel (%p128) target = $region28
      $region27: #{bottleneck_forward.3} parent=23 // pred_region
        %s131 = smul.u32 32, %s9
        %p132 = scmp.lt.s32.totalorder %s131, 63
        %s133 = scalar_select %p132, %s131, 63
        %s134 = smul.addr %s133, 4
        %s135 = scalar_lea.vmem %s0, %s134
        %s136 = smul.u32 32, %s9
      $region28: #{bottleneck_forward.3} parent=23 // pred_fallthru
        _
    $region24: #{bottleneck_forward.3} parent=5 // pred_fallthru
      _
    %p137 = scmp.le.s32.totalorder 1, %s9
    %p138 = scmp.lt.s32.totalorder %s9, 3
    %p139 = pnand %p137, %p138
    %p140 = pneg %p139
    // Predicated region
    $region29: #{bottleneck_forward.3} parent=5 // pred_check
      _
    $region30: #{bottleneck_forward.3} parent=5 // pred_check_branch
      %142 = sbr.rel (%p139) target = $region32
    $region31: #{bottleneck_forward.3} parent=5 // pred_region
      %s143 = ssub.s32 %s9, 1
      %s144 = smul.u32 32, %s14
      %p145 = scmp.lt.s32.totalorder %s144, 63
      %s146 = scalar_select %p145, %s144, 63
      %s147 = smul.addr %s146, 4
      %s148 = scalar_lea.vmem %s0, %s147
      %p149 = pneg %p35
      %p150 = pneg %p32
      %p151 = pneg %p56
      %p152 = pneg %p53
      %p153 = pneg %p77
      %p154 = pneg %p74
      %p155 = pneg %p103
      %p156 = pneg %p100
      %s157 = smul.u32 32, %s14
      %p158 = scmp.lt.s32.totalorder %s157, 63
      %s159 = scalar_select %p158, %s157, 63
      %s160 = smul.addr %s159, 4
      %s161 = scalar_lea.vmem %s3, %s160
      %s162 = smul.u32 32, %s14
      %p163 = scmp.lt.s32.totalorder %s162, 63
      %s164 = scalar_select %p163, %s162, 63
      %s165 = smul.addr %s164, 4
      %s166 = scalar_lea.vmem %s0, %s165
      %s167 = smul.u32 32, %s14
      %s168 = smul.u32 32, %s14
      %p169 = scmp.lt.s32.totalorder %s168, 63
      %s170 = scalar_select %p169, %s168, 63
      %s171 = smul.addr %s170, 4
      %s172 = scalar_lea.vmem %s3, %s171
      %s173 = smul.u32 32, %s14
      %v175 = vld [vmem:[%s166] sm:$0xf]
      %v176 = vld [vmem:[%s166 + $0x4] sm:$0xf]
      %v177 = vld [vmem:[%s166 + $0x8] sm:$0xf]
      %v178 = vld [vmem:[%s166 + $0xc] sm:$0xf]
      %v179 = vld [vmem:[%s166 + $0x10] sm:$0xf]
      %v180 = vld [vmem:[%s166 + $0x14] sm:$0xf]
      %v181 = vld [vmem:[%s166 + $0x18] sm:$0xf]
      %v182 = vld [vmem:[%s166 + $0x1c] sm:$0xf]
      %v183 = vld [vmem:[%s166 + $0x20] sm:$0xf]
      %v184 = vld [vmem:[%s166 + $0x24] sm:$0xf]
      %v185 = vld [vmem:[%s166 + $0x28] sm:$0xf]
      %v186 = vld [vmem:[%s166 + $0x2c] sm:$0xf]
      %v187 = vld [vmem:[%s166 + $0x30] sm:$0xf]
      %v188 = vld [vmem:[%s166 + $0x34] sm:$0xf]
      %v189 = vld [vmem:[%s166 + $0x38] sm:$0xf]
      %v190 = vld [vmem:[%s166 + $0x3c] sm:$0xf]
      %v191 = vld [vmem:[%s166 + $0x40] sm:$0xf]
      %v192 = vld [vmem:[%s166 + $0x44] sm:$0xf]
      %v193 = vld [vmem:[%s166 + $0x48] sm:$0xf]
      %v194 = vld [vmem:[%s166 + $0x4c] sm:$0xf]
      %v195 = vld [vmem:[%s166 + $0x50] sm:$0xf]
      %v196 = vld [vmem:[%s166 + $0x54] sm:$0xf]
      %v197 = vld [vmem:[%s166 + $0x58] sm:$0xf]
      %v198 = vld [vmem:[%s166 + $0x5c] sm:$0xf]
      %v199 = vld [vmem:[%s166 + $0x60] sm:$0xf]
      %v200 = vld [vmem:[%s166 + $0x64] sm:$0xf]
      %v201 = vld [vmem:[%s166 + $0x68] sm:$0xf]
      %v202 = vld [vmem:[%s166 + $0x6c] sm:$0xf]
      %v203 = vld [vmem:[%s166 + $0x70] sm:$0xf]
      %v204 = vld [vmem:[%s166 + $0x74] sm:$0xf]
      %v205 = vld [vmem:[%s166 + $0x78] sm:$0xf]
      %v206 = vld [vmem:[%s166 + $0x7c] sm:$0xf]
      %v207 = vld [vmem:[%s1] sm:$0x3]
      %v208 = vld [vmem:[%s2] sm:$0x1]
      %v210 = vlaneseq
      %v211 = vshrl.u32 %v210, 7
      %v212 = vsub.s32 0, %v211
      %v213 = vrot.slane %v208, %v212
      %v247 = vunpack.c.l.b16 %v175
      %v248 = vunpack.c.l.b16 %v176
      %v249 = vunpack.c.l.b16 %v177
      %v250 = vunpack.c.l.b16 %v178
      %v251 = vunpack.c.l.b16 %v179
      %v252 = vunpack.c.l.b16 %v180
      %v253 = vunpack.c.l.b16 %v181
      %v254 = vunpack.c.l.b16 %v182
      %v255 = vunpack.c.l.b16 %v183
      %v256 = vunpack.c.l.b16 %v184
      %v257 = vunpack.c.l.b16 %v185
      %v258 = vunpack.c.l.b16 %v186
      %v259 = vunpack.c.l.b16 %v187
      %v260 = vunpack.c.l.b16 %v188
      %v261 = vunpack.c.l.b16 %v189
      %v262 = vunpack.c.l.b16 %v190
      %v263 = vunpack.c.l.b16 %v191
      %v264 = vunpack.c.l.b16 %v192
      %v265 = vunpack.c.l.b16 %v193
      %v266 = vunpack.c.l.b16 %v194
      %v267 = vunpack.c.l.b16 %v195
      %v268 = vunpack.c.l.b16 %v196
      %v269 = vunpack.c.l.b16 %v197
      %v270 = vunpack.c.l.b16 %v198
      %v271 = vunpack.c.l.b16 %v199
      %v272 = vunpack.c.l.b16 %v200
      %v273 = vunpack.c.l.b16 %v201
      %v274 = vunpack.c.l.b16 %v202
      %v275 = vunpack.c.l.b16 %v203
      %v276 = vunpack.c.l.b16 %v204
      %v277 = vunpack.c.l.b16 %v205
      %v278 = vunpack.c.l.b16 %v206
      %v279 = vpack.c.b16 %v248, %v247
      %v280 = vpack.c.b16 %v250, %v249
      %v281 = vpack.c.b16 %v252, %v251
      %v282 = vpack.c.b16 %v254, %v253
      %v283 = vpack.c.b16 %v256, %v255
      %v284 = vpack.c.b16 %v258, %v257
      %v285 = vpack.c.b16 %v260, %v259
      %v286 = vpack.c.b16 %v262, %v261
      %v287 = vpack.c.b16 %v264, %v263
      %v288 = vpack.c.b16 %v266, %v265
      %v289 = vpack.c.b16 %v268, %v267
      %v290 = vpack.c.b16 %v270, %v269
      %v291 = vpack.c.b16 %v272, %v271
      %v292 = vpack.c.b16 %v274, %v273
      %v293 = vpack.c.b16 %v276, %v275
      %v294 = vpack.c.b16 %v278, %v277
      %vm295 = vcmask 31744
      %v297 = vsel %vm295, %v279, 0
      %v300 = vsel %vm295, %v280, 0
      %v303 = vsel %vm295, %v281, 0
      %v306 = vsel %vm295, %v282, 0
      %v309 = vsel %vm295, %v283, 0
      %v312 = vsel %vm295, %v284, 0
      %v315 = vsel %vm295, %v285, 0
      %v318 = vsel %vm295, %v286, 0
      %v321 = vsel %vm295, %v287, 0
      %v324 = vsel %vm295, %v288, 0
      %v327 = vsel %vm295, %v289, 0
      %v330 = vsel %vm295, %v290, 0
      %v333 = vsel %vm295, %v291, 0
      %v336 = vsel %vm295, %v292, 0
      %v339 = vsel %vm295, %v293, 0
      %v342 = vsel %vm295, %v294, 0
      %vm344 = vcmask 1041408
      %v346 = vsel %vm344, %v207, 0
      %348 = vmatprep.subr.bf16.mxu0 0
      %349 = vmatpush1.bf16.msra.mxu0 %v346
      %350 = vmatprep.subr.bf16.mxu0 0
      %351 = vmatpush1.bf16.msra.mxu0 0
      %352 = vmatprep.subr.bf16.mxu0 0
      %353 = vmatpush1.bf16.msra.mxu0 0
      %354 = vmatprep.subr.bf16.mxu0 0
      %355 = vmatpush1.bf16.msra.mxu0 0
      %356 = vmatprep.subr.bf16.mxu0 0
      %357 = vmatpush1.bf16.msra.mxu0 0
      %358 = vmatprep.subr.bf16.mxu0 0
      %359 = vmatpush1.bf16.msra.mxu0 0
      %360 = vmatprep.subr.bf16.mxu0 0
      %361 = vmatpush1.bf16.msra.mxu0 0
      %362 = vmatprep.subr.bf16.mxu0 0
      %363 = vmatpush1.bf16.msra.mxu0 0
      %364 = vmatprep.subr.bf16.mxu0 0
      %365 = vmatpush1.bf16.msra.mxu0 0
      %366 = vmatprep.subr.bf16.mxu0 0
      %367 = vmatpush1.bf16.msra.mxu0 0
      %368 = vmatprep.subr.bf16.mxu0 0
      %369 = vmatpush1.bf16.msra.mxu0 0
      %370 = vmatprep.subr.bf16.mxu0 0
      %371 = vmatpush1.bf16.msra.mxu0 0
      %372 = vmatprep.subr.bf16.mxu0 0
      %373 = vmatpush1.bf16.msra.mxu0 0
      %374 = vmatprep.subr.bf16.mxu0 0
      %375 = vmatpush1.bf16.msra.mxu0 0
      %376 = vmatprep.subr.bf16.mxu0 0
      %377 = vmatpush1.bf16.msra.mxu0 0
      %378 = vmatprep.subr.bf16.mxu0 0
      %379 = vmatpush1.bf16.msra.mxu0 0
      %380 = vmatprep.mubr.bf16.mxu0 0
      %381 = vmatmul.mubr.bf16.gmra.mrb[0].mxu0 %v297
      %v382 = vpop.f32.mrb[0].mxu0
      %v383 = vadd.f32 %v213, %v382
      %v384 = vpop.f32.mrb[0].mxu0
      %v385 = vpop.f32.mrb[0].mxu0
      %v386 = vadd.f32 %v213, %v385
      %v387 = vpop.f32.mrb[0].mxu0
      %388 = vmatprep.mubr.bf16.mxu0 0
      %389 = vmatmul.mubr.bf16.gmra.mrb[0].mxu0 %v300
      %v390 = vpop.f32.mrb[0].mxu0
      %v391 = vadd.f32 %v213, %v390
      %v392 = vpop.f32.mrb[0].mxu0
      %v393 = vpop.f32.mrb[0].mxu0
      %v394 = vadd.f32 %v213, %v393
      %v395 = vpop.f32.mrb[0].mxu0
      %396 = vmatprep.mubr.bf16.mxu0 0
      %397 = vmatmul.mubr.bf16.gmra.mrb[0].mxu0 %v303
      %v398 = vpop.f32.mrb[0].mxu0
      %v399 = vadd.f32 %v213, %v398
      %v400 = vpop.f32.mrb[0].mxu0
      %v401 = vpop.f32.mrb[0].mxu0
      %v402 = vadd.f32 %v213, %v401
      %v403 = vpop.f32.mrb[0].mxu0
      %404 = vmatprep.mubr.bf16.mxu0 0
      %405 = vmatmul.mubr.bf16.gmra.mrb[0].mxu0 %v306
      %v406 = vpop.f32.mrb[0].mxu0
      %v407 = vadd.f32 %v213, %v406
      %v408 = vpop.f32.mrb[0].mxu0
      %v409 = vpop.f32.mrb[0].mxu0
      %v410 = vadd.f32 %v213, %v409
      %v411 = vpop.f32.mrb[0].mxu0
      %412 = vmatprep.mubr.bf16.mxu0 0
      %413 = vmatmul.mubr.bf16.gmra.mrb[0].mxu0 %v309
      %v414 = vpop.f32.mrb[0].mxu0
      %v415 = vadd.f32 %v213, %v414
      %v416 = vpop.f32.mrb[0].mxu0
      %v417 = vpop.f32.mrb[0].mxu0
      %v418 = vadd.f32 %v213, %v417
      %v419 = vpop.f32.mrb[0].mxu0
      %420 = vmatprep.mubr.bf16.mxu0 0
      %421 = vmatmul.mubr.bf16.gmra.mrb[0].mxu0 %v312
      %v422 = vpop.f32.mrb[0].mxu0
      %v423 = vadd.f32 %v213, %v422
      %v424 = vpop.f32.mrb[0].mxu0
      %v425 = vpop.f32.mrb[0].mxu0
      %v426 = vadd.f32 %v213, %v425
      %v427 = vpop.f32.mrb[0].mxu0
      %428 = vmatprep.mubr.bf16.mxu0 0
      %429 = vmatmul.mubr.bf16.gmra.mrb[0].mxu0 %v315
      %v430 = vpop.f32.mrb[0].mxu0
      %v431 = vadd.f32 %v213, %v430
      %v432 = vpop.f32.mrb[0].mxu0
      %v433 = vpop.f32.mrb[0].mxu0
      %v434 = vadd.f32 %v213, %v433
      %v435 = vpop.f32.mrb[0].mxu0
      %436 = vmatprep.mubr.bf16.mxu0 0
      %437 = vmatmul.mubr.bf16.gmra.mrb[0].mxu0 %v318
      %v438 = vpop.f32.mrb[0].mxu0
      %v439 = vadd.f32 %v213, %v438
      %v440 = vpop.f32.mrb[0].mxu0
      %v441 = vpop.f32.mrb[0].mxu0
      %v442 = vadd.f32 %v213, %v441
      %v443 = vpop.f32.mrb[0].mxu0
      %444 = vmatprep.mubr.bf16.mxu0 0
      %445 = vmatmul.mubr.bf16.gmra.mrb[0].mxu0 %v321
      %v446 = vpop.f32.mrb[0].mxu0
      %v447 = vadd.f32 %v213, %v446
      %v448 = vpop.f32.mrb[0].mxu0
      %v449 = vpop.f32.mrb[0].mxu0
      %v450 = vadd.f32 %v213, %v449
      %v451 = vpop.f32.mrb[0].mxu0
      %452 = vmatprep.mubr.bf16.mxu0 0
      %453 = vmatmul.mubr.bf16.gmra.mrb[0].mxu0 %v324
      %v454 = vpop.f32.mrb[0].mxu0
      %v455 = vadd.f32 %v213, %v454
      %v456 = vpop.f32.mrb[0].mxu0
      %v457 = vpop.f32.mrb[0].mxu0
      %v458 = vadd.f32 %v213, %v457
      %v459 = vpop.f32.mrb[0].mxu0
      %460 = vmatprep.mubr.bf16.mxu0 0
      %461 = vmatmul.mubr.bf16.gmra.mrb[0].mxu0 %v327
      %v462 = vpop.f32.mrb[0].mxu0
      %v463 = vadd.f32 %v213, %v462
      %v464 = vpop.f32.mrb[0].mxu0
      %v465 = vpop.f32.mrb[0].mxu0
      %v466 = vadd.f32 %v213, %v465
      %v467 = vpop.f32.mrb[0].mxu0
      %468 = vmatprep.mubr.bf16.mxu0 0
      %469 = vmatmul.mubr.bf16.gmra.mrb[0].mxu0 %v330
      %v470 = vpop.f32.mrb[0].mxu0
      %v471 = vadd.f32 %v213, %v470
      %v472 = vpop.f32.mrb[0].mxu0
      %v473 = vpop.f32.mrb[0].mxu0
      %v474 = vadd.f32 %v213, %v473
      %v475 = vpop.f32.mrb[0].mxu0
      %476 = vmatprep.mubr.bf16.mxu0 0
      %477 = vmatmul.mubr.bf16.gmra.mrb[0].mxu0 %v333
      %v478 = vpop.f32.mrb[0].mxu0
      %v479 = vadd.f32 %v213, %v478
      %v480 = vpop.f32.mrb[0].mxu0
      %v481 = vpop.f32.mrb[0].mxu0
      %v482 = vadd.f32 %v213, %v481
      %v483 = vpop.f32.mrb[0].mxu0
      %484 = vmatprep.mubr.bf16.mxu0 0
      %485 = vmatmul.mubr.bf16.gmra.mrb[0].mxu0 %v336
      %v486 = vpop.f32.mrb[0].mxu0
      %v487 = vadd.f32 %v213, %v486
      %v488 = vpop.f32.mrb[0].mxu0
      %v489 = vpop.f32.mrb[0].mxu0
      %v490 = vadd.f32 %v213, %v489
      %v491 = vpop.f32.mrb[0].mxu0
      %492 = vmatprep.mubr.bf16.mxu0 0
      %493 = vmatmul.mubr.bf16.gmra.mrb[0].mxu0 %v339
      %v494 = vpop.f32.mrb[0].mxu0
      %v495 = vadd.f32 %v213, %v494
      %v496 = vpop.f32.mrb[0].mxu0
      %v497 = vpop.f32.mrb[0].mxu0
      %v498 = vadd.f32 %v213, %v497
      %v499 = vpop.f32.mrb[0].mxu0
      %500 = vmatprep.mubr.bf16.mxu0 0
      %501 = vmatmul.mubr.bf16.gmra.mrb[0].mxu0 %v342
      %v502 = vpop.f32.mrb[0].mxu0
      %v503 = vadd.f32 %v213, %v502
      %v504 = vpop.f32.mrb[0].mxu0
      %v505 = vpop.f32.mrb[0].mxu0
      %v506 = vadd.f32 %v213, %v505
      %v507 = vpop.f32.mrb[0].mxu0
      %508 = vdwg.mxu0
      %v509 = vmax.f32 %v383, 0.0
      %v510 = vmax.f32 %v386, 0.0
      %v511 = vmax.f32 %v391, 0.0
      %v512 = vmax.f32 %v394, 0.0
      %v513 = vmax.f32 %v399, 0.0
      %v514 = vmax.f32 %v402, 0.0
      %v515 = vmax.f32 %v407, 0.0
      %v516 = vmax.f32 %v410, 0.0
      %v517 = vmax.f32 %v415, 0.0
      %v518 = vmax.f32 %v418, 0.0
      %v519 = vmax.f32 %v423, 0.0
      %v520 = vmax.f32 %v426, 0.0
      %v521 = vmax.f32 %v431, 0.0
      %v522 = vmax.f32 %v434, 0.0
      %v523 = vmax.f32 %v439, 0.0
      %v524 = vmax.f32 %v442, 0.0
      %v525 = vmax.f32 %v447, 0.0
      %v526 = vmax.f32 %v450, 0.0
      %v527 = vmax.f32 %v455, 0.0
      %v528 = vmax.f32 %v458, 0.0
      %v529 = vmax.f32 %v463, 0.0
      %v530 = vmax.f32 %v466, 0.0
      %v531 = vmax.f32 %v471, 0.0
      %v532 = vmax.f32 %v474, 0.0
      %v533 = vmax.f32 %v479, 0.0
      %v534 = vmax.f32 %v482, 0.0
      %v535 = vmax.f32 %v487, 0.0
      %v536 = vmax.f32 %v490, 0.0
      %v537 = vmax.f32 %v495, 0.0
      %v538 = vmax.f32 %v498, 0.0
      %v539 = vmax.f32 %v503, 0.0
      %v540 = vmax.f32 %v506, 0.0
      %v541 = vpack.c.bf16 %v510, %v509
      %v542 = vpack.c.bf16 %v512, %v511
      %v543 = vpack.c.bf16 %v514, %v513
      %v544 = vpack.c.bf16 %v516, %v515
      %v545 = vpack.c.bf16 %v518, %v517
      %v546 = vpack.c.bf16 %v520, %v519
      %v547 = vpack.c.bf16 %v522, %v521
      %v548 = vpack.c.bf16 %v524, %v523
      %v549 = vpack.c.bf16 %v526, %v525
      %v550 = vpack.c.bf16 %v528, %v527
      %v551 = vpack.c.bf16 %v530, %v529
      %v552 = vpack.c.bf16 %v532, %v531
      %v553 = vpack.c.bf16 %v534, %v533
      %v554 = vpack.c.bf16 %v536, %v535
      %v555 = vpack.c.bf16 %v538, %v537
      %v556 = vpack.c.bf16 %v540, %v539
      %v573 = vunpack.c.l.b16 %v541
      %v574 = vunpack.c.h.b16 %v541
      %v575 = vunpack.c.l.b16 %v542
      %v576 = vunpack.c.h.b16 %v542
      %v577 = vunpack.c.l.b16 %v543
      %v578 = vunpack.c.h.b16 %v543
      %v579 = vunpack.c.l.b16 %v544
      %v580 = vunpack.c.h.b16 %v544
      %v581 = vunpack.c.l.b16 %v545
      %v582 = vunpack.c.h.b16 %v545
      %v583 = vunpack.c.l.b16 %v546
      %v584 = vunpack.c.h.b16 %v546
      %v585 = vunpack.c.l.b16 %v547
      %v586 = vunpack.c.h.b16 %v547
      %v587 = vunpack.c.l.b16 %v548
      %v588 = vunpack.c.h.b16 %v548
      %v589 = vunpack.c.l.b16 %v549
      %v590 = vunpack.c.h.b16 %v549
      %v591 = vunpack.c.l.b16 %v550
      %v592 = vunpack.c.h.b16 %v550
      %v593 = vunpack.c.l.b16 %v551
      %v594 = vunpack.c.h.b16 %v551
      %v595 = vunpack.c.l.b16 %v552
      %v596 = vunpack.c.h.b16 %v552
      %v597 = vunpack.c.l.b16 %v553
      %v598 = vunpack.c.h.b16 %v553
      %v599 = vunpack.c.l.b16 %v554
      %v600 = vunpack.c.h.b16 %v554
      %v601 = vunpack.c.l.b16 %v555
      %v602 = vunpack.c.h.b16 %v555
      %v603 = vunpack.c.l.b16 %v556
      %v604 = vunpack.c.h.b16 %v556
      %v605 = vpack.c.b16 %v573, %v573
      %v606 = vpack.c.b16 %v574, %v574
      %v607 = vpack.c.b16 %v575, %v575
      %v608 = vpack.c.b16 %v576, %v576
      %v609 = vpack.c.b16 %v577, %v577
      %v610 = vpack.c.b16 %v578, %v578
      %v611 = vpack.c.b16 %v579, %v579
      %v612 = vpack.c.b16 %v580, %v580
      %v613 = vpack.c.b16 %v581, %v581
      %v614 = vpack.c.b16 %v582, %v582
      %v615 = vpack.c.b16 %v583, %v583
      %v616 = vpack.c.b16 %v584, %v584
      %v617 = vpack.c.b16 %v585, %v585
      %v618 = vpack.c.b16 %v586, %v586
      %v619 = vpack.c.b16 %v587, %v587
      %v620 = vpack.c.b16 %v588, %v588
      %v621 = vpack.c.b16 %v589, %v589
      %v622 = vpack.c.b16 %v590, %v590
      %v623 = vpack.c.b16 %v591, %v591
      %v624 = vpack.c.b16 %v592, %v592
      %v625 = vpack.c.b16 %v593, %v593
      %v626 = vpack.c.b16 %v594, %v594
      %v627 = vpack.c.b16 %v595, %v595
      %v628 = vpack.c.b16 %v596, %v596
      %v629 = vpack.c.b16 %v597, %v597
      %v630 = vpack.c.b16 %v598, %v598
      %v631 = vpack.c.b16 %v599, %v599
      %v632 = vpack.c.b16 %v600, %v600
      %v633 = vpack.c.b16 %v601, %v601
      %v634 = vpack.c.b16 %v602, %v602
      %v635 = vpack.c.b16 %v603, %v603
      %v636 = vpack.c.b16 %v604, %v604
      %vm669 = vcmask 27648
      %670 = vst.msk [vmem:[%s172] sm:$0xf] %vm669, %v605
      %671 = vst.msk [vmem:[%s172 + $0x4] sm:$0xf] %vm669, %v606
      %672 = vst.msk [vmem:[%s172 + $0x8] sm:$0xf] %vm669, %v607
      %673 = vst.msk [vmem:[%s172 + $0xc] sm:$0xf] %vm669, %v608
      %674 = vst.msk [vmem:[%s172 + $0x10] sm:$0xf] %vm669, %v609
      %675 = vst.msk [vmem:[%s172 + $0x14] sm:$0xf] %vm669, %v610
      %676 = vst.msk [vmem:[%s172 + $0x18] sm:$0xf] %vm669, %v611
      %677 = vst.msk [vmem:[%s172 + $0x1c] sm:$0xf] %vm669, %v612
      %678 = vst.msk [vmem:[%s172 + $0x20] sm:$0xf] %vm669, %v613
      %679 = vst.msk [vmem:[%s172 + $0x24] sm:$0xf] %vm669, %v614
      %680 = vst.msk [vmem:[%s172 + $0x28] sm:$0xf] %vm669, %v615
      %681 = vst.msk [vmem:[%s172 + $0x2c] sm:$0xf] %vm669, %v616
      %682 = vst.msk [vmem:[%s172 + $0x30] sm:$0xf] %vm669, %v617
      %683 = vst.msk [vmem:[%s172 + $0x34] sm:$0xf] %vm669, %v618
      %684 = vst.msk [vmem:[%s172 + $0x38] sm:$0xf] %vm669, %v619
      %685 = vst.msk [vmem:[%s172 + $0x3c] sm:$0xf] %vm669, %v620
      %686 = vst.msk [vmem:[%s172 + $0x40] sm:$0xf] %vm669, %v621
      %687 = vst.msk [vmem:[%s172 + $0x44] sm:$0xf] %vm669, %v622
      %688 = vst.msk [vmem:[%s172 + $0x48] sm:$0xf] %vm669, %v623
      %689 = vst.msk [vmem:[%s172 + $0x4c] sm:$0xf] %vm669, %v624
      %690 = vst.msk [vmem:[%s172 + $0x50] sm:$0xf] %vm669, %v625
      %691 = vst.msk [vmem:[%s172 + $0x54] sm:$0xf] %vm669, %v626
      %692 = vst.msk [vmem:[%s172 + $0x58] sm:$0xf] %vm669, %v627
      %693 = vst.msk [vmem:[%s172 + $0x5c] sm:$0xf] %vm669, %v628
      %694 = vst.msk [vmem:[%s172 + $0x60] sm:$0xf] %vm669, %v629
      %695 = vst.msk [vmem:[%s172 + $0x64] sm:$0xf] %vm669, %v630
      %696 = vst.msk [vmem:[%s172 + $0x68] sm:$0xf] %vm669, %v631
      %697 = vst.msk [vmem:[%s172 + $0x6c] sm:$0xf] %vm669, %v632
      %698 = vst.msk [vmem:[%s172 + $0x70] sm:$0xf] %vm669, %v633
      %699 = vst.msk [vmem:[%s172 + $0x74] sm:$0xf] %vm669, %v634
      %700 = vst.msk [vmem:[%s172 + $0x78] sm:$0xf] %vm669, %v635
      %701 = vst.msk [vmem:[%s172 + $0x7c] sm:$0xf] %vm669, %v636
      %s702 = smul.u32 32, %s14
      %p703 = scmp.lt.s32.totalorder %s702, 63
      %s704 = scalar_select %p703, %s702, 63
      %s705 = smul.addr %s704, 4
      %s706 = scalar_lea.vmem %s3, %s705
      // Predicated region
      $region33: #{bottleneck_forward.3} parent=31 // pred_check
        %p707 = pneg %p100
      $region34: #{bottleneck_forward.3} parent=31 // pred_check_branch
        %709 = sbr.rel (%p707) target = $region36
      $region35: #{bottleneck_forward.3} parent=31 // pred_region
        %s710 = smul.u32 32, %s14
      $region36: #{bottleneck_forward.3} parent=31 // pred_fallthru
        _
    $region32: #{bottleneck_forward.3} parent=5 // pred_fallthru
      _
    %p711 = scmp.le.s32.totalorder 2, %s9
    // Predicated region
    $region37: #{bottleneck_forward.3} parent=5 // pred_check
      %p712 = pneg %p711
    $region38: #{bottleneck_forward.3} parent=5 // pred_check_branch
      %714 = sbr.rel (%p712) target = $region40
    $region39: #{bottleneck_forward.3} parent=5 // pred_region
      %s715 = ssub.s32 %s9, 2
      // Predicated region
      $region41: #{bottleneck_forward.3} parent=39 // pred_check
        %p716 = pneg %p106
      $region42: #{bottleneck_forward.3} parent=39 // pred_check_branch
        %718 = sbr.rel (%p716) target = $region44
      $region43: #{bottleneck_forward.3} parent=39 // pred_region
        %s719 = smul.u32 32, %s15
        %p720 = scmp.lt.s32.totalorder %s719, 63
        %s721 = scalar_select %p720, %s719, 63
        %s722 = smul.addr %s721, 4
        %s723 = scalar_lea.vmem %s3, %s722
      $region44: #{bottleneck_forward.3} parent=39 // pred_fallthru
        _
    $region40: #{bottleneck_forward.3} parent=5 // pred_fallthru
      _
  $region6: #{bottleneck_forward.3} parent=0 // loop_footer
    %s13 = sadd.s32 1, %s9
  $region7: #{bottleneck_forward.3} parent=0 // loop_footer_branch
    %8 = sbr.rel target = $region3
  $region8: #{bottleneck_forward.3} parent=0 // loop_exit
    _

// kernel: bottleneck_forward.5
$region0: #{bottleneck_forward.5}
  #allocation0 [shape = 'u32[]', space=smem, size = 0x4, offset = 0x4, fixed_abs, tag = 'smem constant byte address 0x4 - core index']
  #allocation1 [shape = 'u32[144,128]{1,0:T(1,128)}', space=vmem, size = 0x12000, scoped, tag = 'internal scratch']
  %s0 = inlined_call_operand.vmem [shape: bf16[128,4], index: 0, kind: input, shape index: {}]
  %s1 = inlined_call_operand.vmem [shape: bf16[4,16], index: 1, kind: input, shape index: {}]
  %s2 = inlined_call_operand.vmem [shape: f32[1,16], index: 2, kind: input, shape index: {}]
  %s3 = inlined_call_operand.vmem [shape: bf16[128,4], index: 3, kind: input, shape index: {}]
  %s4 = inlined_call_operand.vmem [shape: bf16[4,16], index: 4, kind: input, shape index: {}]
  %s5 = inlined_call_operand.vmem [shape: f32[1,16], index: 5, kind: input, shape index: {}]
  %s6 = inlined_call_operand.hbm [shape: f32[128,16], index: 6, kind: output, shape index: {}]
  %s7 = sld [smem:[#allocation0]]
  $region57: #{bottleneck_forward.5} parent=0
    _
  %s9 = ssub.s32 1, %s7
  %s10 = scalar_select 0, %s9, %s7
  $region1: #{bottleneck_forward.5} parent=0
    #allocation2 [shape = 'u8[65536]{0}', space=vmem, size = 0x10000, scoped, tag = 'output window, operand 0']
    #allocation3 [shape = 's32[2]{0}', space=sflag, size = 0x8, scoped, tag = 'scoped memory for bottleneck_forward.5']
    %11 = vsyncpa [#allocation3], 0
    %s12 = scalar_lea.sflag [#allocation3], 1
    %13 = vsyncpa %s12, 0
    loop: start=0, step=1, limit=4
    $region2: #{bottleneck_forward.5} parent=1 // loop_pre_header
      _
    $region3: #{bottleneck_forward.5} parent=1 // loop_header
      %s15 = sphi 0, %s19
      %p16 = scmp.ge.s32.totalorder %s15, 4
      %s25 = sphi 0, %s27
      %s28 = sphi 0, %s25
      %s29 = sphi 0, %s28
      %s45 = sphi 0, %s29
      %s49 = sphi 0, %s49
      %s51 = sphi 0, %s49
      %s52 = sphi 0, %s51
      %s66 = sphi 0, %s52
      %s70 = sphi 0, %s70
      %s72 = sphi 0, %s70
      %s73 = sphi 0, %s72
      %s87 = sphi 0, %s73
      %s93 = sphi 0, %s95
      %s96 = sphi 0, %s93
      %s97 = sphi 0, %s96
      %s113 = sphi 0, %s97
      %s117 = sphi 0, %s117
      %s119 = sphi 0, %s117
      %s120 = sphi 0, %s119
      %s134 = sphi 0, %s120
      %s138 = sphi 0, %s138
      %s140 = sphi 0, %s138
      %s141 = sphi 0, %s140
      %s155 = sphi 0, %s141
      %s161 = sphi 0, %s163
      %s164 = sphi 0, %s161
      %s165 = sphi 0, %s164
      %s181 = sphi 0, %s165
    $region4: #{bottleneck_forward.5} parent=1 // loop_header_branch
      %18 = sbr.rel (%p16) target = $region8
    $region5: #{bottleneck_forward.5} parent=1 // loop_body
      %s20 = ssub.s32 %s15, 1
      %s21 = ssub.s32 %s15, 2
      %s22 = sadd.s32 %s15, 1
      %s23 = ssub.s32 %s15, %s22
      %p24 = scmp.eq.s32.totalorder %s23, 0
      %s26 = sadd.s32 %s25, 1
      %s27 = scalar_select %p24, %s25, %s26
      %p30 = pneg %p24
      %p31 = scmp.eq.s32.totalorder %s15, 1
      %p32 = por %p30, %p31
      %p33 = scmp.ne.s32.totalorder %s25, %s28
      %p34 = scmp.eq.s32.totalorder %s15, 0
      %p35 = por %p33, %p34
      %p36 = scmp.ne.s32.totalorder %s25, %s28
      %p37 = scmp.eq.s32.totalorder %s20, 1
      %p38 = por %p36, %p37
      %p39 = scmp.ne.s32.totalorder %s28, %s29
      %p40 = scmp.eq.s32.totalorder %s20, 0
      %p41 = por %p39, %p40
      %p42 = scmp.ne.s32.totalorder %s28, %s29
      %p43 = scmp.eq.s32.totalorder %s21, 1
      %p44 = por %p42, %p43
      %p46 = scmp.ne.s32.totalorder %s29, %s45
      %p47 = scmp.eq.s32.totalorder %s21, 0
      %p48 = por %p46, %p47
      %s50 = sadd.s32 %s49, 1
      %p53 = scmp.eq.s32.totalorder %s15, 1
      %p54 = scmp.ne.s32.totalorder %s49, %s51
      %p55 = scmp.eq.s32.totalorder %s15, 0
      %p56 = por %p54, %p55
      %p57 = scmp.ne.s32.totalorder %s49, %s51
      %p58 = scmp.eq.s32.totalorder %s20, 1
      %p59 = por %p57, %p58
      %p60 = scmp.ne.s32.totalorder %s51, %s52
      %p61 = scmp.eq.s32.totalorder %s20, 0
      %p62 = por %p60, %p61
      %p63 = scmp.ne.s32.totalorder %s51, %s52
      %p64 = scmp.eq.s32.totalorder %s21, 1
      %p65 = por %p63, %p64
      %p67 = scmp.ne.s32.totalorder %s52, %s66
      %p68 = scmp.eq.s32.totalorder %s21, 0
      %p69 = por %p67, %p68
      %s71 = sadd.s32 %s70, 1
      %p74 = scmp.eq.s32.totalorder %s15, 1
      %p75 = scmp.ne.s32.totalorder %s70, %s72
      %p76 = scmp.eq.s32.totalorder %s15, 0
      %p77 = por %p75, %p76
      %p78 = scmp.ne.s32.totalorder %s70, %s72
      %p79 = scmp.eq.s32.totalorder %s20, 1
      %p80 = por %p78, %p79
      %p81 = scmp.ne.s32.totalorder %s72, %s73
      %p82 = scmp.eq.s32.totalorder %s20, 0
      %p83 = por %p81, %p82
      %p84 = scmp.ne.s32.totalorder %s72, %s73
      %p85 = scmp.eq.s32.totalorder %s21, 1
      %p86 = por %p84, %p85
      %p88 = scmp.ne.s32.totalorder %s73, %s87
      %p89 = scmp.eq.s32.totalorder %s21, 0
      %p90 = por %p88, %p89
      %s91 = ssub.s32 %s15, %s22
      %p92 = scmp.eq.s32.totalorder %s91, 0
      %s94 = sadd.s32 %s93, 1
      %s95 = scalar_select %p92, %s93, %s94
      %p98 = pneg %p92
      %p99 = scmp.eq.s32.totalorder %s15, 1
      %p100 = por %p98, %p99
      %p101 = scmp.ne.s32.totalorder %s93, %s96
      %p102 = scmp.eq.s32.totalorder %s15, 0
      %p103 = por %p101, %p102
      %p104 = scmp.ne.s32.totalorder %s93, %s96
      %p105 = scmp.eq.s32.totalorder %s20, 1
      %p106 = por %p104, %p105
      %p107 = scmp.ne.s32.totalorder %s96, %s97
      %p108 = scmp.eq.s32.totalorder %s20, 0
      %p109 = por %p107, %p108
      %p110 = scmp.ne.s32.totalorder %s96, %s97
      %p111 = scmp.eq.s32.totalorder %s21, 1
      %p112 = por %p110, %p111
      %p114 = scmp.ne.s32.totalorder %s97, %s113
      %p115 = scmp.eq.s32.totalorder %s21, 0
      %p116 = por %p114, %p115
      %s118 = sadd.s32 %s117, 1
      %p121 = scmp.eq.s32.totalorder %s15, 1
      %p122 = scmp.ne.s32.totalorder %s117, %s119
      %p123 = scmp.eq.s32.totalorder %s15, 0
      %p124 = por %p122, %p123
      %p125 = scmp.ne.s32.totalorder %s117, %s119
      %p126 = scmp.eq.s32.totalorder %s20, 1
      %p127 = por %p125, %p126
      %p128 = scmp.ne.s32.totalorder %s119, %s120
      %p129 = scmp.eq.s32.totalorder %s20, 0
      %p130 = por %p128, %p129
      %p131 = scmp.ne.s32.totalorder %s119, %s120
      %p132 = scmp.eq.s32.totalorder %s21, 1
      %p133 = por %p131, %p132
      %p135 = scmp.ne.s32.totalorder %s120, %s134
      %p136 = scmp.eq.s32.totalorder %s21, 0
      %p137 = por %p135, %p136
      %s139 = sadd.s32 %s138, 1
      %p142 = scmp.eq.s32.totalorder %s15, 1
      %p143 = scmp.ne.s32.totalorder %s138, %s140
      %p144 = scmp.eq.s32.totalorder %s15, 0
      %p145 = por %p143, %p144
      %p146 = scmp.ne.s32.totalorder %s138, %s140
      %p147 = scmp.eq.s32.totalorder %s20, 1
      %p148 = por %p146, %p147
      %p149 = scmp.ne.s32.totalorder %s140, %s141
      %p150 = scmp.eq.s32.totalorder %s20, 0
      %p151 = por %p149, %p150
      %p152 = scmp.ne.s32.totalorder %s140, %s141
      %p153 = scmp.eq.s32.totalorder %s21, 1
      %p154 = por %p152, %p153
      %p156 = scmp.ne.s32.totalorder %s141, %s155
      %p157 = scmp.eq.s32.totalorder %s21, 0
      %p158 = por %p156, %p157
      %s159 = ssub.s32 %s15, %s22
      %p160 = scmp.eq.s32.totalorder %s159, 0
      %s162 = sadd.s32 %s161, 1
      %s163 = scalar_select %p160, %s161, %s162
      %p166 = pneg %p160
      %p167 = scmp.eq.s32.totalorder %s15, 1
      %p168 = por %p166, %p167
      %p169 = scmp.ne.s32.totalorder %s161, %s164
      %p170 = scmp.eq.s32.totalorder %s15, 0
      %p171 = por %p169, %p170
      %p172 = scmp.ne.s32.totalorder %s161, %s164
      %p173 = scmp.eq.s32.totalorder %s20, 1
      %p174 = por %p172, %p173
      %p175 = scmp.ne.s32.totalorder %s164, %s165
      %p176 = scmp.eq.s32.totalorder %s20, 0
      %p177 = por %p175, %p176
      %p178 = scmp.ne.s32.totalorder %s164, %s165
      %p179 = scmp.eq.s32.totalorder %s21, 1
      %p180 = por %p178, %p179
      %p182 = scmp.ne.s32.totalorder %s165, %s181
      %p183 = scmp.eq.s32.totalorder %s21, 0
      %p184 = por %p182, %p183
      %p185 = scmp.le.s32.totalorder 1, %s15
      %p186 = scmp.lt.s32.totalorder %s15, 3
      %p187 = pnand %p185, %p186
      %p188 = pneg %p187
      // Predicated region
      $region9: #{bottleneck_forward.5} parent=5 // pred_check
        _
      $region10: #{bottleneck_forward.5} parent=5 // pred_check_branch
        %190 = sbr.rel (%p187) target = $region12
      $region11: #{bottleneck_forward.5} parent=5 // pred_region
        %s191 = ssub.s32 %s15, 1
        // Predicated region
        $region13: #{bottleneck_forward.5} parent=11 // pred_check
          %p192 = pneg %p62
        $region14: #{bottleneck_forward.5} parent=11 // pred_check_branch
          %194 = sbr.rel (%p192) target = $region16
        $region15: #{bottleneck_forward.5} parent=11 // pred_region
          _
        $region16: #{bottleneck_forward.5} parent=11 // pred_fallthru
          _
        // Predicated region
        $region17: #{bottleneck_forward.5} parent=11 // pred_check
          %p195 = pneg %p83
        $region18: #{bottleneck_forward.5} parent=11 // pred_check_branch
          %197 = sbr.rel (%p195) target = $region20
        $region19: #{bottleneck_forward.5} parent=11 // pred_region
          _
        $region20: #{bottleneck_forward.5} parent=11 // pred_fallthru
          _
        // Predicated region
        $region21: #{bottleneck_forward.5} parent=11 // pred_check
          %p198 = pneg %p130
        $region22: #{bottleneck_forward.5} parent=11 // pred_check_branch
          %200 = sbr.rel (%p198) target = $region24
        $region23: #{bottleneck_forward.5} parent=11 // pred_region
          _
        $region24: #{bottleneck_forward.5} parent=11 // pred_fallthru
          _
        // Predicated region
        $region25: #{bottleneck_forward.5} parent=11 // pred_check
          %p201 = pneg %p151
        $region26: #{bottleneck_forward.5} parent=11 // pred_check_branch
          %203 = sbr.rel (%p201) target = $region28
        $region27: #{bottleneck_forward.5} parent=11 // pred_region
          _
        $region28: #{bottleneck_forward.5} parent=11 // pred_fallthru
          _
      $region12: #{bottleneck_forward.5} parent=5 // pred_fallthru
        _
      %p204 = scmp.lt.s32.totalorder %s15, 2
      // Predicated region
      $region29: #{bottleneck_forward.5} parent=5 // pred_check
        %p205 = pneg %p204
      $region30: #{bottleneck_forward.5} parent=5 // pred_check_branch
        %207 = sbr.rel (%p205) target = $region32
      $region31: #{bottleneck_forward.5} parent=5 // pred_region
        // Predicated region
        $region33: #{bottleneck_forward.5} parent=31 // pred_check
          %p208 = pneg %p35
        $region34: #{bottleneck_forward.5} parent=31 // pred_check_branch
          %210 = sbr.rel (%p208) target = $region36
        $region35: #{bottleneck_forward.5} parent=31 // pred_region
          %s211 = smul.u32 8, %s15
          %p212 = scmp.lt.s32.totalorder %s211, 15
          %s213 = scalar_select %p212, %s211, 15
          %s214 = smul.addr %s213, 4
          %s215 = scalar_lea.vmem %s0, %s214
          %s216 = smul.u32 8, %s15
        $region36: #{bottleneck_forward.5} parent=31 // pred_fallthru
          _
        // Predicated region
        $region37: #{bottleneck_forward.5} parent=31 // pred_check
          %p217 = pneg %p103
        $region38: #{bottleneck_forward.5} parent=31 // pred_check_branch
          %219 = sbr.rel (%p217) target = $region40
        $region39: #{bottleneck_forward.5} parent=31 // pred_region
          %s220 = smul.u32 8, %s15
          %p221 = scmp.lt.s32.totalorder %s220, 15
          %s222 = scalar_select %p221, %s220, 15
          %s223 = smul.addr %s222, 4
          %s224 = scalar_lea.vmem %s3, %s223
          %s225 = smul.u32 8, %s15
        $region40: #{bottleneck_forward.5} parent=31 // pred_fallthru
          _
      $region32: #{bottleneck_forward.5} parent=5 // pred_fallthru
        _
      %p226 = scmp.le.s32.totalorder 1, %s15
      %p227 = scmp.lt.s32.totalorder %s15, 3
      %p228 = pnand %p226, %p227
      %p229 = pneg %p228
      // Predicated region
      $region41: #{bottleneck_forward.5} parent=5 // pred_check
        _
      $region42: #{bottleneck_forward.5} parent=5 // pred_check_branch
        %231 = sbr.rel (%p228) target = $region44
      $region43: #{bottleneck_forward.5} parent=5 // pred_region
        %s232 = ssub.s32 %s15, 1
        %s233 = smul.u32 8, %s20
        %p234 = scmp.lt.s32.totalorder %s233, 15
        %s235 = scalar_select %p234, %s233, 15
        %s236 = smul.addr %s235, 4
        %s237 = scalar_lea.vmem %s0, %s236
        %p238 = pneg %p41
        %p239 = pneg %p38
        %p240 = pneg %p62
        %p241 = pneg %p59
        %p242 = pneg %p83
        %p243 = pneg %p80
        %s244 = smul.u32 8, %s20
        %p245 = scmp.lt.s32.totalorder %s244, 15
        %s246 = scalar_select %p245, %s244, 15
        %s247 = smul.addr %s246, 4
        %s248 = scalar_lea.vmem %s3, %s247
        %p249 = pneg %p109
        %p250 = pneg %p106
        %p251 = pneg %p130
        %p252 = pneg %p127
        %p253 = pneg %p151
        %p254 = pneg %p148
        %p255 = pneg %p177
        %p256 = pneg %p174
        %s257 = sand.u32 %s164, 1
        %s258 = scalar_lea.sflag [#allocation3], %s257
        %s259 = sand.u32 %s164, 1
        %s260 = smul.addr %s259, 64
        %s261 = scalar_lea.vmem [#allocation2], %s260
        %s262 = smul.u32 8, %s20
        %p263 = scmp.lt.s32.totalorder %s262, 15
        %s264 = scalar_select %p263, %s262, 15
        %s265 = smul.addr %s264, 4
        %s266 = scalar_lea.vmem %s0, %s265
        %s267 = smul.u32 8, %s20
        %s268 = smul.u32 8, %s20
        %p269 = scmp.lt.s32.totalorder %s268, 15
        %s270 = scalar_select %p269, %s268, 15
        %s271 = smul.addr %s270, 4
        %s272 = scalar_lea.vmem %s3, %s271
        %s273 = smul.u32 8, %s20
        %s274 = smul.u32 8, %s20
        %v276 = vld [vmem:[%s266] sm:$0xf]
        %v277 = vld [vmem:[%s266 + $0x4] sm:$0xf]
        %v278 = vld [vmem:[%s266 + $0x8] sm:$0xf]
        %v279 = vld [vmem:[%s266 + $0xc] sm:$0xf]
        %v280 = vld [vmem:[%s266 + $0x10] sm:$0xf]
        %v281 = vld [vmem:[%s266 + $0x14] sm:$0xf]
        %v282 = vld [vmem:[%s266 + $0x18] sm:$0xf]
        %v283 = vld [vmem:[%s266 + $0x1c] sm:$0xf]
        %v284 = vld [vmem:[%s1] sm:$0x3]
        %v285 = vld [vmem:[%s2] sm:$0x1]
        %v287 = vlaneseq
        %v288 = vshrl.u32 %v287, 7
        %v289 = vsub.s32 0, %v288
        %v290 = vrot.slane %v285, %v289
        %v300 = vunpack.c.l.b16 %v276
        %v301 = vunpack.c.l.b16 %v277
        %v302 = vunpack.c.l.b16 %v278
        %v303 = vunpack.c.l.b16 %v279
        %v304 = vunpack.c.l.b16 %v280
        %v305 = vunpack.c.l.b16 %v281
        %v306 = vunpack.c.l.b16 %v282
        %v307 = vunpack.c.l.b16 %v283
        %v308 = vpack.c.b16 %v301, %v300
        %v309 = vpack.c.b16 %v303, %v302
        %v310 = vpack.c.b16 %v305, %v304
        %v311 = vpack.c.b16 %v307, %v306
        %vm312 = vcmask 31744
        %v314 = vsel %vm312, %v308, 0
        %v317 = vsel %vm312, %v309, 0
        %v320 = vsel %vm312, %v310, 0
        %v323 = vsel %vm312, %v311, 0
        %vm325 = vcmask 1041408
        %v327 = vsel %vm325, %v284, 0
        %329 = vmatprep.subr.bf16.mxu0 0
        %330 = vmatpush1.bf16.msra.mxu0 %v327
        %331 = vmatprep.subr.bf16.mxu0 0
        %332 = vmatpush1.bf16.msra.mxu0 0
        %333 = vmatprep.subr.bf16.mxu0 0
        %334 = vmatpush1.bf16.msra.mxu0 0
        %335 = vmatprep.subr.bf16.mxu0 0
        %336 = vmatpush1.bf16.msra.mxu0 0
        %337 = vmatprep.subr.bf16.mxu0 0
        %338 = vmatpush1.bf16.msra.mxu0 0
        %339 = vmatprep.subr.bf16.mxu0 0
        %340 = vmatpush1.bf16.msra.mxu0 0
        %341 = vmatprep.subr.bf16.mxu0 0
        %342 = vmatpush1.bf16.msra.mxu0 0
        %343 = vmatprep.subr.bf16.mxu0 0
        %344 = vmatpush1.bf16.msra.mxu0 0
        %345 = vmatprep.subr.bf16.mxu0 0
        %346 = vmatpush1.bf16.msra.mxu0 0
        %347 = vmatprep.subr.bf16.mxu0 0
        %348 = vmatpush1.bf16.msra.mxu0 0
        %349 = vmatprep.subr.bf16.mxu0 0
        %350 = vmatpush1.bf16.msra.mxu0 0
        %351 = vmatprep.subr.bf16.mxu0 0
        %352 = vmatpush1.bf16.msra.mxu0 0
        %353 = vmatprep.subr.bf16.mxu0 0
        %354 = vmatpush1.bf16.msra.mxu0 0
        %355 = vmatprep.subr.bf16.mxu0 0
        %356 = vmatpush1.bf16.msra.mxu0 0
        %357 = vmatprep.subr.bf16.mxu0 0
        %358 = vmatpush1.bf16.msra.mxu0 0
        %359 = vmatprep.subr.bf16.mxu0 0
        %360 = vmatpush1.bf16.msra.mxu0 0
        %361 = vmatprep.mubr.bf16.mxu0 0
        %362 = vmatmul.mubr.bf16.gmra.mrb[0].mxu0 %v314
        %v363 = vpop.f32.mrb[0].mxu0
        %v364 = vadd.f32 %v290, %v363
        %v365 = vpop.f32.mrb[0].mxu0
        %v366 = vpop.f32.mrb[0].mxu0
        %v367 = vadd.f32 %v290, %v366
        %v368 = vpop.f32.mrb[0].mxu0
        %369 = vmatprep.mubr.bf16.mxu0 0
        %370 = vmatmul.mubr.bf16.gmra.mrb[0].mxu0 %v317
        %v371 = vpop.f32.mrb[0].mxu0
        %v372 = vadd.f32 %v290, %v371
        %v373 = vpop.f32.mrb[0].mxu0
        %v374 = vpop.f32.mrb[0].mxu0
        %v375 = vadd.f32 %v290, %v374
        %v376 = vpop.f32.mrb[0].mxu0
        %377 = vmatprep.mubr.bf16.mxu0 0
        %378 = vmatmul.mubr.bf16.gmra.mrb[0].mxu0 %v320
        %v379 = vpop.f32.mrb[0].mxu0
        %v380 = vadd.f32 %v290, %v379
        %v381 = vpop.f32.mrb[0].mxu0
        %v382 = vpop.f32.mrb[0].mxu0
        %v383 = vadd.f32 %v290, %v382
        %v384 = vpop.f32.mrb[0].mxu0
        %385 = vmatprep.mubr.bf16.mxu0 0
        %386 = vmatmul.mubr.bf16.gmra.mrb[0].mxu0 %v323
        %v387 = vpop.f32.mrb[0].mxu0
        %v388 = vadd.f32 %v290, %v387
        %v389 = vpop.f32.mrb[0].mxu0
        %v390 = vpop.f32.mrb[0].mxu0
        %v391 = vadd.f32 %v290, %v390
        %v392 = vpop.f32.mrb[0].mxu0
        %393 = vdwg.mxu0
        %v394 = vld [vmem:[%s272] sm:$0xf]
        %v395 = vld [vmem:[%s272 + $0x4] sm:$0xf]
        %v396 = vld [vmem:[%s272 + $0x8] sm:$0xf]
        %v397 = vld [vmem:[%s272 + $0xc] sm:$0xf]
        %v398 = vld [vmem:[%s272 + $0x10] sm:$0xf]
        %v399 = vld [vmem:[%s272 + $0x14] sm:$0xf]
        %v400 = vld [vmem:[%s272 + $0x18] sm:$0xf]
        %v401 = vld [vmem:[%s272 + $0x1c] sm:$0xf]
        %v402 = vld [vmem:[%s4] sm:$0x3]
        %v403 = vld [vmem:[%s5] sm:$0x1]
        %v405 = vlaneseq
        %v406 = vshrl.u32 %v405, 7
        %v407 = vsub.s32 0, %v406
        %v408 = vrot.slane %v403, %v407
        %v418 = vunpack.c.l.b16 %v394
        %v419 = vunpack.c.l.b16 %v395
        %v420 = vunpack.c.l.b16 %v396
        %v421 = vunpack.c.l.b16 %v397
        %v422 = vunpack.c.l.b16 %v398
        %v423 = vunpack.c.l.b16 %v399
        %v424 = vunpack.c.l.b16 %v400
        %v425 = vunpack.c.l.b16 %v401
        %v426 = vpack.c.b16 %v419, %v418
        %v427 = vpack.c.b16 %v421, %v420
        %v428 = vpack.c.b16 %v423, %v422
        %v429 = vpack.c.b16 %v425, %v424
        %v431 = vsel %vm312, %v426, 0
        %v434 = vsel %vm312, %v427, 0
        %v437 = vsel %vm312, %v428, 0
        %v440 = vsel %vm312, %v429, 0
        %v443 = vsel %vm325, %v402, 0
        %445 = vmatprep.subr.bf16.mxu0 0
        %446 = vmatpush1.bf16.msra.mxu0 %v443
        %447 = vmatprep.subr.bf16.mxu0 0
        %448 = vmatpush1.bf16.msra.mxu0 0
        %449 = vmatprep.subr.bf16.mxu0 0
        %450 = vmatpush1.bf16.msra.mxu0 0
        %451 = vmatprep.subr.bf16.mxu0 0
        %452 = vmatpush1.bf16.msra.mxu0 0
        %453 = vmatprep.subr.bf16.mxu0 0
        %454 = vmatpush1.bf16.msra.mxu0 0
        %455 = vmatprep.subr.bf16.mxu0 0
        %456 = vmatpush1.bf16.msra.mxu0 0
        %457 = vmatprep.subr.bf16.mxu0 0
        %458 = vmatpush1.bf16.msra.mxu0 0
        %459 = vmatprep.subr.bf16.mxu0 0
        %460 = vmatpush1.bf16.msra.mxu0 0
        %461 = vmatprep.subr.bf16.mxu0 0
        %462 = vmatpush1.bf16.msra.mxu0 0
        %463 = vmatprep.subr.bf16.mxu0 0
        %464 = vmatpush1.bf16.msra.mxu0 0
        %465 = vmatprep.subr.bf16.mxu0 0
        %466 = vmatpush1.bf16.msra.mxu0 0
        %467 = vmatprep.subr.bf16.mxu0 0
        %468 = vmatpush1.bf16.msra.mxu0 0
        %469 = vmatprep.subr.bf16.mxu0 0
        %470 = vmatpush1.bf16.msra.mxu0 0
        %471 = vmatprep.subr.bf16.mxu0 0
        %472 = vmatpush1.bf16.msra.mxu0 0
        %473 = vmatprep.subr.bf16.mxu0 0
        %474 = vmatpush1.bf16.msra.mxu0 0
        %475 = vmatprep.subr.bf16.mxu0 0
        %476 = vmatpush1.bf16.msra.mxu0 0
        %477 = vmatprep.mubr.bf16.mxu0 0
        %478 = vmatmul.mubr.bf16.gmra.mrb[0].mxu0 %v431
        %v479 = vpop.f32.mrb[0].mxu0
        %v480 = vadd.f32 %v408, %v479
        %v481 = vpop.f32.mrb[0].mxu0
        %v482 = vpop.f32.mrb[0].mxu0
        %v483 = vadd.f32 %v408, %v482
        %v484 = vpop.f32.mrb[0].mxu0
        %485 = vmatprep.mubr.bf16.mxu0 0
        %486 = vmatmul.mubr.bf16.gmra.mrb[0].mxu0 %v434
        %v487 = vpop.f32.mrb[0].mxu0
        %v488 = vadd.f32 %v408, %v487
        %v489 = vpop.f32.mrb[0].mxu0
        %v490 = vpop.f32.mrb[0].mxu0
        %v491 = vadd.f32 %v408, %v490
        %v492 = vpop.f32.mrb[0].mxu0
        %493 = vmatprep.mubr.bf16.mxu0 0
        %494 = vmatmul.mubr.bf16.gmra.mrb[0].mxu0 %v437
        %v495 = vpop.f32.mrb[0].mxu0
        %v496 = vadd.f32 %v408, %v495
        %v497 = vpop.f32.mrb[0].mxu0
        %v498 = vpop.f32.mrb[0].mxu0
        %v499 = vadd.f32 %v408, %v498
        %v500 = vpop.f32.mrb[0].mxu0
        %501 = vmatprep.mubr.bf16.mxu0 0
        %502 = vmatmul.mubr.bf16.gmra.mrb[0].mxu0 %v440
        %v503 = vpop.f32.mrb[0].mxu0
        %v504 = vadd.f32 %v408, %v503
        %v505 = vpop.f32.mrb[0].mxu0
        %v506 = vpop.f32.mrb[0].mxu0
        %v507 = vadd.f32 %v408, %v506
        %v508 = vpop.f32.mrb[0].mxu0
        %509 = vdwg.mxu0
        %v510 = vadd.f32 %v364, %v480
        %v511 = vadd.f32 %v367, %v483
        %v512 = vadd.f32 %v372, %v488
        %v513 = vadd.f32 %v375, %v491
        %v514 = vadd.f32 %v380, %v496
        %v515 = vadd.f32 %v383, %v499
        %v516 = vadd.f32 %v388, %v504
        %v517 = vadd.f32 %v391, %v507
        %v518 = vmax.f32 %v510, 0.0
        %v519 = vmax.f32 %v511, 0.0
        %v520 = vmax.f32 %v512, 0.0
        %v521 = vmax.f32 %v513, 0.0
        %v522 = vmax.f32 %v514, 0.0
        %v523 = vmax.f32 %v515, 0.0
        %v524 = vmax.f32 %v516, 0.0
        %v525 = vmax.f32 %v517, 0.0
        %vm526 = vcmask 130048
        %527 = vst.msk [vmem:[%s261] sm:$0xff] %vm526, %v518
        %528 = vst.msk [vmem:[%s261 + $0x8] sm:$0xff] %vm526, %v519
        %529 = vst.msk [vmem:[%s261 + $0x10] sm:$0xff] %vm526, %v520
        %530 = vst.msk [vmem:[%s261 + $0x18] sm:$0xff] %vm526, %v521
        %531 = vst.msk [vmem:[%s261 + $0x20] sm:$0xff] %vm526, %v522
        %532 = vst.msk [vmem:[%s261 + $0x28] sm:$0xff] %vm526, %v523
        %533 = vst.msk [vmem:[%s261 + $0x30] sm:$0xff] %vm526, %v524
        %534 = vst.msk [vmem:[%s261 + $0x38] sm:$0xff] %vm526, %v525
        %s535 = sand.u32 %s164, 1
        %s536 = scalar_lea.sflag [#allocation3], %s535
        %s537 = sand.u32 %s164, 1
        %s538 = smul.addr %s537, 64
        %s539 = scalar_lea.vmem [#allocation2], %s538
        // Predicated region
        $region45: #{bottleneck_forward.5} parent=43 // pred_check
          %p540 = pneg %p174
        $region46: #{bottleneck_forward.5} parent=43 // pred_check_branch
          %542 = sbr.rel (%p540) target = $region48
        $region47: #{bottleneck_forward.5} parent=43 // pred_region
          %s543 = smul.u32 8, %s20
          %s545 = ssub.s32 1024, 1024
          %546 = vsyncadd %s536, %s545
          %s547 = smul.addr %s543, 128
          %s548 = scalar_lea.hbm %s6, %s547
          %s549 = sshll.u32 %s539, 4
          %s550 = int_to_ptr.vmem [resolvable:$true] %s549
          %555 = dma.vmem_to_hbm [thread:$0]  %s550, 1024, %s548, %s536, 128, 128, 8
        $region48: #{bottleneck_forward.5} parent=43 // pred_fallthru
          _
      $region44: #{bottleneck_forward.5} parent=5 // pred_fallthru
        _
      %p556 = scmp.le.s32.totalorder 2, %s15
      // Predicated region
      $region49: #{bottleneck_forward.5} parent=5 // pred_check
        %p557 = pneg %p556
      $region50: #{bottleneck_forward.5} parent=5 // pred_check_branch
        %559 = sbr.rel (%p557) target = $region52
      $region51: #{bottleneck_forward.5} parent=5 // pred_region
        %s560 = ssub.s32 %s15, 2
        // Predicated region
        $region53: #{bottleneck_forward.5} parent=51 // pred_check
          %p561 = pneg %p180
        $region54: #{bottleneck_forward.5} parent=51 // pred_check_branch
          %563 = sbr.rel (%p561) target = $region56
        $region55: #{bottleneck_forward.5} parent=51 // pred_region
          %s564 = sand.u32 %s165, 1
          %s565 = scalar_lea.sflag [#allocation3], %s564
          %s566 = sand.u32 %s165, 1
          %s567 = smul.addr %s566, 64
          %s568 = scalar_lea.vmem [#allocation2], %s567
          %569 = dma.done %s565, 1024
        $region56: #{bottleneck_forward.5} parent=51 // pred_fallthru
          _
      $region52: #{bottleneck_forward.5} parent=5 // pred_fallthru
        _
    $region6: #{bottleneck_forward.5} parent=1 // loop_footer
      %s19 = sadd.s32 1, %s15
    $region7: #{bottleneck_forward.5} parent=1 // loop_footer_branch
      %14 = sbr.rel target = $region3
    $region8: #{bottleneck_forward.5} parent=1 // loop_exit
      _
    %570 = vsyncpa [#allocation3], 1
    %s571 = scalar_lea.sflag [#allocation3], 1
    %572 = vsyncpa %s571, 1

// kernel: bottleneck_forward.4
$region0: #{bottleneck_forward.4}
  #allocation0 [shape = 'u32[]', space=smem, size = 0x4, offset = 0x4, fixed_abs, tag = 'smem constant byte address 0x4 - core index']
  #allocation1 [shape = 'u32[144,128]{1,0:T(1,128)}', space=vmem, size = 0x12000, scoped, tag = 'internal scratch']
  %s0 = inlined_call_operand.vmem [shape: bf16[2,9,9,4], index: 0, kind: input, shape index: {}]
  %s1 = inlined_call_operand.vmem [shape: bf16[2,9,9,4], index: 1, kind: input, shape index: {}]
  %s2 = inlined_call_operand.vmem [shape: bf16[2,9,9,4], index: 2, kind: input, shape index: {}]
  %s3 = inlined_call_operand.vmem [shape: bf16[2,9,9,4], index: 3, kind: input, shape index: {}]
  %s4 = inlined_call_operand.vmem [shape: bf16[9,4,4], index: 4, kind: input, shape index: {}]
  %s5 = inlined_call_operand.vmem [shape: f32[1,4], index: 5, kind: input, shape index: {}]
  %s6 = inlined_call_operand.vmem [shape: bf16[2,64,4], index: 6, kind: output, shape index: {}]
  %s7 = sld [smem:[#allocation0]]
  $region57: #{bottleneck_forward.4} parent=0
    _
  %s9 = ssub.s32 1, %s7
  %s10 = scalar_select 0, %s9, %s7
  loop: start=0, step=1, limit=4
  $region2: #{bottleneck_forward.4} parent=0 // loop_pre_header
    _
  $region3: #{bottleneck_forward.4} parent=0 // loop_header
    %s12 = sphi 0, %s16
    %p13 = scmp.ge.s32.totalorder %s12, 4
    %s22 = sphi 0, %s24
    %s25 = sphi 0, %s22
    %s26 = sphi 0, %s25
    %s42 = sphi 0, %s26
    %s48 = sphi 0, %s50
    %s51 = sphi 0, %s48
    %s52 = sphi 0, %s51
    %s68 = sphi 0, %s52
    %s74 = sphi 0, %s76
    %s77 = sphi 0, %s74
    %s78 = sphi 0, %s77
    %s94 = sphi 0, %s78
    %s100 = sphi 0, %s102
    %s103 = sphi 0, %s100
    %s104 = sphi 0, %s103
    %s120 = sphi 0, %s104
    %s124 = sphi 0, %s124
    %s126 = sphi 0, %s124
    %s127 = sphi 0, %s126
    %s141 = sphi 0, %s127
    %s145 = sphi 0, %s145
    %s147 = sphi 0, %s145
    %s148 = sphi 0, %s147
    %s162 = sphi 0, %s148
    %s168 = sphi 0, %s170
    %s171 = sphi 0, %s168
    %s172 = sphi 0, %s171
    %s188 = sphi 0, %s172
  $region4: #{bottleneck_forward.4} parent=0 // loop_header_branch
    %15 = sbr.rel (%p13) target = $region8
  $region5: #{bottleneck_forward.4} parent=0 // loop_body
    %s17 = ssub.s32 %s12, 1
    %s18 = ssub.s32 %s12, 2
    %s19 = sadd.s32 %s12, 1
    %s20 = ssub.s32 %s12, %s19
    %p21 = scmp.eq.s32.totalorder %s20, 0
    %s23 = sadd.s32 %s22, 1
    %s24 = scalar_select %p21, %s22, %s23
    %p27 = pneg %p21
    %p28 = scmp.eq.s32.totalorder %s12, 1
    %p29 = por %p27, %p28
    %p30 = scmp.ne.s32.totalorder %s22, %s25
    %p31 = scmp.eq.s32.totalorder %s12, 0
    %p32 = por %p30, %p31
    %p33 = scmp.ne.s32.totalorder %s22, %s25
    %p34 = scmp.eq.s32.totalorder %s17, 1
    %p35 = por %p33, %p34
    %p36 = scmp.ne.s32.totalorder %s25, %s26
    %p37 = scmp.eq.s32.totalorder %s17, 0
    %p38 = por %p36, %p37
    %p39 = scmp.ne.s32.totalorder %s25, %s26
    %p40 = scmp.eq.s32.totalorder %s18, 1
    %p41 = por %p39, %p40
    %p43 = scmp.ne.s32.totalorder %s26, %s42
    %p44 = scmp.eq.s32.totalorder %s18, 0
    %p45 = por %p43, %p44
    %s46 = ssub.s32 %s12, %s19
    %p47 = scmp.eq.s32.totalorder %s46, 0
    %s49 = sadd.s32 %s48, 1
    %s50 = scalar_select %p47, %s48, %s49
    %p53 = pneg %p47
    %p54 = scmp.eq.s32.totalorder %s12, 1
    %p55 = por %p53, %p54
    %p56 = scmp.ne.s32.totalorder %s48, %s51
    %p57 = scmp.eq.s32.totalorder %s12, 0
    %p58 = por %p56, %p57
    %p59 = scmp.ne.s32.totalorder %s48, %s51
    %p60 = scmp.eq.s32.totalorder %s17, 1
    %p61 = por %p59, %p60
    %p62 = scmp.ne.s32.totalorder %s51, %s52
    %p63 = scmp.eq.s32.totalorder %s17, 0
    %p64 = por %p62, %p63
    %p65 = scmp.ne.s32.totalorder %s51, %s52
    %p66 = scmp.eq.s32.totalorder %s18, 1
    %p67 = por %p65, %p66
    %p69 = scmp.ne.s32.totalorder %s52, %s68
    %p70 = scmp.eq.s32.totalorder %s18, 0
    %p71 = por %p69, %p70
    %s72 = ssub.s32 %s12, %s19
    %p73 = scmp.eq.s32.totalorder %s72, 0
    %s75 = sadd.s32 %s74, 1
    %s76 = scalar_select %p73, %s74, %s75
    %p79 = pneg %p73
    %p80 = scmp.eq.s32.totalorder %s12, 1
    %p81 = por %p79, %p80
    %p82 = scmp.ne.s32.totalorder %s74, %s77
    %p83 = scmp.eq.s32.totalorder %s12, 0
    %p84 = por %p82, %p83
    %p85 = scmp.ne.s32.totalorder %s74, %s77
    %p86 = scmp.eq.s32.totalorder %s17, 1
    %p87 = por %p85, %p86
    %p88 = scmp.ne.s32.totalorder %s77, %s78
    %p89 = scmp.eq.s32.totalorder %s17, 0
    %p90 = por %p88, %p89
    %p91 = scmp.ne.s32.totalorder %s77, %s78
    %p92 = scmp.eq.s32.totalorder %s18, 1
    %p93 = por %p91, %p92
    %p95 = scmp.ne.s32.totalorder %s78, %s94
    %p96 = scmp.eq.s32.totalorder %s18, 0
    %p97 = por %p95, %p96
    %s98 = ssub.s32 %s12, %s19
    %p99 = scmp.eq.s32.totalorder %s98, 0
    %s101 = sadd.s32 %s100, 1
    %s102 = scalar_select %p99, %s100, %s101
    %p105 = pneg %p99
    %p106 = scmp.eq.s32.totalorder %s12, 1
    %p107 = por %p105, %p106
    %p108 = scmp.ne.s32.totalorder %s100, %s103
    %p109 = scmp.eq.s32.totalorder %s12, 0
    %p110 = por %p108, %p109
    %p111 = scmp.ne.s32.totalorder %s100, %s103
    %p112 = scmp.eq.s32.totalorder %s17, 1
    %p113 = por %p111, %p112
    %p114 = scmp.ne.s32.totalorder %s103, %s104
    %p115 = scmp.eq.s32.totalorder %s17, 0
    %p116 = por %p114, %p115
    %p117 = scmp.ne.s32.totalorder %s103, %s104
    %p118 = scmp.eq.s32.totalorder %s18, 1
    %p119 = por %p117, %p118
    %p121 = scmp.ne.s32.totalorder %s104, %s120
    %p122 = scmp.eq.s32.totalorder %s18, 0
    %p123 = por %p121, %p122
    %s125 = sadd.s32 %s124, 1
    %p128 = scmp.eq.s32.totalorder %s12, 1
    %p129 = scmp.ne.s32.totalorder %s124, %s126
    %p130 = scmp.eq.s32.totalorder %s12, 0
    %p131 = por %p129, %p130
    %p132 = scmp.ne.s32.totalorder %s124, %s126
    %p133 = scmp.eq.s32.totalorder %s17, 1
    %p134 = por %p132, %p133
    %p135 = scmp.ne.s32.totalorder %s126, %s127
    %p136 = scmp.eq.s32.totalorder %s17, 0
    %p137 = por %p135, %p136
    %p138 = scmp.ne.s32.totalorder %s126, %s127
    %p139 = scmp.eq.s32.totalorder %s18, 1
    %p140 = por %p138, %p139
    %p142 = scmp.ne.s32.totalorder %s127, %s141
    %p143 = scmp.eq.s32.totalorder %s18, 0
    %p144 = por %p142, %p143
    %s146 = sadd.s32 %s145, 1
    %p149 = scmp.eq.s32.totalorder %s12, 1
    %p150 = scmp.ne.s32.totalorder %s145, %s147
    %p151 = scmp.eq.s32.totalorder %s12, 0
    %p152 = por %p150, %p151
    %p153 = scmp.ne.s32.totalorder %s145, %s147
    %p154 = scmp.eq.s32.totalorder %s17, 1
    %p155 = por %p153, %p154
    %p156 = scmp.ne.s32.totalorder %s147, %s148
    %p157 = scmp.eq.s32.totalorder %s17, 0
    %p158 = por %p156, %p157
    %p159 = scmp.ne.s32.totalorder %s147, %s148
    %p160 = scmp.eq.s32.totalorder %s18, 1
    %p161 = por %p159, %p160
    %p163 = scmp.ne.s32.totalorder %s148, %s162
    %p164 = scmp.eq.s32.totalorder %s18, 0
    %p165 = por %p163, %p164
    %s166 = ssub.s32 %s12, %s19
    %p167 = scmp.eq.s32.totalorder %s166, 0
    %s169 = sadd.s32 %s168, 1
    %s170 = scalar_select %p167, %s168, %s169
    %p173 = pneg %p167
    %p174 = scmp.eq.s32.totalorder %s12, 1
    %p175 = por %p173, %p174
    %p176 = scmp.ne.s32.totalorder %s168, %s171
    %p177 = scmp.eq.s32.totalorder %s12, 0
    %p178 = por %p176, %p177
    %p179 = scmp.ne.s32.totalorder %s168, %s171
    %p180 = scmp.eq.s32.totalorder %s17, 1
    %p181 = por %p179, %p180
    %p182 = scmp.ne.s32.totalorder %s171, %s172
    %p183 = scmp.eq.s32.totalorder %s17, 0
    %p184 = por %p182, %p183
    %p185 = scmp.ne.s32.totalorder %s171, %s172
    %p186 = scmp.eq.s32.totalorder %s18, 1
    %p187 = por %p185, %p186
    %p189 = scmp.ne.s32.totalorder %s172, %s188
    %p190 = scmp.eq.s32.totalorder %s18, 0
    %p191 = por %p189, %p190
    %p192 = scmp.le.s32.totalorder 1, %s12
    %p193 = scmp.lt.s32.totalorder %s12, 3
    %p194 = pnand %p192, %p193
    %p195 = pneg %p194
    // Predicated region
    $region9: #{bottleneck_forward.4} parent=5 // pred_check
      _
    $region10: #{bottleneck_forward.4} parent=5 // pred_check_branch
      %197 = sbr.rel (%p194) target = $region12
    $region11: #{bottleneck_forward.4} parent=5 // pred_region
      %s198 = ssub.s32 %s12, 1
      // Predicated region
      $region13: #{bottleneck_forward.4} parent=11 // pred_check
        %p199 = pneg %p137
      $region14: #{bottleneck_forward.4} parent=11 // pred_check_branch
        %201 = sbr.rel (%p199) target = $region16
      $region15: #{bottleneck_forward.4} parent=11 // pred_region
        _
      $region16: #{bottleneck_forward.4} parent=11 // pred_fallthru
        _
      // Predicated region
      $region17: #{bottleneck_forward.4} parent=11 // pred_check
        %p202 = pneg %p158
      $region18: #{bottleneck_forward.4} parent=11 // pred_check_branch
        %204 = sbr.rel (%p202) target = $region20
      $region19: #{bottleneck_forward.4} parent=11 // pred_region
        _
      $region20: #{bottleneck_forward.4} parent=11 // pred_fallthru
        _
    $region12: #{bottleneck_forward.4} parent=5 // pred_fallthru
      _
    %p205 = scmp.lt.s32.totalorder %s12, 2
    // Predicated region
    $region21: #{bottleneck_forward.4} parent=5 // pred_check
      %p206 = pneg %p205
    $region22: #{bottleneck_forward.4} parent=5 // pred_check_branch
      %208 = sbr.rel (%p206) target = $region24
    $region23: #{bottleneck_forward.4} parent=5 // pred_region
      // Predicated region
      $region25: #{bottleneck_forward.4} parent=23 // pred_check
        %p209 = pneg %p32
      $region26: #{bottleneck_forward.4} parent=23 // pred_check_branch
        %211 = sbr.rel (%p209) target = $region28
      $region27: #{bottleneck_forward.4} parent=23 // pred_region
        %p212 = scmp.lt.s32.totalorder %s12, 1
        %s213 = scalar_select %p212, %s12, 1
        %s214 = smul.addr %s213, 18
        %s215 = smul.addr %s214, 4
        %s216 = scalar_lea.vmem %s0, %s215
      $region28: #{bottleneck_forward.4} parent=23 // pred_fallthru
        _
      // Predicated region
      $region29: #{bottleneck_forward.4} parent=23 // pred_check
        %p217 = pneg %p58
      $region30: #{bottleneck_forward.4} parent=23 // pred_check_branch
        %219 = sbr.rel (%p217) target = $region32
      $region31: #{bottleneck_forward.4} parent=23 // pred_region
        %p220 = scmp.lt.s32.totalorder %s12, 1
        %s221 = scalar_select %p220, %s12, 1
        %s222 = smul.addr %s221, 18
        %s223 = smul.addr %s222, 4
        %s224 = scalar_lea.vmem %s1, %s223
      $region32: #{bottleneck_forward.4} parent=23 // pred_fallthru
        _
      // Predicated region
      $region33: #{bottleneck_forward.4} parent=23 // pred_check
        %p225 = pneg %p84
      $region34: #{bottleneck_forward.4} parent=23 // pred_check_branch
        %227 = sbr.rel (%p225) target = $region36
      $region35: #{bottleneck_forward.4} parent=23 // pred_region
        %p228 = scmp.lt.s32.totalorder %s12, 1
        %s229 = scalar_select %p228, %s12, 1
        %s230 = smul.addr %s229, 18
        %s231 = smul.addr %s230, 4
        %s232 = scalar_lea.vmem %s2, %s231
      $region36: #{bottleneck_forward.4} parent=23 // pred_fallthru
        _
      // Predicated region
      $region37: #{bottleneck_forward.4} parent=23 // pred_check
        %p233 = pneg %p110
      $region38: #{bottleneck_forward.4} parent=23 // pred_check_branch
        %235 = sbr.rel (%p233) target = $region40
      $region39: #{bottleneck_forward.4} parent=23 // pred_region
        %p236 = scmp.lt.s32.totalorder %s12, 1
        %s237 = scalar_select %p236, %s12, 1
        %s238 = smul.addr %s237, 18
        %s239 = smul.addr %s238, 4
        %s240 = scalar_lea.vmem %s3, %s239
      $region40: #{bottleneck_forward.4} parent=23 // pred_fallthru
        _
    $region24: #{bottleneck_forward.4} parent=5 // pred_fallthru
      _
    %p241 = scmp.le.s32.totalorder 1, %s12
    %p242 = scmp.lt.s32.totalorder %s12, 3
    %p243 = pnand %p241, %p242
    %p244 = pneg %p243
    // Predicated region
    $region41: #{bottleneck_forward.4} parent=5 // pred_check
      _
    $region42: #{bottleneck_forward.4} parent=5 // pred_check_branch
      %246 = sbr.rel (%p243) target = $region44
    $region43: #{bottleneck_forward.4} parent=5 // pred_region
      %s247 = ssub.s32 %s12, 1
      %p248 = scmp.lt.s32.totalorder %s17, 1
      %s249 = scalar_select %p248, %s17, 1
      %s250 = smul.addr %s249, 18
      %s251 = smul.addr %s250, 4
      %s252 = scalar_lea.vmem %s0, %s251
      %p253 = pneg %p38
      %p254 = pneg %p35
      %p255 = scmp.lt.s32.totalorder %s17, 1
      %s256 = scalar_select %p255, %s17, 1
      %s257 = smul.addr %s256, 18
      %s258 = smul.addr %s257, 4
      %s259 = scalar_lea.vmem %s1, %s258
      %p260 = pneg %p64
      %p261 = pneg %p61
      %p262 = scmp.lt.s32.totalorder %s17, 1
      %s263 = scalar_select %p262, %s17, 1
      %s264 = smul.addr %s263, 18
      %s265 = smul.addr %s264, 4
      %s266 = scalar_lea.vmem %s2, %s265
      %p267 = pneg %p90
      %p268 = pneg %p87
      %p269 = scmp.lt.s32.totalorder %s17, 1
      %s270 = scalar_select %p269, %s17, 1
      %s271 = smul.addr %s270, 18
      %s272 = smul.addr %s271, 4
      %s273 = scalar_lea.vmem %s3, %s272
      %p274 = pneg %p116
      %p275 = pneg %p113
      %p276 = pneg %p137
      %p277 = pneg %p134
      %p278 = pneg %p158
      %p279 = pneg %p155
      %p280 = pneg %p184
      %p281 = pneg %p181
      %p282 = scmp.lt.s32.totalorder %s17, 1
      %s283 = scalar_select %p282, %s17, 1
      %s284 = smul.addr %s283, 8
      %s285 = smul.addr %s284, 4
      %s286 = scalar_lea.vmem %s6, %s285
      %p287 = scmp.lt.s32.totalorder %s17, 1
      %s288 = scalar_select %p287, %s17, 1
      %s289 = smul.addr %s288, 18
      %s290 = smul.addr %s289, 4
      %s291 = scalar_lea.vmem %s0, %s290
      %p292 = scmp.lt.s32.totalorder %s17, 1
      %s293 = scalar_select %p292, %s17, 1
      %s294 = smul.addr %s293, 18
      %s295 = smul.addr %s294, 4
      %s296 = scalar_lea.vmem %s1, %s295
      %p297 = scmp.lt.s32.totalorder %s17, 1
      %s298 = scalar_select %p297, %s17, 1
      %s299 = smul.addr %s298, 18
      %s300 = smul.addr %s299, 4
      %s301 = scalar_lea.vmem %s2, %s300
      %p302 = scmp.lt.s32.totalorder %s17, 1
      %s303 = scalar_select %p302, %s17, 1
      %s304 = smul.addr %s303, 18
      %s305 = smul.addr %s304, 4
      %s306 = scalar_lea.vmem %s3, %s305
      %p307 = scmp.lt.s32.totalorder %s17, 1
      %s308 = scalar_select %p307, %s17, 1
      %s309 = smul.addr %s308, 8
      %s310 = smul.addr %s309, 4
      %s311 = scalar_lea.vmem %s6, %s310
      %v313 = vld [vmem:[%s291] sm:$0xf]
      %v314 = vld [vmem:[%s291 + $0x8] sm:$0xf]
      %v315 = vld [vmem:[%s291 + $0x10] sm:$0xf]
      %v316 = vld [vmem:[%s291 + $0x18] sm:$0xf]
      %v317 = vld [vmem:[%s291 + $0x20] sm:$0xf]
      %v318 = vld [vmem:[%s291 + $0x28] sm:$0xf]
      %v319 = vld [vmem:[%s291 + $0x30] sm:$0xf]
      %v320 = vld [vmem:[%s291 + $0x38] sm:$0xf]
      %v321 = vld [vmem:[%s4] sm:$0x3]
      %v322 = vld [vmem:[%s296] sm:$0xf]
      %v323 = vld [vmem:[%s296 + $0x8] sm:$0xf]
      %v324 = vld [vmem:[%s296 + $0x10] sm:$0xf]
      %v325 = vld [vmem:[%s296 + $0x18] sm:$0xf]
      %v326 = vld [vmem:[%s296 + $0x20] sm:$0xf]
      %v327 = vld [vmem:[%s296 + $0x28] sm:$0xf]
      %v328 = vld [vmem:[%s296 + $0x30] sm:$0xf]
      %v329 = vld [vmem:[%s296 + $0x38] sm:$0xf]
      %s330 = scalar_lea.vmem %s4, 2
      %v331 = vld [vmem:[%s330] sm:$0x3]
      %v340 = vunpack.c.l.b16 %v322
      %v341 = vunpack.c.l.b16 %v323
      %v342 = vunpack.c.l.b16 %v324
      %v343 = vunpack.c.l.b16 %v325
      %v344 = vunpack.c.l.b16 %v326
      %v345 = vunpack.c.l.b16 %v327
      %v346 = vunpack.c.l.b16 %v328
      %v347 = vunpack.c.l.b16 %v329
      %v348 = vpack.c.b16 %v341, %v340
      %v349 = vpack.c.b16 %v343, %v342
      %v350 = vpack.c.b16 %v345, %v344
      %v351 = vpack.c.b16 %v347, %v346
      %vm352 = vcmask 31744
      %v354 = vsel %vm352, %v348, 0
      %v357 = vsel %vm352, %v349, 0
      %v360 = vsel %vm352, %v350, 0
      %v363 = vsel %vm352, %v351, 0
      %vm365 = vcmask 1041408
      %v367 = vsel %vm365, %v331, 0
      %369 = vmatprep.subr.bf16.mxu0 0
      %370 = vmatpush1.bf16.msra.mxu0 %v367
      %371 = vmatprep.subr.bf16.mxu0 0
      %372 = vmatpush1.bf16.msra.mxu0 0
      %373 = vmatprep.subr.bf16.mxu0 0
      %374 = vmatpush1.bf16.msra.mxu0 0
      %375 = vmatprep.subr.bf16.mxu0 0
      %376 = vmatpush1.bf16.msra.mxu0 0
      %377 = vmatprep.subr.bf16.mxu0 0
      %378 = vmatpush1.bf16.msra.mxu0 0
      %379 = vmatprep.subr.bf16.mxu0 0
      %380 = vmatpush1.bf16.msra.mxu0 0
      %381 = vmatprep.subr.bf16.mxu0 0
      %382 = vmatpush1.bf16.msra.mxu0 0
      %383 = vmatprep.subr.bf16.mxu0 0
      %384 = vmatpush1.bf16.msra.mxu0 0
      %385 = vmatprep.subr.bf16.mxu0 0
      %386 = vmatpush1.bf16.msra.mxu0 0
      %387 = vmatprep.subr.bf16.mxu0 0
      %388 = vmatpush1.bf16.msra.mxu0 0
      %389 = vmatprep.subr.bf16.mxu0 0
      %390 = vmatpush1.bf16.msra.mxu0 0
      %391 = vmatprep.subr.bf16.mxu0 0
      %392 = vmatpush1.bf16.msra.mxu0 0
      %393 = vmatprep.subr.bf16.mxu0 0
      %394 = vmatpush1.bf16.msra.mxu0 0
      %395 = vmatprep.subr.bf16.mxu0 0
      %396 = vmatpush1.bf16.msra.mxu0 0
      %397 = vmatprep.subr.bf16.mxu0 0
      %398 = vmatpush1.bf16.msra.mxu0 0
      %399 = vmatprep.subr.bf16.mxu0 0
      %400 = vmatpush1.bf16.msra.mxu0 0
      %401 = vmatprep.mubr.bf16.mxu0 0
      %402 = vmatmul.mubr.bf16.gmra.mrb[0].mxu0 %v354
      %v403 = vpop.f32.mrb[0].mxu0
      %v404 = vadd.f32 0.0, %v403
      %v405 = vpop.f32.mrb[0].mxu0
      %v406 = vpop.f32.mrb[0].mxu0
      %v407 = vadd.f32 0.0, %v406
      %v408 = vpop.f32.mrb[0].mxu0
      %409 = vmatprep.mubr.bf16.mxu0 0
      %410 = vmatmul.mubr.bf16.gmra.mrb[0].mxu0 %v357
      %v411 = vpop.f32.mrb[0].mxu0
      %v412 = vadd.f32 0.0, %v411
      %v413 = vpop.f32.mrb[0].mxu0
      %v414 = vpop.f32.mrb[0].mxu0
      %v415 = vadd.f32 0.0, %v414
      %v416 = vpop.f32.mrb[0].mxu0
      %417 = vmatprep.mubr.bf16.mxu0 0
      %418 = vmatmul.mubr.bf16.gmra.mrb[0].mxu0 %v360
      %v419 = vpop.f32.mrb[0].mxu0
      %v420 = vadd.f32 0.0, %v419
      %v421 = vpop.f32.mrb[0].mxu0
      %v422 = vpop.f32.mrb[0].mxu0
      %v423 = vadd.f32 0.0, %v422
      %v424 = vpop.f32.mrb[0].mxu0
      %425 = vmatprep.mubr.bf16.mxu0 0
      %426 = vmatmul.mubr.bf16.gmra.mrb[0].mxu0 %v363
      %v427 = vpop.f32.mrb[0].mxu0
      %v428 = vadd.f32 0.0, %v427
      %v429 = vpop.f32.mrb[0].mxu0
      %v430 = vpop.f32.mrb[0].mxu0
      %v431 = vadd.f32 0.0, %v430
      %v432 = vpop.f32.mrb[0].mxu0
      %433 = vdwg.mxu0
      %v442 = vunpack.c.l.b16 %v313
      %v443 = vunpack.c.l.b16 %v314
      %v444 = vunpack.c.l.b16 %v315
      %v445 = vunpack.c.l.b16 %v316
      %v446 = vunpack.c.l.b16 %v317
      %v447 = vunpack.c.l.b16 %v318
      %v448 = vunpack.c.l.b16 %v319
      %v449 = vunpack.c.l.b16 %v320
      %v450 = vpack.c.b16 %v443, %v442
      %v451 = vpack.c.b16 %v445, %v444
      %v452 = vpack.c.b16 %v447, %v446
      %v453 = vpack.c.b16 %v449, %v448
      %v455 = vsel %vm352, %v450, 0
      %v458 = vsel %vm352, %v451, 0
      %v461 = vsel %vm352, %v452, 0
      %v464 = vsel %vm352, %v453, 0
      %v467 = vsel %vm365, %v321, 0
      %469 = vmatprep.subr.bf16.mxu0 0
      %470 = vmatpush1.bf16.msra.mxu0 %v467
      %471 = vmatprep.subr.bf16.mxu0 0
      %472 = vmatpush1.bf16.msra.mxu0 0
      %473 = vmatprep.subr.bf16.mxu0 0
      %474 = vmatpush1.bf16.msra.mxu0 0
      %475 = vmatprep.subr.bf16.mxu0 0
      %476 = vmatpush1.bf16.msra.mxu0 0
      %477 = vmatprep.subr.bf16.mxu0 0
      %478 = vmatpush1.bf16.msra.mxu0 0
      %479 = vmatprep.subr.bf16.mxu0 0
      %480 = vmatpush1.bf16.msra.mxu0 0
      %481 = vmatprep.subr.bf16.mxu0 0
      %482 = vmatpush1.bf16.msra.mxu0 0
      %483 = vmatprep.subr.bf16.mxu0 0
      %484 = vmatpush1.bf16.msra.mxu0 0
      %485 = vmatprep.subr.bf16.mxu0 0
      %486 = vmatpush1.bf16.msra.mxu0 0
      %487 = vmatprep.subr.bf16.mxu0 0
      %488 = vmatpush1.bf16.msra.mxu0 0
      %489 = vmatprep.subr.bf16.mxu0 0
      %490 = vmatpush1.bf16.msra.mxu0 0
      %491 = vmatprep.subr.bf16.mxu0 0
      %492 = vmatpush1.bf16.msra.mxu0 0
      %493 = vmatprep.subr.bf16.mxu0 0
      %494 = vmatpush1.bf16.msra.mxu0 0
      %495 = vmatprep.subr.bf16.mxu0 0
      %496 = vmatpush1.bf16.msra.mxu0 0
      %497 = vmatprep.subr.bf16.mxu0 0
      %498 = vmatpush1.bf16.msra.mxu0 0
      %499 = vmatprep.subr.bf16.mxu0 0
      %500 = vmatpush1.bf16.msra.mxu0 0
      %501 = vmatprep.mubr.bf16.mxu0 0
      %502 = vmatmul.mubr.bf16.gmra.mrb[0].mxu0 %v455
      %v503 = vpop.f32.mrb[0].mxu0
      %v504 = vadd.f32 %v404, %v503
      %v505 = vpop.f32.mrb[0].mxu0
      %v506 = vpop.f32.mrb[0].mxu0
      %v507 = vadd.f32 %v407, %v506
      %v508 = vpop.f32.mrb[0].mxu0
      %509 = vmatprep.mubr.bf16.mxu0 0
      %510 = vmatmul.mubr.bf16.gmra.mrb[0].mxu0 %v458
      %v511 = vpop.f32.mrb[0].mxu0
      %v512 = vadd.f32 %v412, %v511
      %v513 = vpop.f32.mrb[0].mxu0
      %v514 = vpop.f32.mrb[0].mxu0
      %v515 = vadd.f32 %v415, %v514
      %v516 = vpop.f32.mrb[0].mxu0
      %517 = vmatprep.mubr.bf16.mxu0 0
      %518 = vmatmul.mubr.bf16.gmra.mrb[0].mxu0 %v461
      %v519 = vpop.f32.mrb[0].mxu0
      %v520 = vadd.f32 %v420, %v519
      %v521 = vpop.f32.mrb[0].mxu0
      %v522 = vpop.f32.mrb[0].mxu0
      %v523 = vadd.f32 %v423, %v522
      %v524 = vpop.f32.mrb[0].mxu0
      %525 = vmatprep.mubr.bf16.mxu0 0
      %526 = vmatmul.mubr.bf16.gmra.mrb[0].mxu0 %v464
      %v527 = vpop.f32.mrb[0].mxu0
      %v528 = vadd.f32 %v428, %v527
      %v529 = vpop.f32.mrb[0].mxu0
      %v530 = vpop.f32.mrb[0].mxu0
      %v531 = vadd.f32 %v431, %v530
      %v532 = vpop.f32.mrb[0].mxu0
      %533 = vdwg.mxu0
      %v534 = vld [vmem:[%s291] sm:$0xf]
      %v535 = vld [vmem:[%s291 + $0x4] sm:$0x1]
      %v536 = vld [vmem:[%s291 + $0x8] sm:$0xf]
      %v537 = vld [vmem:[%s291 + $0xc] sm:$0x1]
      %v538 = vld [vmem:[%s291 + $0x10] sm:$0xf]
      %v539 = vld [vmem:[%s291 + $0x14] sm:$0x1]
      %v540 = vld [vmem:[%s291 + $0x18] sm:$0xf]
      %v541 = vld [vmem:[%s291 + $0x1c] sm:$0x1]
      %v542 = vld [vmem:[%s291 + $0x20] sm:$0xf]
      %v543 = vld [vmem:[%s291 + $0x24] sm:$0x1]
      %v544 = vld [vmem:[%s291 + $0x28] sm:$0xf]
      %v545 = vld [vmem:[%s291 + $0x2c] sm:$0x1]
      %v546 = vld [vmem:[%s291 + $0x30] sm:$0xf]
      %v547 = vld [vmem:[%s291 + $0x34] sm:$0x1]
      %v548 = vld [vmem:[%s291 + $0x38] sm:$0xf]
      %v549 = vld [vmem:[%s291 + $0x3c] sm:$0x1]
      %vm550 = vsmask.f32 3328
      %vm551 = vsmask.f32 7440
      %vm552 = vmor %vm550, %vm551
      %v554 = vshrl.u32 %v534, 16
      %v556 = vrot.slane %v554, 4
      %v557 = vshll.u32 %v534, 16
      %v559 = vrot.slane %v557, 5
      %v560 = vor.u32 %v556, %v559
      %v561 = vrot.slane %v560, 4
      %v563 = vshll.u32 %v535, 16
      %v565 = vrot.slane %v563, 5
      %v566 = vsel %vm552, %v561, %v565
      %v568 = vshrl.u32 %v536, 16
      %v570 = vrot.slane %v568, 4
      %v571 = vshll.u32 %v536, 16
      %v573 = vrot.slane %v571, 5
      %v574 = vor.u32 %v570, %v573
      %v575 = vrot.slane %v574, 4
      %v577 = vshll.u32 %v537, 16
      %v579 = vrot.slane %v577, 5
      %v580 = vsel %vm552, %v575, %v579
      %v582 = vshrl.u32 %v538, 16
      %v584 = vrot.slane %v582, 4
      %v585 = vshll.u32 %v538, 16
      %v587 = vrot.slane %v585, 5
      %v588 = vor.u32 %v584, %v587
      %v589 = vrot.slane %v588, 4
      %v591 = vshll.u32 %v539, 16
      %v593 = vrot.slane %v591, 5
      %v594 = vsel %vm552, %v589, %v593
      %v596 = vshrl.u32 %v540, 16
      %v598 = vrot.slane %v596, 4
      %v599 = vshll.u32 %v540, 16
      %v601 = vrot.slane %v599, 5
      %v602 = vor.u32 %v598, %v601
      %v603 = vrot.slane %v602, 4
      %v605 = vshll.u32 %v541, 16
      %v607 = vrot.slane %v605, 5
      %v608 = vsel %vm552, %v603, %v607
      %v610 = vshrl.u32 %v542, 16
      %v612 = vrot.slane %v610, 4
      %v613 = vshll.u32 %v542, 16
      %v615 = vrot.slane %v613, 5
      %v616 = vor.u32 %v612, %v615
      %v617 = vrot.slane %v616, 4
      %v619 = vshll.u32 %v543, 16
      %v621 = vrot.slane %v619, 5
      %v622 = vsel %vm552, %v617, %v621
      %v624 = vshrl.u32 %v544, 16
      %v626 = vrot.slane %v624, 4
      %v627 = vshll.u32 %v544, 16
      %v629 = vrot.slane %v627, 5
      %v630 = vor.u32 %v626, %v629
      %v631 = vrot.slane %v630, 4
      %v633 = vshll.u32 %v545, 16
      %v635 = vrot.slane %v633, 5
      %v636 = vsel %vm552, %v631, %v635
      %v638 = vshrl.u32 %v546, 16
      %v640 = vrot.slane %v638, 4
      %v641 = vshll.u32 %v546, 16
      %v643 = vrot.slane %v641, 5
      %v644 = vor.u32 %v640, %v643
      %v645 = vrot.slane %v644, 4
      %v647 = vshll.u32 %v547, 16
      %v649 = vrot.slane %v647, 5
      %v650 = vsel %vm552, %v645, %v649
      %v652 = vshrl.u32 %v548, 16
      %v654 = vrot.slane %v652, 4
      %v655 = vshll.u32 %v548, 16
      %v657 = vrot.slane %v655, 5
      %v658 = vor.u32 %v654, %v657
      %v659 = vrot.slane %v658, 4
      %v661 = vshll.u32 %v549, 16
      %v663 = vrot.slane %v661, 5
      %v664 = vsel %vm552, %v659, %v663
      %s665 = scalar_lea.vmem %s4, 4
      %v666 = vld [vmem:[%s665] sm:$0x3]
      %v667 = vunpack.c.l.b16 %v566
      %v668 = vunpack.c.l.b16 %v580
      %v669 = vunpack.c.l.b16 %v594
      %v670 = vunpack.c.l.b16 %v608
      %v671 = vunpack.c.l.b16 %v622
      %v672 = vunpack.c.l.b16 %v636
      %v673 = vunpack.c.l.b16 %v650
      %v674 = vunpack.c.l.b16 %v664
      %v675 = vpack.c.b16 %v668, %v667
      %v676 = vpack.c.b16 %v670, %v669
      %v677 = vpack.c.b16 %v672, %v671
      %v678 = vpack.c.b16 %v674, %v673
      %v680 = vsel %vm352, %v675, 0
      %v683 = vsel %vm352, %v676, 0
      %v686 = vsel %vm352, %v677, 0
      %v689 = vsel %vm352, %v678, 0
      %v692 = vsel %vm365, %v666, 0
      %694 = vmatprep.subr.bf16.mxu0 0
      %695 = vmatpush1.bf16.msra.mxu0 %v692
      %696 = vmatprep.subr.bf16.mxu0 0
      %697 = vmatpush1.bf16.msra.mxu0 0
      %698 = vmatprep.subr.bf16.mxu0 0
      %699 = vmatpush1.bf16.msra.mxu0 0
      %700 = vmatprep.subr.bf16.mxu0 0
      %701 = vmatpush1.bf16.msra.mxu0 0
      %702 = vmatprep.subr.bf16.mxu0 0
      %703 = vmatpush1.bf16.msra.mxu0 0
      %704 = vmatprep.subr.bf16.mxu0 0
      %705 = vmatpush1.bf16.msra.mxu0 0
      %706 = vmatprep.subr.bf16.mxu0 0
      %707 = vmatpush1.bf16.msra.mxu0 0
      %708 = vmatprep.subr.bf16.mxu0 0
      %709 = vmatpush1.bf16.msra.mxu0 0
      %710 = vmatprep.subr.bf16.mxu0 0
      %711 = vmatpush1.bf16.msra.mxu0 0
      %712 = vmatprep.subr.bf16.mxu0 0
      %713 = vmatpush1.bf16.msra.mxu0 0
      %714 = vmatprep.subr.bf16.mxu0 0
      %715 = vmatpush1.bf16.msra.mxu0 0
      %716 = vmatprep.subr.bf16.mxu0 0
      %717 = vmatpush1.bf16.msra.mxu0 0
      %718 = vmatprep.subr.bf16.mxu0 0
      %719 = vmatpush1.bf16.msra.mxu0 0
      %720 = vmatprep.subr.bf16.mxu0 0
      %721 = vmatpush1.bf16.msra.mxu0 0
      %722 = vmatprep.subr.bf16.mxu0 0
      %723 = vmatpush1.bf16.msra.mxu0 0
      %724 = vmatprep.subr.bf16.mxu0 0
      %725 = vmatpush1.bf16.msra.mxu0 0
      %726 = vmatprep.mubr.bf16.mxu0 0
      %727 = vmatmul.mubr.bf16.gmra.mrb[0].mxu0 %v680
      %v728 = vpop.f32.mrb[0].mxu0
      %v729 = vadd.f32 0.0, %v728
      %v730 = vpop.f32.mrb[0].mxu0
      %v731 = vpop.f32.mrb[0].mxu0
      %v732 = vadd.f32 0.0, %v731
      %v733 = vpop.f32.mrb[0].mxu0
      %734 = vmatprep.mubr.bf16.mxu0 0
      %735 = vmatmul.mubr.bf16.gmra.mrb[0].mxu0 %v683
      %v736 = vpop.f32.mrb[0].mxu0
      %v737 = vadd.f32 0.0, %v736
      %v738 = vpop.f32.mrb[0].mxu0
      %v739 = vpop.f32.mrb[0].mxu0
      %v740 = vadd.f32 0.0, %v739
      %v741 = vpop.f32.mrb[0].mxu0
      %742 = vmatprep.mubr.bf16.mxu0 0
      %743 = vmatmul.mubr.bf16.gmra.mrb[0].mxu0 %v686
      %v744 = vpop.f32.mrb[0].mxu0
      %v745 = vadd.f32 0.0, %v744
      %v746 = vpop.f32.mrb[0].mxu0
      %v747 = vpop.f32.mrb[0].mxu0
      %v748 = vadd.f32 0.0, %v747
      %v749 = vpop.f32.mrb[0].mxu0
      %750 = vmatprep.mubr.bf16.mxu0 0
      %751 = vmatmul.mubr.bf16.gmra.mrb[0].mxu0 %v689
      %v752 = vpop.f32.mrb[0].mxu0
      %v753 = vadd.f32 0.0, %v752
      %v754 = vpop.f32.mrb[0].mxu0
      %v755 = vpop.f32.mrb[0].mxu0
      %v756 = vadd.f32 0.0, %v755
      %v757 = vpop.f32.mrb[0].mxu0
      %758 = vdwg.mxu0
      %v759 = vadd.f32 %v504, %v729
      %v760 = vadd.f32 %v507, %v732
      %v761 = vadd.f32 %v512, %v737
      %v762 = vadd.f32 %v515, %v740
      %v763 = vadd.f32 %v520, %v745
      %v764 = vadd.f32 %v523, %v748
      %v765 = vadd.f32 %v528, %v753
      %v766 = vadd.f32 %v531, %v756
      %v767 = vld [vmem:[%s301] sm:$0xf]
      %v768 = vld [vmem:[%s301 + $0x8] sm:$0xf]
      %v769 = vld [vmem:[%s301 + $0x10] sm:$0xf]
      %v770 = vld [vmem:[%s301 + $0x18] sm:$0xf]
      %v771 = vld [vmem:[%s301 + $0x20] sm:$0xf]
      %v772 = vld [vmem:[%s301 + $0x28] sm:$0xf]
      %v773 = vld [vmem:[%s301 + $0x30] sm:$0xf]
      %v774 = vld [vmem:[%s301 + $0x38] sm:$0xf]
      %s775 = scalar_lea.vmem %s4, 6
      %v776 = vld [vmem:[%s775] sm:$0x3]
      %v785 = vunpack.c.l.b16 %v767
      %v786 = vunpack.c.l.b16 %v768
      %v787 = vunpack.c.l.b16 %v769
      %v788 = vunpack.c.l.b16 %v770
      %v789 = vunpack.c.l.b16 %v771
      %v790 = vunpack.c.l.b16 %v772
      %v791 = vunpack.c.l.b16 %v773
      %v792 = vunpack.c.l.b16 %v774
      %v793 = vpack.c.b16 %v786, %v785
      %v794 = vpack.c.b16 %v788, %v787
      %v795 = vpack.c.b16 %v790, %v789
      %v796 = vpack.c.b16 %v792, %v791
      %v798 = vsel %vm352, %v793, 0
      %v801 = vsel %vm352, %v794, 0
      %v804 = vsel %vm352, %v795, 0
      %v807 = vsel %vm352, %v796, 0
      %v810 = vsel %vm365, %v776, 0
      %812 = vmatprep.subr.bf16.mxu0 0
      %813 = vmatpush1.bf16.msra.mxu0 %v810
      %814 = vmatprep.subr.bf16.mxu0 0
      %815 = vmatpush1.bf16.msra.mxu0 0
      %816 = vmatprep.subr.bf16.mxu0 0
      %817 = vmatpush1.bf16.msra.mxu0 0
      %818 = vmatprep.subr.bf16.mxu0 0
      %819 = vmatpush1.bf16.msra.mxu0 0
      %820 = vmatprep.subr.bf16.mxu0 0
      %821 = vmatpush1.bf16.msra.mxu0 0
      %822 = vmatprep.subr.bf16.mxu0 0
      %823 = vmatpush1.bf16.msra.mxu0 0
      %824 = vmatprep.subr.bf16.mxu0 0
      %825 = vmatpush1.bf16.msra.mxu0 0
      %826 = vmatprep.subr.bf16.mxu0 0
      %827 = vmatpush1.bf16.msra.mxu0 0
      %828 = vmatprep.subr.bf16.mxu0 0
      %829 = vmatpush1.bf16.msra.mxu0 0
      %830 = vmatprep.subr.bf16.mxu0 0
      %831 = vmatpush1.bf16.msra.mxu0 0
      %832 = vmatprep.subr.bf16.mxu0 0
      %833 = vmatpush1.bf16.msra.mxu0 0
      %834 = vmatprep.subr.bf16.mxu0 0
      %835 = vmatpush1.bf16.msra.mxu0 0
      %836 = vmatprep.subr.bf16.mxu0 0
      %837 = vmatpush1.bf16.msra.mxu0 0
      %838 = vmatprep.subr.bf16.mxu0 0
      %839 = vmatpush1.bf16.msra.mxu0 0
      %840 = vmatprep.subr.bf16.mxu0 0
      %841 = vmatpush1.bf16.msra.mxu0 0
      %842 = vmatprep.subr.bf16.mxu0 0
      %843 = vmatpush1.bf16.msra.mxu0 0
      %844 = vmatprep.mubr.bf16.mxu0 0
      %845 = vmatmul.mubr.bf16.gmra.mrb[0].mxu0 %v798
      %v846 = vpop.f32.mrb[0].mxu0
      %v847 = vadd.f32 0.0, %v846
      %v848 = vpop.f32.mrb[0].mxu0
      %v849 = vpop.f32.mrb[0].mxu0
      %v850 = vadd.f32 0.0, %v849
      %v851 = vpop.f32.mrb[0].mxu0
      %852 = vmatprep.mubr.bf16.mxu0 0
      %853 = vmatmul.mubr.bf16.gmra.mrb[0].mxu0 %v801
      %v854 = vpop.f32.mrb[0].mxu0
      %v855 = vadd.f32 0.0, %v854
      %v856 = vpop.f32.mrb[0].mxu0
      %v857 = vpop.f32.mrb[0].mxu0
      %v858 = vadd.f32 0.0, %v857
      %v859 = vpop.f32.mrb[0].mxu0
      %860 = vmatprep.mubr.bf16.mxu0 0
      %861 = vmatmul.mubr.bf16.gmra.mrb[0].mxu0 %v804
      %v862 = vpop.f32.mrb[0].mxu0
      %v863 = vadd.f32 0.0, %v862
      %v864 = vpop.f32.mrb[0].mxu0
      %v865 = vpop.f32.mrb[0].mxu0
      %v866 = vadd.f32 0.0, %v865
      %v867 = vpop.f32.mrb[0].mxu0
      %868 = vmatprep.mubr.bf16.mxu0 0
      %869 = vmatmul.mubr.bf16.gmra.mrb[0].mxu0 %v807
      %v870 = vpop.f32.mrb[0].mxu0
      %v871 = vadd.f32 0.0, %v870
      %v872 = vpop.f32.mrb[0].mxu0
      %v873 = vpop.f32.mrb[0].mxu0
      %v874 = vadd.f32 0.0, %v873
      %v875 = vpop.f32.mrb[0].mxu0
      %876 = vdwg.mxu0
      %v877 = vadd.f32 %v759, %v847
      %v878 = vadd.f32 %v760, %v850
      %v879 = vadd.f32 %v761, %v855
      %v880 = vadd.f32 %v762, %v858
      %v881 = vadd.f32 %v763, %v863
      %v882 = vadd.f32 %v764, %v866
      %v883 = vadd.f32 %v765, %v871
      %v884 = vadd.f32 %v766, %v874
      %v885 = vld [vmem:[%s306] sm:$0xf]
      %v886 = vld [vmem:[%s306 + $0x8] sm:$0xf]
      %v887 = vld [vmem:[%s306 + $0x10] sm:$0xf]
      %v888 = vld [vmem:[%s306 + $0x18] sm:$0xf]
      %v889 = vld [vmem:[%s306 + $0x20] sm:$0xf]
      %v890 = vld [vmem:[%s306 + $0x28] sm:$0xf]
      %v891 = vld [vmem:[%s306 + $0x30] sm:$0xf]
      %v892 = vld [vmem:[%s306 + $0x38] sm:$0xf]
      %s893 = scalar_lea.vmem %s4, 8
      %v894 = vld [vmem:[%s893] sm:$0x3]
      %v903 = vunpack.c.l.b16 %v885
      %v904 = vunpack.c.l.b16 %v886
      %v905 = vunpack.c.l.b16 %v887
      %v906 = vunpack.c.l.b16 %v888
      %v907 = vunpack.c.l.b16 %v889
      %v908 = vunpack.c.l.b16 %v890
      %v909 = vunpack.c.l.b16 %v891
      %v910 = vunpack.c.l.b16 %v892
      %v911 = vpack.c.b16 %v904, %v903
      %v912 = vpack.c.b16 %v906, %v905
      %v913 = vpack.c.b16 %v908, %v907
      %v914 = vpack.c.b16 %v910, %v909
      %v916 = vsel %vm352, %v911, 0
      %v919 = vsel %vm352, %v912, 0
      %v922 = vsel %vm352, %v913, 0
      %v925 = vsel %vm352, %v914, 0
      %v928 = vsel %vm365, %v894, 0
      %930 = vmatprep.subr.bf16.mxu0 0
      %931 = vmatpush1.bf16.msra.mxu0 %v928
      %932 = vmatprep.subr.bf16.mxu0 0
      %933 = vmatpush1.bf16.msra.mxu0 0
      %934 = vmatprep.subr.bf16.mxu0 0
      %935 = vmatpush1.bf16.msra.mxu0 0
      %936 = vmatprep.subr.bf16.mxu0 0
      %937 = vmatpush1.bf16.msra.mxu0 0
      %938 = vmatprep.subr.bf16.mxu0 0
      %939 = vmatpush1.bf16.msra.mxu0 0
      %940 = vmatprep.subr.bf16.mxu0 0
      %941 = vmatpush1.bf16.msra.mxu0 0
      %942 = vmatprep.subr.bf16.mxu0 0
      %943 = vmatpush1.bf16.msra.mxu0 0
      %944 = vmatprep.subr.bf16.mxu0 0
      %945 = vmatpush1.bf16.msra.mxu0 0
      %946 = vmatprep.subr.bf16.mxu0 0
      %947 = vmatpush1.bf16.msra.mxu0 0
      %948 = vmatprep.subr.bf16.mxu0 0
      %949 = vmatpush1.bf16.msra.mxu0 0
      %950 = vmatprep.subr.bf16.mxu0 0
      %951 = vmatpush1.bf16.msra.mxu0 0
      %952 = vmatprep.subr.bf16.mxu0 0
      %953 = vmatpush1.bf16.msra.mxu0 0
      %954 = vmatprep.subr.bf16.mxu0 0
      %955 = vmatpush1.bf16.msra.mxu0 0
      %956 = vmatprep.subr.bf16.mxu0 0
      %957 = vmatpush1.bf16.msra.mxu0 0
      %958 = vmatprep.subr.bf16.mxu0 0
      %959 = vmatpush1.bf16.msra.mxu0 0
      %960 = vmatprep.subr.bf16.mxu0 0
      %961 = vmatpush1.bf16.msra.mxu0 0
      %962 = vmatprep.mubr.bf16.mxu0 0
      %963 = vmatmul.mubr.bf16.gmra.mrb[0].mxu0 %v916
      %v964 = vpop.f32.mrb[0].mxu0
      %v965 = vadd.f32 0.0, %v964
      %v966 = vpop.f32.mrb[0].mxu0
      %v967 = vpop.f32.mrb[0].mxu0
      %v968 = vadd.f32 0.0, %v967
      %v969 = vpop.f32.mrb[0].mxu0
      %970 = vmatprep.mubr.bf16.mxu0 0
      %971 = vmatmul.mubr.bf16.gmra.mrb[0].mxu0 %v919
      %v972 = vpop.f32.mrb[0].mxu0
      %v973 = vadd.f32 0.0, %v972
      %v974 = vpop.f32.mrb[0].mxu0
      %v975 = vpop.f32.mrb[0].mxu0
      %v976 = vadd.f32 0.0, %v975
      %v977 = vpop.f32.mrb[0].mxu0
      %978 = vmatprep.mubr.bf16.mxu0 0
      %979 = vmatmul.mubr.bf16.gmra.mrb[0].mxu0 %v922
      %v980 = vpop.f32.mrb[0].mxu0
      %v981 = vadd.f32 0.0, %v980
      %v982 = vpop.f32.mrb[0].mxu0
      %v983 = vpop.f32.mrb[0].mxu0
      %v984 = vadd.f32 0.0, %v983
      %v985 = vpop.f32.mrb[0].mxu0
      %986 = vmatprep.mubr.bf16.mxu0 0
      %987 = vmatmul.mubr.bf16.gmra.mrb[0].mxu0 %v925
      %v988 = vpop.f32.mrb[0].mxu0
      %v989 = vadd.f32 0.0, %v988
      %v990 = vpop.f32.mrb[0].mxu0
      %v991 = vpop.f32.mrb[0].mxu0
      %v992 = vadd.f32 0.0, %v991
      %v993 = vpop.f32.mrb[0].mxu0
      %994 = vdwg.mxu0
      %v995 = vadd.f32 %v877, %v965
      %v996 = vadd.f32 %v878, %v968
      %v997 = vadd.f32 %v879, %v973
      %v998 = vadd.f32 %v880, %v976
      %v999 = vadd.f32 %v881, %v981
      %v1000 = vadd.f32 %v882, %v984
      %v1001 = vadd.f32 %v883, %v989
      %v1002 = vadd.f32 %v884, %v992
      %v1003 = vld [vmem:[%s301] sm:$0xf]
      %v1004 = vld [vmem:[%s301 + $0x4] sm:$0x1]
      %v1005 = vld [vmem:[%s301 + $0x8] sm:$0xf]
      %v1006 = vld [vmem:[%s301 + $0xc] sm:$0x1]
      %v1007 = vld [vmem:[%s301 + $0x10] sm:$0xf]
      %v1008 = vld [vmem:[%s301 + $0x14] sm:$0x1]
      %v1009 = vld [vmem:[%s301 + $0x18] sm:$0xf]
      %v1010 = vld [vmem:[%s301 + $0x1c] sm:$0x1]
      %v1011 = vld [vmem:[%s301 + $0x20] sm:$0xf]
      %v1012 = vld [vmem:[%s301 + $0x24] sm:$0x1]
      %v1013 = vld [vmem:[%s301 + $0x28] sm:$0xf]
      %v1014 = vld [vmem:[%s301 + $0x2c] sm:$0x1]
      %v1015 = vld [vmem:[%s301 + $0x30] sm:$0xf]
      %v1016 = vld [vmem:[%s301 + $0x34] sm:$0x1]
      %v1017 = vld [vmem:[%s301 + $0x38] sm:$0xf]
      %v1018 = vld [vmem:[%s301 + $0x3c] sm:$0x1]
      %v1020 = vshrl.u32 %v1003, 16
      %v1022 = vrot.slane %v1020, 4
      %v1023 = vshll.u32 %v1003, 16
      %v1025 = vrot.slane %v1023, 5
      %v1026 = vor.u32 %v1022, %v1025
      %v1027 = vrot.slane %v1026, 4
      %v1029 = vshll.u32 %v1004, 16
      %v1031 = vrot.slane %v1029, 5
      %v1032 = vsel %vm552, %v1027, %v1031
      %v1034 = vshrl.u32 %v1005, 16
      %v1036 = vrot.slane %v1034, 4
      %v1037 = vshll.u32 %v1005, 16
      %v1039 = vrot.slane %v1037, 5
      %v1040 = vor.u32 %v1036, %v1039
      %v1041 = vrot.slane %v1040, 4
      %v1043 = vshll.u32 %v1006, 16
      %v1045 = vrot.slane %v1043, 5
      %v1046 = vsel %vm552, %v1041, %v1045
      %v1048 = vshrl.u32 %v1007, 16
      %v1050 = vrot.slane %v1048, 4
      %v1051 = vshll.u32 %v1007, 16
      %v1053 = vrot.slane %v1051, 5
      %v1054 = vor.u32 %v1050, %v1053
      %v1055 = vrot.slane %v1054, 4
      %v1057 = vshll.u32 %v1008, 16
      %v1059 = vrot.slane %v1057, 5
      %v1060 = vsel %vm552, %v1055, %v1059
      %v1062 = vshrl.u32 %v1009, 16
      %v1064 = vrot.slane %v1062, 4
      %v1065 = vshll.u32 %v1009, 16
      %v1067 = vrot.slane %v1065, 5
      %v1068 = vor.u32 %v1064, %v1067
      %v1069 = vrot.slane %v1068, 4
      %v1071 = vshll.u32 %v1010, 16
      %v1073 = vrot.slane %v1071, 5
      %v1074 = vsel %vm552, %v1069, %v1073
      %v1076 = vshrl.u32 %v1011, 16
      %v1078 = vrot.slane %v1076, 4
      %v1079 = vshll.u32 %v1011, 16
      %v1081 = vrot.slane %v1079, 5
      %v1082 = vor.u32 %v1078, %v1081
      %v1083 = vrot.slane %v1082, 4
      %v1085 = vshll.u32 %v1012, 16
      %v1087 = vrot.slane %v1085, 5
      %v1088 = vsel %vm552, %v1083, %v1087
      %v1090 = vshrl.u32 %v1013, 16
      %v1092 = vrot.slane %v1090, 4
      %v1093 = vshll.u32 %v1013, 16
      %v1095 = vrot.slane %v1093, 5
      %v1096 = vor.u32 %v1092, %v1095
      %v1097 = vrot.slane %v1096, 4
      %v1099 = vshll.u32 %v1014, 16
      %v1101 = vrot.slane %v1099, 5
      %v1102 = vsel %vm552, %v1097, %v1101
      %v1104 = vshrl.u32 %v1015, 16
      %v1106 = vrot.slane %v1104, 4
      %v1107 = vshll.u32 %v1015, 16
      %v1109 = vrot.slane %v1107, 5
      %v1110 = vor.u32 %v1106, %v1109
      %v1111 = vrot.slane %v1110, 4
      %v1113 = vshll.u32 %v1016, 16
      %v1115 = vrot.slane %v1113, 5
      %v1116 = vsel %vm552, %v1111, %v1115
      %v1118 = vshrl.u32 %v1017, 16
      %v1120 = vrot.slane %v1118, 4
      %v1121 = vshll.u32 %v1017, 16
      %v1123 = vrot.slane %v1121, 5
      %v1124 = vor.u32 %v1120, %v1123
      %v1125 = vrot.slane %v1124, 4
      %v1127 = vshll.u32 %v1018, 16
      %v1129 = vrot.slane %v1127, 5
      %v1130 = vsel %vm552, %v1125, %v1129
      %s1131 = scalar_lea.vmem %s4, 10
      %v1132 = vld [vmem:[%s1131] sm:$0x3]
      %v1133 = vunpack.c.l.b16 %v1032
      %v1134 = vunpack.c.l.b16 %v1046
      %v1135 = vunpack.c.l.b16 %v1060
      %v1136 = vunpack.c.l.b16 %v1074
      %v1137 = vunpack.c.l.b16 %v1088
      %v1138 = vunpack.c.l.b16 %v1102
      %v1139 = vunpack.c.l.b16 %v1116
      %v1140 = vunpack.c.l.b16 %v1130
      %v1141 = vpack.c.b16 %v1134, %v1133
      %v1142 = vpack.c.b16 %v1136, %v1135
      %v1143 = vpack.c.b16 %v1138, %v1137
      %v1144 = vpack.c.b16 %v1140, %v1139
      %v1146 = vsel %vm352, %v1141, 0
      %v1149 = vsel %vm352, %v1142, 0
      %v1152 = vsel %vm352, %v1143, 0
      %v1155 = vsel %vm352, %v1144, 0
      %v1158 = vsel %vm365, %v1132, 0
      %1160 = vmatprep.subr.bf16.mxu0 0
      %1161 = vmatpush1.bf16.msra.mxu0 %v1158
      %1162 = vmatprep.subr.bf16.mxu0 0
      %1163 = vmatpush1.bf16.msra.mxu0 0
      %1164 = vmatprep.subr.bf16.mxu0 0
      %1165 = vmatpush1.bf16.msra.mxu0 0
      %1166 = vmatprep.subr.bf16.mxu0 0
      %1167 = vmatpush1.bf16.msra.mxu0 0
      %1168 = vmatprep.subr.bf16.mxu0 0
      %1169 = vmatpush1.bf16.msra.mxu0 0
      %1170 = vmatprep.subr.bf16.mxu0 0
      %1171 = vmatpush1.bf16.msra.mxu0 0
      %1172 = vmatprep.subr.bf16.mxu0 0
      %1173 = vmatpush1.bf16.msra.mxu0 0
      %1174 = vmatprep.subr.bf16.mxu0 0
      %1175 = vmatpush1.bf16.msra.mxu0 0
      %1176 = vmatprep.subr.bf16.mxu0 0
      %1177 = vmatpush1.bf16.msra.mxu0 0
      %1178 = vmatprep.subr.bf16.mxu0 0
      %1179 = vmatpush1.bf16.msra.mxu0 0
      %1180 = vmatprep.subr.bf16.mxu0 0
      %1181 = vmatpush1.bf16.msra.mxu0 0
      %1182 = vmatprep.subr.bf16.mxu0 0
      %1183 = vmatpush1.bf16.msra.mxu0 0
      %1184 = vmatprep.subr.bf16.mxu0 0
      %1185 = vmatpush1.bf16.msra.mxu0 0
      %1186 = vmatprep.subr.bf16.mxu0 0
      %1187 = vmatpush1.bf16.msra.mxu0 0
      %1188 = vmatprep.subr.bf16.mxu0 0
      %1189 = vmatpush1.bf16.msra.mxu0 0
      %1190 = vmatprep.subr.bf16.mxu0 0
      %1191 = vmatpush1.bf16.msra.mxu0 0
      %1192 = vmatprep.mubr.bf16.mxu0 0
      %1193 = vmatmul.mubr.bf16.gmra.mrb[0].mxu0 %v1146
      %v1194 = vpop.f32.mrb[0].mxu0
      %v1195 = vadd.f32 0.0, %v1194
      %v1196 = vpop.f32.mrb[0].mxu0
      %v1197 = vpop.f32.mrb[0].mxu0
      %v1198 = vadd.f32 0.0, %v1197
      %v1199 = vpop.f32.mrb[0].mxu0
      %1200 = vmatprep.mubr.bf16.mxu0 0
      %1201 = vmatmul.mubr.bf16.gmra.mrb[0].mxu0 %v1149
      %v1202 = vpop.f32.mrb[0].mxu0
      %v1203 = vadd.f32 0.0, %v1202
      %v1204 = vpop.f32.mrb[0].mxu0
      %v1205 = vpop.f32.mrb[0].mxu0
      %v1206 = vadd.f32 0.0, %v1205
      %v1207 = vpop.f32.mrb[0].mxu0
      %1208 = vmatprep.mubr.bf16.mxu0 0
      %1209 = vmatmul.mubr.bf16.gmra.mrb[0].mxu0 %v1152
      %v1210 = vpop.f32.mrb[0].mxu0
      %v1211 = vadd.f32 0.0, %v1210
      %v1212 = vpop.f32.mrb[0].mxu0
      %v1213 = vpop.f32.mrb[0].mxu0
      %v1214 = vadd.f32 0.0, %v1213
      %v1215 = vpop.f32.mrb[0].mxu0
      %1216 = vmatprep.mubr.bf16.mxu0 0
      %1217 = vmatmul.mubr.bf16.gmra.mrb[0].mxu0 %v1155
      %v1218 = vpop.f32.mrb[0].mxu0
      %v1219 = vadd.f32 0.0, %v1218
      %v1220 = vpop.f32.mrb[0].mxu0
      %v1221 = vpop.f32.mrb[0].mxu0
      %v1222 = vadd.f32 0.0, %v1221
      %v1223 = vpop.f32.mrb[0].mxu0
      %1224 = vdwg.mxu0
      %v1225 = vadd.f32 %v995, %v1195
      %v1226 = vadd.f32 %v996, %v1198
      %v1227 = vadd.f32 %v997, %v1203
      %v1228 = vadd.f32 %v998, %v1206
      %v1229 = vadd.f32 %v999, %v1211
      %v1230 = vadd.f32 %v1000, %v1214
      %v1231 = vadd.f32 %v1001, %v1219
      %v1232 = vadd.f32 %v1002, %v1222
      %s1233 = scalar_lea.vmem %s291, 8
      %v1234 = vld [vmem:[%s1233] sm:$0xf]
      %v1235 = vld [vmem:[%s1233 + $0x8] sm:$0xf]
      %v1236 = vld [vmem:[%s1233 + $0x10] sm:$0xf]
      %v1237 = vld [vmem:[%s1233 + $0x18] sm:$0xf]
      %v1238 = vld [vmem:[%s1233 + $0x20] sm:$0xf]
      %v1239 = vld [vmem:[%s1233 + $0x28] sm:$0xf]
      %v1240 = vld [vmem:[%s1233 + $0x30] sm:$0xf]
      %v1241 = vld [vmem:[%s1233 + $0x38] sm:$0xf]
      %s1242 = scalar_lea.vmem %s4, 12
      %v1243 = vld [vmem:[%s1242] sm:$0x3]
      %v1252 = vunpack.c.l.b16 %v1234
      %v1253 = vunpack.c.l.b16 %v1235
      %v1254 = vunpack.c.l.b16 %v1236
      %v1255 = vunpack.c.l.b16 %v1237
      %v1256 = vunpack.c.l.b16 %v1238
      %v1257 = vunpack.c.l.b16 %v1239
      %v1258 = vunpack.c.l.b16 %v1240
      %v1259 = vunpack.c.l.b16 %v1241
      %v1260 = vpack.c.b16 %v1253, %v1252
      %v1261 = vpack.c.b16 %v1255, %v1254
      %v1262 = vpack.c.b16 %v1257, %v1256
      %v1263 = vpack.c.b16 %v1259, %v1258
      %v1265 = vsel %vm352, %v1260, 0
      %v1268 = vsel %vm352, %v1261, 0
      %v1271 = vsel %vm352, %v1262, 0
      %v1274 = vsel %vm352, %v1263, 0
      %v1277 = vsel %vm365, %v1243, 0
      %1279 = vmatprep.subr.bf16.mxu0 0
      %1280 = vmatpush1.bf16.msra.mxu0 %v1277
      %1281 = vmatprep.subr.bf16.mxu0 0
      %1282 = vmatpush1.bf16.msra.mxu0 0
      %1283 = vmatprep.subr.bf16.mxu0 0
      %1284 = vmatpush1.bf16.msra.mxu0 0
      %1285 = vmatprep.subr.bf16.mxu0 0
      %1286 = vmatpush1.bf16.msra.mxu0 0
      %1287 = vmatprep.subr.bf16.mxu0 0
      %1288 = vmatpush1.bf16.msra.mxu0 0
      %1289 = vmatprep.subr.bf16.mxu0 0
      %1290 = vmatpush1.bf16.msra.mxu0 0
      %1291 = vmatprep.subr.bf16.mxu0 0
      %1292 = vmatpush1.bf16.msra.mxu0 0
      %1293 = vmatprep.subr.bf16.mxu0 0
      %1294 = vmatpush1.bf16.msra.mxu0 0
      %1295 = vmatprep.subr.bf16.mxu0 0
      %1296 = vmatpush1.bf16.msra.mxu0 0
      %1297 = vmatprep.subr.bf16.mxu0 0
      %1298 = vmatpush1.bf16.msra.mxu0 0
      %1299 = vmatprep.subr.bf16.mxu0 0
      %1300 = vmatpush1.bf16.msra.mxu0 0
      %1301 = vmatprep.subr.bf16.mxu0 0
      %1302 = vmatpush1.bf16.msra.mxu0 0
      %1303 = vmatprep.subr.bf16.mxu0 0
      %1304 = vmatpush1.bf16.msra.mxu0 0
      %1305 = vmatprep.subr.bf16.mxu0 0
      %1306 = vmatpush1.bf16.msra.mxu0 0
      %1307 = vmatprep.subr.bf16.mxu0 0
      %1308 = vmatpush1.bf16.msra.mxu0 0
      %1309 = vmatprep.subr.bf16.mxu0 0
      %1310 = vmatpush1.bf16.msra.mxu0 0
      %1311 = vmatprep.mubr.bf16.mxu0 0
      %1312 = vmatmul.mubr.bf16.gmra.mrb[0].mxu0 %v1265
      %v1313 = vpop.f32.mrb[0].mxu0
      %v1314 = vadd.f32 0.0, %v1313
      %v1315 = vpop.f32.mrb[0].mxu0
      %v1316 = vpop.f32.mrb[0].mxu0
      %v1317 = vadd.f32 0.0, %v1316
      %v1318 = vpop.f32.mrb[0].mxu0
      %1319 = vmatprep.mubr.bf16.mxu0 0
      %1320 = vmatmul.mubr.bf16.gmra.mrb[0].mxu0 %v1268
      %v1321 = vpop.f32.mrb[0].mxu0
      %v1322 = vadd.f32 0.0, %v1321
      %v1323 = vpop.f32.mrb[0].mxu0
      %v1324 = vpop.f32.mrb[0].mxu0
      %v1325 = vadd.f32 0.0, %v1324
      %v1326 = vpop.f32.mrb[0].mxu0
      %1327 = vmatprep.mubr.bf16.mxu0 0
      %1328 = vmatmul.mubr.bf16.gmra.mrb[0].mxu0 %v1271
      %v1329 = vpop.f32.mrb[0].mxu0
      %v1330 = vadd.f32 0.0, %v1329
      %v1331 = vpop.f32.mrb[0].mxu0
      %v1332 = vpop.f32.mrb[0].mxu0
      %v1333 = vadd.f32 0.0, %v1332
      %v1334 = vpop.f32.mrb[0].mxu0
      %1335 = vmatprep.mubr.bf16.mxu0 0
      %1336 = vmatmul.mubr.bf16.gmra.mrb[0].mxu0 %v1274
      %v1337 = vpop.f32.mrb[0].mxu0
      %v1338 = vadd.f32 0.0, %v1337
      %v1339 = vpop.f32.mrb[0].mxu0
      %v1340 = vpop.f32.mrb[0].mxu0
      %v1341 = vadd.f32 0.0, %v1340
      %v1342 = vpop.f32.mrb[0].mxu0
      %1343 = vdwg.mxu0
      %v1344 = vadd.f32 %v1225, %v1314
      %v1345 = vadd.f32 %v1226, %v1317
      %v1346 = vadd.f32 %v1227, %v1322
      %v1347 = vadd.f32 %v1228, %v1325
      %v1348 = vadd.f32 %v1229, %v1330
      %v1349 = vadd.f32 %v1230, %v1333
      %v1350 = vadd.f32 %v1231, %v1338
      %v1351 = vadd.f32 %v1232, %v1341
      %s1352 = scalar_lea.vmem %s296, 8
      %v1353 = vld [vmem:[%s1352] sm:$0xf]
      %v1354 = vld [vmem:[%s1352 + $0x8] sm:$0xf]
      %v1355 = vld [vmem:[%s1352 + $0x10] sm:$0xf]
      %v1356 = vld [vmem:[%s1352 + $0x18] sm:$0xf]
      %v1357 = vld [vmem:[%s1352 + $0x20] sm:$0xf]
      %v1358 = vld [vmem:[%s1352 + $0x28] sm:$0xf]
      %v1359 = vld [vmem:[%s1352 + $0x30] sm:$0xf]
      %v1360 = vld [vmem:[%s1352 + $0x38] sm:$0xf]
      %s1361 = scalar_lea.vmem %s4, 14
      %v1362 = vld [vmem:[%s1361] sm:$0x3]
      %v1371 = vunpack.c.l.b16 %v1353
      %v1372 = vunpack.c.l.b16 %v1354
      %v1373 = vunpack.c.l.b16 %v1355
      %v1374 = vunpack.c.l.b16 %v1356
      %v1375 = vunpack.c.l.b16 %v1357
      %v1376 = vunpack.c.l.b16 %v1358
      %v1377 = vunpack.c.l.b16 %v1359
      %v1378 = vunpack.c.l.b16 %v1360
      %v1379 = vpack.c.b16 %v1372, %v1371
      %v1380 = vpack.c.b16 %v1374, %v1373
      %v1381 = vpack.c.b16 %v1376, %v1375
      %v1382 = vpack.c.b16 %v1378, %v1377
      %v1384 = vsel %vm352, %v1379, 0
      %v1387 = vsel %vm352, %v1380, 0
      %v1390 = vsel %vm352, %v1381, 0
      %v1393 = vsel %vm352, %v1382, 0
      %v1396 = vsel %vm365, %v1362, 0
      %1398 = vmatprep.subr.bf16.mxu0 0
      %1399 = vmatpush1.bf16.msra.mxu0 %v1396
      %1400 = vmatprep.subr.bf16.mxu0 0
      %1401 = vmatpush1.bf16.msra.mxu0 0
      %1402 = vmatprep.subr.bf16.mxu0 0
      %1403 = vmatpush1.bf16.msra.mxu0 0
      %1404 = vmatprep.subr.bf16.mxu0 0
      %1405 = vmatpush1.bf16.msra.mxu0 0
      %1406 = vmatprep.subr.bf16.mxu0 0
      %1407 = vmatpush1.bf16.msra.mxu0 0
      %1408 = vmatprep.subr.bf16.mxu0 0
      %1409 = vmatpush1.bf16.msra.mxu0 0
      %1410 = vmatprep.subr.bf16.mxu0 0
      %1411 = vmatpush1.bf16.msra.mxu0 0
      %1412 = vmatprep.subr.bf16.mxu0 0
      %1413 = vmatpush1.bf16.msra.mxu0 0
      %1414 = vmatprep.subr.bf16.mxu0 0
      %1415 = vmatpush1.bf16.msra.mxu0 0
      %1416 = vmatprep.subr.bf16.mxu0 0
      %1417 = vmatpush1.bf16.msra.mxu0 0
      %1418 = vmatprep.subr.bf16.mxu0 0
      %1419 = vmatpush1.bf16.msra.mxu0 0
      %1420 = vmatprep.subr.bf16.mxu0 0
      %1421 = vmatpush1.bf16.msra.mxu0 0
      %1422 = vmatprep.subr.bf16.mxu0 0
      %1423 = vmatpush1.bf16.msra.mxu0 0
      %1424 = vmatprep.subr.bf16.mxu0 0
      %1425 = vmatpush1.bf16.msra.mxu0 0
      %1426 = vmatprep.subr.bf16.mxu0 0
      %1427 = vmatpush1.bf16.msra.mxu0 0
      %1428 = vmatprep.subr.bf16.mxu0 0
      %1429 = vmatpush1.bf16.msra.mxu0 0
      %1430 = vmatprep.mubr.bf16.mxu0 0
      %1431 = vmatmul.mubr.bf16.gmra.mrb[0].mxu0 %v1384
      %v1432 = vpop.f32.mrb[0].mxu0
      %v1433 = vadd.f32 0.0, %v1432
      %v1434 = vpop.f32.mrb[0].mxu0
      %v1435 = vpop.f32.mrb[0].mxu0
      %v1436 = vadd.f32 0.0, %v1435
      %v1437 = vpop.f32.mrb[0].mxu0
      %1438 = vmatprep.mubr.bf16.mxu0 0
      %1439 = vmatmul.mubr.bf16.gmra.mrb[0].mxu0 %v1387
      %v1440 = vpop.f32.mrb[0].mxu0
      %v1441 = vadd.f32 0.0, %v1440
      %v1442 = vpop.f32.mrb[0].mxu0
      %v1443 = vpop.f32.mrb[0].mxu0
      %v1444 = vadd.f32 0.0, %v1443
      %v1445 = vpop.f32.mrb[0].mxu0
      %1446 = vmatprep.mubr.bf16.mxu0 0
      %1447 = vmatmul.mubr.bf16.gmra.mrb[0].mxu0 %v1390
      %v1448 = vpop.f32.mrb[0].mxu0
      %v1449 = vadd.f32 0.0, %v1448
      %v1450 = vpop.f32.mrb[0].mxu0
      %v1451 = vpop.f32.mrb[0].mxu0
      %v1452 = vadd.f32 0.0, %v1451
      %v1453 = vpop.f32.mrb[0].mxu0
      %1454 = vmatprep.mubr.bf16.mxu0 0
      %1455 = vmatmul.mubr.bf16.gmra.mrb[0].mxu0 %v1393
      %v1456 = vpop.f32.mrb[0].mxu0
      %v1457 = vadd.f32 0.0, %v1456
      %v1458 = vpop.f32.mrb[0].mxu0
      %v1459 = vpop.f32.mrb[0].mxu0
      %v1460 = vadd.f32 0.0, %v1459
      %v1461 = vpop.f32.mrb[0].mxu0
      %1462 = vdwg.mxu0
      %v1463 = vadd.f32 %v1344, %v1433
      %v1464 = vadd.f32 %v1345, %v1436
      %v1465 = vadd.f32 %v1346, %v1441
      %v1466 = vadd.f32 %v1347, %v1444
      %v1467 = vadd.f32 %v1348, %v1449
      %v1468 = vadd.f32 %v1349, %v1452
      %v1469 = vadd.f32 %v1350, %v1457
      %v1470 = vadd.f32 %v1351, %v1460
      %v1471 = vld [vmem:[%s1233] sm:$0xf]
      %v1472 = vld [vmem:[%s1233 + $0x4] sm:$0x1]
      %v1473 = vld [vmem:[%s1233 + $0x8] sm:$0xf]
      %v1474 = vld [vmem:[%s1233 + $0xc] sm:$0x1]
      %v1475 = vld [vmem:[%s1233 + $0x10] sm:$0xf]
      %v1476 = vld [vmem:[%s1233 + $0x14] sm:$0x1]
      %v1477 = vld [vmem:[%s1233 + $0x18] sm:$0xf]
      %v1478 = vld [vmem:[%s1233 + $0x1c] sm:$0x1]
      %v1479 = vld [vmem:[%s1233 + $0x20] sm:$0xf]
      %v1480 = vld [vmem:[%s1233 + $0x24] sm:$0x1]
      %v1481 = vld [vmem:[%s1233 + $0x28] sm:$0xf]
      %v1482 = vld [vmem:[%s1233 + $0x2c] sm:$0x1]
      %v1483 = vld [vmem:[%s1233 + $0x30] sm:$0xf]
      %v1484 = vld [vmem:[%s1233 + $0x34] sm:$0x1]
      %v1485 = vld [vmem:[%s1233 + $0x38] sm:$0xf]
      %v1486 = vld [vmem:[%s1233 + $0x3c] sm:$0x1]
      %v1488 = vshrl.u32 %v1471, 16
      %v1490 = vrot.slane %v1488, 4
      %v1491 = vshll.u32 %v1471, 16
      %v1493 = vrot.slane %v1491, 5
      %v1494 = vor.u32 %v1490, %v1493
      %v1495 = vrot.slane %v1494, 4
      %v1497 = vshll.u32 %v1472, 16
      %v1499 = vrot.slane %v1497, 5
      %v1500 = vsel %vm552, %v1495, %v1499
      %v1502 = vshrl.u32 %v1473, 16
      %v1504 = vrot.slane %v1502, 4
      %v1505 = vshll.u32 %v1473, 16
      %v1507 = vrot.slane %v1505, 5
      %v1508 = vor.u32 %v1504, %v1507
      %v1509 = vrot.slane %v1508, 4
      %v1511 = vshll.u32 %v1474, 16
      %v1513 = vrot.slane %v1511, 5
      %v1514 = vsel %vm552, %v1509, %v1513
      %v1516 = vshrl.u32 %v1475, 16
      %v1518 = vrot.slane %v1516, 4
      %v1519 = vshll.u32 %v1475, 16
      %v1521 = vrot.slane %v1519, 5
      %v1522 = vor.u32 %v1518, %v1521
      %v1523 = vrot.slane %v1522, 4
      %v1525 = vshll.u32 %v1476, 16
      %v1527 = vrot.slane %v1525, 5
      %v1528 = vsel %vm552, %v1523, %v1527
      %v1530 = vshrl.u32 %v1477, 16
      %v1532 = vrot.slane %v1530, 4
      %v1533 = vshll.u32 %v1477, 16
      %v1535 = vrot.slane %v1533, 5
      %v1536 = vor.u32 %v1532, %v1535
      %v1537 = vrot.slane %v1536, 4
      %v1539 = vshll.u32 %v1478, 16
      %v1541 = vrot.slane %v1539, 5
      %v1542 = vsel %vm552, %v1537, %v1541
      %v1544 = vshrl.u32 %v1479, 16
      %v1546 = vrot.slane %v1544, 4
      %v1547 = vshll.u32 %v1479, 16
      %v1549 = vrot.slane %v1547, 5
      %v1550 = vor.u32 %v1546, %v1549
      %v1551 = vrot.slane %v1550, 4
      %v1553 = vshll.u32 %v1480, 16
      %v1555 = vrot.slane %v1553, 5
      %v1556 = vsel %vm552, %v1551, %v1555
      %v1558 = vshrl.u32 %v1481, 16
      %v1560 = vrot.slane %v1558, 4
      %v1561 = vshll.u32 %v1481, 16
      %v1563 = vrot.slane %v1561, 5
      %v1564 = vor.u32 %v1560, %v1563
      %v1565 = vrot.slane %v1564, 4
      %v1567 = vshll.u32 %v1482, 16
      %v1569 = vrot.slane %v1567, 5
      %v1570 = vsel %vm552, %v1565, %v1569
      %v1572 = vshrl.u32 %v1483, 16
      %v1574 = vrot.slane %v1572, 4
      %v1575 = vshll.u32 %v1483, 16
      %v1577 = vrot.slane %v1575, 5
      %v1578 = vor.u32 %v1574, %v1577
      %v1579 = vrot.slane %v1578, 4
      %v1581 = vshll.u32 %v1484, 16
      %v1583 = vrot.slane %v1581, 5
      %v1584 = vsel %vm552, %v1579, %v1583
      %v1586 = vshrl.u32 %v1485, 16
      %v1588 = vrot.slane %v1586, 4
      %v1589 = vshll.u32 %v1485, 16
      %v1591 = vrot.slane %v1589, 5
      %v1592 = vor.u32 %v1588, %v1591
      %v1593 = vrot.slane %v1592, 4
      %v1595 = vshll.u32 %v1486, 16
      %v1597 = vrot.slane %v1595, 5
      %v1598 = vsel %vm552, %v1593, %v1597
      %s1599 = scalar_lea.vmem %s4, 16
      %v1600 = vld [vmem:[%s1599] sm:$0x3]
      %v1601 = vunpack.c.l.b16 %v1500
      %v1602 = vunpack.c.l.b16 %v1514
      %v1603 = vunpack.c.l.b16 %v1528
      %v1604 = vunpack.c.l.b16 %v1542
      %v1605 = vunpack.c.l.b16 %v1556
      %v1606 = vunpack.c.l.b16 %v1570
      %v1607 = vunpack.c.l.b16 %v1584
      %v1608 = vunpack.c.l.b16 %v1598
      %v1609 = vpack.c.b16 %v1602, %v1601
      %v1610 = vpack.c.b16 %v1604, %v1603
      %v1611 = vpack.c.b16 %v1606, %v1605
      %v1612 = vpack.c.b16 %v1608, %v1607
      %v1614 = vsel %vm352, %v1609, 0
      %v1617 = vsel %vm352, %v1610, 0
      %v1620 = vsel %vm352, %v1611, 0
      %v1623 = vsel %vm352, %v1612, 0
      %v1626 = vsel %vm365, %v1600, 0
      %1628 = vmatprep.subr.bf16.mxu0 0
      %1629 = vmatpush1.bf16.msra.mxu0 %v1626
      %1630 = vmatprep.subr.bf16.mxu0 0
      %1631 = vmatpush1.bf16.msra.mxu0 0
      %1632 = vmatprep.subr.bf16.mxu0 0
      %1633 = vmatpush1.bf16.msra.mxu0 0
      %1634 = vmatprep.subr.bf16.mxu0 0
      %1635 = vmatpush1.bf16.msra.mxu0 0
      %1636 = vmatprep.subr.bf16.mxu0 0
      %1637 = vmatpush1.bf16.msra.mxu0 0
      %1638 = vmatprep.subr.bf16.mxu0 0
      %1639 = vmatpush1.bf16.msra.mxu0 0
      %1640 = vmatprep.subr.bf16.mxu0 0
      %1641 = vmatpush1.bf16.msra.mxu0 0
      %1642 = vmatprep.subr.bf16.mxu0 0
      %1643 = vmatpush1.bf16.msra.mxu0 0
      %1644 = vmatprep.subr.bf16.mxu0 0
      %1645 = vmatpush1.bf16.msra.mxu0 0
      %1646 = vmatprep.subr.bf16.mxu0 0
      %1647 = vmatpush1.bf16.msra.mxu0 0
      %1648 = vmatprep.subr.bf16.mxu0 0
      %1649 = vmatpush1.bf16.msra.mxu0 0
      %1650 = vmatprep.subr.bf16.mxu0 0
      %1651 = vmatpush1.bf16.msra.mxu0 0
      %1652 = vmatprep.subr.bf16.mxu0 0
      %1653 = vmatpush1.bf16.msra.mxu0 0
      %1654 = vmatprep.subr.bf16.mxu0 0
      %1655 = vmatpush1.bf16.msra.mxu0 0
      %1656 = vmatprep.subr.bf16.mxu0 0
      %1657 = vmatpush1.bf16.msra.mxu0 0
      %1658 = vmatprep.subr.bf16.mxu0 0
      %1659 = vmatpush1.bf16.msra.mxu0 0
      %1660 = vmatprep.mubr.bf16.mxu0 0
      %1661 = vmatmul.mubr.bf16.gmra.mrb[0].mxu0 %v1614
      %v1662 = vpop.f32.mrb[0].mxu0
      %v1663 = vadd.f32 0.0, %v1662
      %v1664 = vpop.f32.mrb[0].mxu0
      %v1665 = vpop.f32.mrb[0].mxu0
      %v1666 = vadd.f32 0.0, %v1665
      %v1667 = vpop.f32.mrb[0].mxu0
      %1668 = vmatprep.mubr.bf16.mxu0 0
      %1669 = vmatmul.mubr.bf16.gmra.mrb[0].mxu0 %v1617
      %v1670 = vpop.f32.mrb[0].mxu0
      %v1671 = vadd.f32 0.0, %v1670
      %v1672 = vpop.f32.mrb[0].mxu0
      %v1673 = vpop.f32.mrb[0].mxu0
      %v1674 = vadd.f32 0.0, %v1673
      %v1675 = vpop.f32.mrb[0].mxu0
      %1676 = vmatprep.mubr.bf16.mxu0 0
      %1677 = vmatmul.mubr.bf16.gmra.mrb[0].mxu0 %v1620
      %v1678 = vpop.f32.mrb[0].mxu0
      %v1679 = vadd.f32 0.0, %v1678
      %v1680 = vpop.f32.mrb[0].mxu0
      %v1681 = vpop.f32.mrb[0].mxu0
      %v1682 = vadd.f32 0.0, %v1681
      %v1683 = vpop.f32.mrb[0].mxu0
      %1684 = vmatprep.mubr.bf16.mxu0 0
      %1685 = vmatmul.mubr.bf16.gmra.mrb[0].mxu0 %v1623
      %v1686 = vpop.f32.mrb[0].mxu0
      %v1687 = vadd.f32 0.0, %v1686
      %v1688 = vpop.f32.mrb[0].mxu0
      %v1689 = vpop.f32.mrb[0].mxu0
      %v1690 = vadd.f32 0.0, %v1689
      %v1691 = vpop.f32.mrb[0].mxu0
      %1692 = vdwg.mxu0
      %v1693 = vadd.f32 %v1463, %v1663
      %v1694 = vadd.f32 %v1464, %v1666
      %v1695 = vadd.f32 %v1465, %v1671
      %v1696 = vadd.f32 %v1466, %v1674
      %v1697 = vadd.f32 %v1467, %v1679
      %v1698 = vadd.f32 %v1468, %v1682
      %v1699 = vadd.f32 %v1469, %v1687
      %v1700 = vadd.f32 %v1470, %v1690
      %v1701 = vld [vmem:[%s5] sm:$0x1]
      %v1703 = vlaneseq
      %v1704 = vshrl.u32 %v1703, 7
      %v1705 = vsub.s32 0, %v1704
      %v1706 = vrot.slane %v1701, %v1705
      %v1708 = vadd.f32 %v1693, %v1706
      %v1709 = vadd.f32 %v1694, %v1706
      %v1710 = vadd.f32 %v1695, %v1706
      %v1711 = vadd.f32 %v1696, %v1706
      %v1712 = vadd.f32 %v1697, %v1706
      %v1713 = vadd.f32 %v1698, %v1706
      %v1714 = vadd.f32 %v1699, %v1706
      %v1715 = vadd.f32 %v1700, %v1706
      %v1716 = vmax.f32 %v1708, 0.0
      %v1717 = vmax.f32 %v1709, 0.0
      %v1718 = vmax.f32 %v1710, 0.0
      %v1719 = vmax.f32 %v1711, 0.0
      %v1720 = vmax.f32 %v1712, 0.0
      %v1721 = vmax.f32 %v1713, 0.0
      %v1722 = vmax.f32 %v1714, 0.0
      %v1723 = vmax.f32 %v1715, 0.0
      %v1724 = vpack.c.bf16 %v1717, %v1716
      %v1725 = vpack.c.bf16 %v1719, %v1718
      %v1726 = vpack.c.bf16 %v1721, %v1720
      %v1727 = vpack.c.bf16 %v1723, %v1722
      %v1732 = vunpack.c.l.b16 %v1724
      %v1733 = vunpack.c.h.b16 %v1724
      %v1734 = vunpack.c.l.b16 %v1725
      %v1735 = vunpack.c.h.b16 %v1725
      %v1736 = vunpack.c.l.b16 %v1726
      %v1737 = vunpack.c.h.b16 %v1726
      %v1738 = vunpack.c.l.b16 %v1727
      %v1739 = vunpack.c.h.b16 %v1727
      %v1740 = vpack.c.b16 %v1732, %v1732
      %v1741 = vpack.c.b16 %v1733, %v1733
      %v1742 = vpack.c.b16 %v1734, %v1734
      %v1743 = vpack.c.b16 %v1735, %v1735
      %v1744 = vpack.c.b16 %v1736, %v1736
      %v1745 = vpack.c.b16 %v1737, %v1737
      %v1746 = vpack.c.b16 %v1738, %v1738
      %v1747 = vpack.c.b16 %v1739, %v1739
      %vm1756 = vcmask 27648
      %1757 = vst.msk [vmem:[%s311] sm:$0xf] %vm1756, %v1740
      %1758 = vst.msk [vmem:[%s311 + $0x4] sm:$0xf] %vm1756, %v1741
      %1759 = vst.msk [vmem:[%s311 + $0x8] sm:$0xf] %vm1756, %v1742
      %1760 = vst.msk [vmem:[%s311 + $0xc] sm:$0xf] %vm1756, %v1743
      %1761 = vst.msk [vmem:[%s311 + $0x10] sm:$0xf] %vm1756, %v1744
      %1762 = vst.msk [vmem:[%s311 + $0x14] sm:$0xf] %vm1756, %v1745
      %1763 = vst.msk [vmem:[%s311 + $0x18] sm:$0xf] %vm1756, %v1746
      %1764 = vst.msk [vmem:[%s311 + $0x1c] sm:$0xf] %vm1756, %v1747
      %p1765 = scmp.lt.s32.totalorder %s17, 1
      %s1766 = scalar_select %p1765, %s17, 1
      %s1767 = smul.addr %s1766, 8
      %s1768 = smul.addr %s1767, 4
      %s1769 = scalar_lea.vmem %s6, %s1768
      // Predicated region
      $region45: #{bottleneck_forward.4} parent=43 // pred_check
        %p1770 = pneg %p181
      $region46: #{bottleneck_forward.4} parent=43 // pred_check_branch
        %1772 = sbr.rel (%p1770) target = $region48
      $region47: #{bottleneck_forward.4} parent=43 // pred_region
        _
      $region48: #{bottleneck_forward.4} parent=43 // pred_fallthru
        _
    $region44: #{bottleneck_forward.4} parent=5 // pred_fallthru
      _
    %p1773 = scmp.le.s32.totalorder 2, %s12
    // Predicated region
    $region49: #{bottleneck_forward.4} parent=5 // pred_check
      %p1774 = pneg %p1773
    $region50: #{bottleneck_forward.4} parent=5 // pred_check_branch
      %1776 = sbr.rel (%p1774) target = $region52
    $region51: #{bottleneck_forward.4} parent=5 // pred_region
      %s1777 = ssub.s32 %s12, 2
      // Predicated region
      $region53: #{bottleneck_forward.4} parent=51 // pred_check
        %p1778 = pneg %p187
      $region54: #{bottleneck_forward.4} parent=51 // pred_check_branch
        %1780 = sbr.rel (%p1778) target = $region56
      $region55: #{bottleneck_forward.4} parent=51 // pred_region
        %p1781 = scmp.lt.s32.totalorder %s18, 1
        %s1782 = scalar_select %p1781, %s18, 1
        %s1783 = smul.addr %s1782, 8
        %s1784 = smul.addr %s1783, 4
        %s1785 = scalar_lea.vmem %s6, %s1784
      $region56: #{bottleneck_forward.4} parent=51 // pred_fallthru
        _
    $region52: #{bottleneck_forward.4} parent=5 // pred_fallthru
      _
  $region6: #{bottleneck_forward.4} parent=0 // loop_footer
    %s16 = sadd.s32 1, %s12
  $region7: #{bottleneck_forward.4} parent=0 // loop_footer_branch
    %11 = sbr.rel target = $region3
  $region8: #{bottleneck_forward.4} parent=0 // loop_exit
    _

</llo_original>
